<compile_context>
chip_gen: v7x
topology: tpu7x:2x2x1
jax: 0.10.0
libtpu: 0.0.40
codegen_flags: <defaults>
</compile_context>

<pallas_src>
import functools

import jax
import jax.numpy as jnp
from jax.experimental import pallas as pl
from jax.experimental.pallas import tpu as pltpu


# ----------------------------------------------------------------------------
# Fused kernel: whole forward in one invocation.
#   x_ref    : (N, B, D)   activations (module's native layout, no wrapper transpose)
#   wqkv_ref : (D, 3D)     qkv weight slab  (= torch W_qkv.T, one-time re-layout)
#   wo_ref   : (D, D)      o weight slab    (= torch W_o.T)
#   bo_ref   : (1, D)      o bias
#   o_ref    : (B*N, D)    output slab, rows batch-major (b*N + n)
# ----------------------------------------------------------------------------
def _fused_attention_kernel(x_ref, wqkv_ref, wo_ref, bo_ref, o_ref, *, heads, scale):
    N, B, D = x_ref.shape
    hd = D // heads

    x = x_ref[...].astype(jnp.float32)            # (N, B, D)
    wqkv = wqkv_ref[...].astype(jnp.float32)      # (D, 3D) contiguous slab
    wo = wo_ref[...].astype(jnp.float32)          # (D, D)  contiguous slab
    bias = bo_ref[...].astype(jnp.float32)        # (1, D)  broadcasts over rows

    # Fold batch onto the sublane axis, batch-major rows: row index = b*N + n.
    xb = jnp.concatenate([x[:, b, :] for b in range(B)], axis=0)          # (B*N, D)

    # --- ONE fused QKV projection for every token / batch / head -----------
    qkv = jnp.dot(xb, wqkv, preferred_element_type=jnp.float32)           # (B*N, 3D)

    # Gather per-(batch, head) q/k/v into (B*H, N, hd) stacks.  Columns of
    # `qkv` are ordered [Q | K | V], each head-major (torch Linear layout).
    def split_heads(col0):
        return jnp.stack(
            [qkv[b * N:(b + 1) * N, col0 + h * hd: col0 + (h + 1) * hd]
             for b in range(B) for h in range(heads)],
            axis=0)                                                        # (B*H, N, hd)

    q = split_heads(0)
    k = split_heads(D)
    v = split_heads(2 * D)

    # --- batched attention over all (batch, head) groups at once -----------
    s = jnp.einsum("gqd,gkd->gqk", q, k,
                   preferred_element_type=jnp.float32) * scale            # (B*H, N, N)
    s = s - jnp.max(s, axis=-1, keepdims=True)
    p = jnp.exp(s)
    p = p / jnp.sum(p, axis=-1, keepdims=True)                            # exact softmax
    o = jnp.einsum("gqk,gkd->gqd", p, v,
                   preferred_element_type=jnp.float32)                     # (B*H, N, hd)

    # Reassemble heads onto lanes -> (B*N, D); feature order h*hd + d matches
    # the module's transpose(1, 2).reshape(B, N, D).
    o_cat = jnp.concatenate(
        [jnp.concatenate([o[b * heads + h] for h in range(heads)], axis=-1)
         for b in range(B)],
        axis=0)                                                            # (B*N, D)

    # --- ONE fused output projection + bias ---------------------------------
    out = jnp.dot(o_cat, wo, preferred_element_type=jnp.float32) + bias   # (B*N, D)
    o_ref[...] = out.astype(o_ref.dtype)


# ----------------------------------------------------------------------------
# One-time parameter re-layout (done at "init", not per forward call).
# ----------------------------------------------------------------------------
def prepare_params(w_qkv, w_o, b_o):
    """w_qkv: (3D, D), w_o: (D, D), b_o: (D,) in torch Linear layout ->
    lane-major 2D slabs (D, 3D), (D, D), (1, D)."""
    d = w_o.shape[0]
    assert w_qkv.shape == (3 * d, d)
    return w_qkv.T, w_o.T, b_o.reshape(1, d)


# ----------------------------------------------------------------------------
# Forward pass (mirrors Attention.forward: input (N, B, D) -> output (B, N, D)).
# ----------------------------------------------------------------------------
@functools.partial(jax.jit, static_argnames=("heads",))
def attention_forward(x, wqkv_t, wo_t, bo_2d, heads):
    N, B, D = x.shape
    assert D % heads == 0
    hd = D // heads
    scale = hd ** (-0.5)

    kernel = functools.partial(_fused_attention_kernel, heads=heads, scale=scale)
    out_flat = pl.pallas_call(
        kernel,
        in_specs=[pl.BlockSpec(memory_space=pltpu.MemorySpace.VMEM)] * 4,
        out_specs=pl.BlockSpec(memory_space=pltpu.MemorySpace.VMEM),
        out_shape=jax.ShapeDtypeStruct((B * N, D), x.dtype),
    )(x, wqkv_t, wo_t, bo_2d)
    # rows are batch-major (b*N + n): metadata-only reshape to the final layout
    return out_flat.reshape(B, N, D)


# ----------------------------------------------------------------------------
# Pure-JAX reference (same math as the PyTorch module).
# ----------------------------------------------------------------------------
def attention_reference(x, w_qkv, w_o, b_o, heads):
    N, B, D = x.shape
    hd = D // heads
    scale = hd ** (-0.5)
    qkv = x @ w_qkv.T                                   # (N, B, 3D)
    qkv = qkv.reshape(N, B, 3, heads, hd)
    qkv = jnp.transpose(qkv, (2, 1, 3, 0, 4))           # (3, B, H, N, hd)
    q, k, v = qkv[0], qkv[1], qkv[2]
    attn = jnp.einsum("bhqd,bhkd->bhqk", q, k) * scale
    attn = jax.nn.softmax(attn, axis=-1)
    o = jnp.einsum("bhqk,bhkd->bhqd", attn, v)          # (B, H, N, hd)
    o = jnp.transpose(o, (0, 2, 1, 3)).reshape(B, N, D)
    return o @ w_o.T + b_o


if __name__ == "__main__":
    # Shapes consistent with the module: dim=32, heads=8 (head_dim=4),
    # seq N=8, batch B=2.
    N, B, D, heads = 8, 2, 32, 8

    key = jax.random.PRNGKey(0)
    k1, k2, k3, k4 = jax.random.split(key, 4)
    w_qkv = jax.random.normal(k1, (3 * D, D), jnp.float32) * 0.05  # Linear(D, 3D, bias=False)
    w_o = jax.random.normal(k2, (D, D), jnp.float32) * 0.05        # Linear(D, D)
    b_o = jax.random.normal(k3, (D,), jnp.float32) * 0.05
    x = jax.random.normal(k4, (N, B, D), jnp.float32)

    params = prepare_params(w_qkv, w_o, b_o)            # one-time weight re-layout
    out = attention_forward(x, *params, heads=heads)
    out = jax.block_until_ready(out)

    ref = attention_reference(x, w_qkv, w_o, b_o, heads)
    assert out.shape == (B, N, D)
    # exact f32 softmax + f32 accumulation: tight tolerance again
    assert jnp.allclose(out, ref, atol=1e-4, rtol=1e-4), "mismatch vs reference"

    print("KERNEL_OK")
</pallas_src>

<mosaic_0001>
module attributes {stable_mosaic.version = 11 : i64} {
  func.func @_fused_attention_kernel(%arg0: memref<8x2x32xf32, #tpu.memory_space<vmem>>, %arg1: memref<32x96xf32, #tpu.memory_space<vmem>>, %arg2: memref<32x32xf32, #tpu.memory_space<vmem>>, %arg3: memref<1x32xf32, #tpu.memory_space<vmem>>, %arg4: memref<16x32xf32, #tpu.memory_space<vmem>>) attributes {dimension_semantics = [], scalar_prefetch = 0 : i64, scratch_operands = 0 : i64, tpu.core_type = #tpu.core_type<tc>} {
    %c0 = arith.constant 0 : index
    %c0_0 = arith.constant 0 : index
    %c0_1 = arith.constant 0 : index
    %0 = vector.load %arg0[%c0, %c0_0, %c0_1] : memref<8x2x32xf32, #tpu.memory_space<vmem>>, vector<8x2x32xf32>
    %c0_2 = arith.constant 0 : index
    %c0_3 = arith.constant 0 : index
    %1 = vector.load %arg1[%c0_2, %c0_3] : memref<32x96xf32, #tpu.memory_space<vmem>>, vector<32x96xf32>
    %c0_4 = arith.constant 0 : index
    %c0_5 = arith.constant 0 : index
    %2 = vector.load %arg2[%c0_4, %c0_5] : memref<32x32xf32, #tpu.memory_space<vmem>>, vector<32x32xf32>
    %c0_6 = arith.constant 0 : index
    %c0_7 = arith.constant 0 : index
    %3 = vector.load %arg3[%c0_6, %c0_7] : memref<1x32xf32, #tpu.memory_space<vmem>>, vector<1x32xf32>
    %4 = vector.extract_strided_slice %0 {offsets = [0, 0, 0], sizes = [8, 1, 32], strides = [1, 1, 1]} : vector<8x2x32xf32> to vector<8x1x32xf32>
    %5 = vector.shape_cast %4 : vector<8x1x32xf32> to vector<8x32xf32>
    %6 = vector.extract_strided_slice %0 {offsets = [0, 1, 0], sizes = [8, 1, 32], strides = [1, 1, 1]} : vector<8x2x32xf32> to vector<8x1x32xf32>
    %7 = vector.shape_cast %6 : vector<8x1x32xf32> to vector<8x32xf32>
    %8 = tpu.concatenate %5, %7 in 0 : vector<8x32xf32>, vector<8x32xf32> -> vector<16x32xf32>
    %cst = arith.constant dense<0.000000e+00> : vector<16x96xf32>
    %9 = tpu.matmul %8, %1, %cst {dimension_numbers = #tpu.dot_dimension_numbers<[1], [0], [0], [1], [0, 0, 1, 1], [], []>} : vector<16x32xf32>, vector<32x96xf32>, vector<16x96xf32> -> vector<16x96xf32>
    %10 = vector.extract_strided_slice %9 {offsets = [0, 0], sizes = [8, 4], strides = [1, 1]} : vector<16x96xf32> to vector<8x4xf32>
    %11 = vector.extract_strided_slice %9 {offsets = [0, 4], sizes = [8, 4], strides = [1, 1]} : vector<16x96xf32> to vector<8x4xf32>
    %12 = vector.extract_strided_slice %9 {offsets = [0, 8], sizes = [8, 4], strides = [1, 1]} : vector<16x96xf32> to vector<8x4xf32>
    %13 = vector.extract_strided_slice %9 {offsets = [0, 12], sizes = [8, 4], strides = [1, 1]} : vector<16x96xf32> to vector<8x4xf32>
    %14 = vector.extract_strided_slice %9 {offsets = [0, 16], sizes = [8, 4], strides = [1, 1]} : vector<16x96xf32> to vector<8x4xf32>
    %15 = vector.extract_strided_slice %9 {offsets = [0, 20], sizes = [8, 4], strides = [1, 1]} : vector<16x96xf32> to vector<8x4xf32>
    %16 = vector.extract_strided_slice %9 {offsets = [0, 24], sizes = [8, 4], strides = [1, 1]} : vector<16x96xf32> to vector<8x4xf32>
    %17 = vector.extract_strided_slice %9 {offsets = [0, 28], sizes = [8, 4], strides = [1, 1]} : vector<16x96xf32> to vector<8x4xf32>
    %18 = vector.extract_strided_slice %9 {offsets = [8, 0], sizes = [8, 4], strides = [1, 1]} : vector<16x96xf32> to vector<8x4xf32>
    %19 = vector.extract_strided_slice %9 {offsets = [8, 4], sizes = [8, 4], strides = [1, 1]} : vector<16x96xf32> to vector<8x4xf32>
    %20 = vector.extract_strided_slice %9 {offsets = [8, 8], sizes = [8, 4], strides = [1, 1]} : vector<16x96xf32> to vector<8x4xf32>
    %21 = vector.extract_strided_slice %9 {offsets = [8, 12], sizes = [8, 4], strides = [1, 1]} : vector<16x96xf32> to vector<8x4xf32>
    %22 = vector.extract_strided_slice %9 {offsets = [8, 16], sizes = [8, 4], strides = [1, 1]} : vector<16x96xf32> to vector<8x4xf32>
    %23 = vector.extract_strided_slice %9 {offsets = [8, 20], sizes = [8, 4], strides = [1, 1]} : vector<16x96xf32> to vector<8x4xf32>
    %24 = vector.extract_strided_slice %9 {offsets = [8, 24], sizes = [8, 4], strides = [1, 1]} : vector<16x96xf32> to vector<8x4xf32>
    %25 = vector.extract_strided_slice %9 {offsets = [8, 28], sizes = [8, 4], strides = [1, 1]} : vector<16x96xf32> to vector<8x4xf32>
    %26 = vector.shape_cast %10 : vector<8x4xf32> to vector<1x8x4xf32>
    %27 = vector.shape_cast %11 : vector<8x4xf32> to vector<1x8x4xf32>
    %28 = vector.shape_cast %12 : vector<8x4xf32> to vector<1x8x4xf32>
    %29 = vector.shape_cast %13 : vector<8x4xf32> to vector<1x8x4xf32>
    %30 = vector.shape_cast %14 : vector<8x4xf32> to vector<1x8x4xf32>
    %31 = vector.shape_cast %15 : vector<8x4xf32> to vector<1x8x4xf32>
    %32 = vector.shape_cast %16 : vector<8x4xf32> to vector<1x8x4xf32>
    %33 = vector.shape_cast %17 : vector<8x4xf32> to vector<1x8x4xf32>
    %34 = vector.shape_cast %18 : vector<8x4xf32> to vector<1x8x4xf32>
    %35 = vector.shape_cast %19 : vector<8x4xf32> to vector<1x8x4xf32>
    %36 = vector.shape_cast %20 : vector<8x4xf32> to vector<1x8x4xf32>
    %37 = vector.shape_cast %21 : vector<8x4xf32> to vector<1x8x4xf32>
    %38 = vector.shape_cast %22 : vector<8x4xf32> to vector<1x8x4xf32>
    %39 = vector.shape_cast %23 : vector<8x4xf32> to vector<1x8x4xf32>
    %40 = vector.shape_cast %24 : vector<8x4xf32> to vector<1x8x4xf32>
    %41 = vector.shape_cast %25 : vector<8x4xf32> to vector<1x8x4xf32>
    %42 = tpu.concatenate %26, %27, %28, %29, %30, %31, %32, %33, %34, %35, %36, %37, %38, %39, %40, %41 in 0 : vector<1x8x4xf32>, vector<1x8x4xf32>, vector<1x8x4xf32>, vector<1x8x4xf32>, vector<1x8x4xf32>, vector<1x8x4xf32>, vector<1x8x4xf32>, vector<1x8x4xf32>, vector<1x8x4xf32>, vector<1x8x4xf32>, vector<1x8x4xf32>, vector<1x8x4xf32>, vector<1x8x4xf32>, vector<1x8x4xf32>, vector<1x8x4xf32>, vector<1x8x4xf32> -> vector<16x8x4xf32>
    %43 = vector.extract_strided_slice %9 {offsets = [0, 32], sizes = [8, 4], strides = [1, 1]} : vector<16x96xf32> to vector<8x4xf32>
    %44 = vector.extract_strided_slice %9 {offsets = [0, 36], sizes = [8, 4], strides = [1, 1]} : vector<16x96xf32> to vector<8x4xf32>
    %45 = vector.extract_strided_slice %9 {offsets = [0, 40], sizes = [8, 4], strides = [1, 1]} : vector<16x96xf32> to vector<8x4xf32>
    %46 = vector.extract_strided_slice %9 {offsets = [0, 44], sizes = [8, 4], strides = [1, 1]} : vector<16x96xf32> to vector<8x4xf32>
    %47 = vector.extract_strided_slice %9 {offsets = [0, 48], sizes = [8, 4], strides = [1, 1]} : vector<16x96xf32> to vector<8x4xf32>
    %48 = vector.extract_strided_slice %9 {offsets = [0, 52], sizes = [8, 4], strides = [1, 1]} : vector<16x96xf32> to vector<8x4xf32>
    %49 = vector.extract_strided_slice %9 {offsets = [0, 56], sizes = [8, 4], strides = [1, 1]} : vector<16x96xf32> to vector<8x4xf32>
    %50 = vector.extract_strided_slice %9 {offsets = [0, 60], sizes = [8, 4], strides = [1, 1]} : vector<16x96xf32> to vector<8x4xf32>
    %51 = vector.extract_strided_slice %9 {offsets = [8, 32], sizes = [8, 4], strides = [1, 1]} : vector<16x96xf32> to vector<8x4xf32>
    %52 = vector.extract_strided_slice %9 {offsets = [8, 36], sizes = [8, 4], strides = [1, 1]} : vector<16x96xf32> to vector<8x4xf32>
    %53 = vector.extract_strided_slice %9 {offsets = [8, 40], sizes = [8, 4], strides = [1, 1]} : vector<16x96xf32> to vector<8x4xf32>
    %54 = vector.extract_strided_slice %9 {offsets = [8, 44], sizes = [8, 4], strides = [1, 1]} : vector<16x96xf32> to vector<8x4xf32>
    %55 = vector.extract_strided_slice %9 {offsets = [8, 48], sizes = [8, 4], strides = [1, 1]} : vector<16x96xf32> to vector<8x4xf32>
    %56 = vector.extract_strided_slice %9 {offsets = [8, 52], sizes = [8, 4], strides = [1, 1]} : vector<16x96xf32> to vector<8x4xf32>
    %57 = vector.extract_strided_slice %9 {offsets = [8, 56], sizes = [8, 4], strides = [1, 1]} : vector<16x96xf32> to vector<8x4xf32>
    %58 = vector.extract_strided_slice %9 {offsets = [8, 60], sizes = [8, 4], strides = [1, 1]} : vector<16x96xf32> to vector<8x4xf32>
    %59 = vector.shape_cast %43 : vector<8x4xf32> to vector<1x8x4xf32>
    %60 = vector.shape_cast %44 : vector<8x4xf32> to vector<1x8x4xf32>
    %61 = vector.shape_cast %45 : vector<8x4xf32> to vector<1x8x4xf32>
    %62 = vector.shape_cast %46 : vector<8x4xf32> to vector<1x8x4xf32>
    %63 = vector.shape_cast %47 : vector<8x4xf32> to vector<1x8x4xf32>
    %64 = vector.shape_cast %48 : vector<8x4xf32> to vector<1x8x4xf32>
    %65 = vector.shape_cast %49 : vector<8x4xf32> to vector<1x8x4xf32>
    %66 = vector.shape_cast %50 : vector<8x4xf32> to vector<1x8x4xf32>
    %67 = vector.shape_cast %51 : vector<8x4xf32> to vector<1x8x4xf32>
    %68 = vector.shape_cast %52 : vector<8x4xf32> to vector<1x8x4xf32>
    %69 = vector.shape_cast %53 : vector<8x4xf32> to vector<1x8x4xf32>
    %70 = vector.shape_cast %54 : vector<8x4xf32> to vector<1x8x4xf32>
    %71 = vector.shape_cast %55 : vector<8x4xf32> to vector<1x8x4xf32>
    %72 = vector.shape_cast %56 : vector<8x4xf32> to vector<1x8x4xf32>
    %73 = vector.shape_cast %57 : vector<8x4xf32> to vector<1x8x4xf32>
    %74 = vector.shape_cast %58 : vector<8x4xf32> to vector<1x8x4xf32>
    %75 = tpu.concatenate %59, %60, %61, %62, %63, %64, %65, %66, %67, %68, %69, %70, %71, %72, %73, %74 in 0 : vector<1x8x4xf32>, vector<1x8x4xf32>, vector<1x8x4xf32>, vector<1x8x4xf32>, vector<1x8x4xf32>, vector<1x8x4xf32>, vector<1x8x4xf32>, vector<1x8x4xf32>, vector<1x8x4xf32>, vector<1x8x4xf32>, vector<1x8x4xf32>, vector<1x8x4xf32>, vector<1x8x4xf32>, vector<1x8x4xf32>, vector<1x8x4xf32>, vector<1x8x4xf32> -> vector<16x8x4xf32>
    %76 = vector.extract_strided_slice %9 {offsets = [0, 64], sizes = [8, 4], strides = [1, 1]} : vector<16x96xf32> to vector<8x4xf32>
    %77 = vector.extract_strided_slice %9 {offsets = [0, 68], sizes = [8, 4], strides = [1, 1]} : vector<16x96xf32> to vector<8x4xf32>
    %78 = vector.extract_strided_slice %9 {offsets = [0, 72], sizes = [8, 4], strides = [1, 1]} : vector<16x96xf32> to vector<8x4xf32>
    %79 = vector.extract_strided_slice %9 {offsets = [0, 76], sizes = [8, 4], strides = [1, 1]} : vector<16x96xf32> to vector<8x4xf32>
    %80 = vector.extract_strided_slice %9 {offsets = [0, 80], sizes = [8, 4], strides = [1, 1]} : vector<16x96xf32> to vector<8x4xf32>
    %81 = vector.extract_strided_slice %9 {offsets = [0, 84], sizes = [8, 4], strides = [1, 1]} : vector<16x96xf32> to vector<8x4xf32>
    %82 = vector.extract_strided_slice %9 {offsets = [0, 88], sizes = [8, 4], strides = [1, 1]} : vector<16x96xf32> to vector<8x4xf32>
    %83 = vector.extract_strided_slice %9 {offsets = [0, 92], sizes = [8, 4], strides = [1, 1]} : vector<16x96xf32> to vector<8x4xf32>
    %84 = vector.extract_strided_slice %9 {offsets = [8, 64], sizes = [8, 4], strides = [1, 1]} : vector<16x96xf32> to vector<8x4xf32>
    %85 = vector.extract_strided_slice %9 {offsets = [8, 68], sizes = [8, 4], strides = [1, 1]} : vector<16x96xf32> to vector<8x4xf32>
    %86 = vector.extract_strided_slice %9 {offsets = [8, 72], sizes = [8, 4], strides = [1, 1]} : vector<16x96xf32> to vector<8x4xf32>
    %87 = vector.extract_strided_slice %9 {offsets = [8, 76], sizes = [8, 4], strides = [1, 1]} : vector<16x96xf32> to vector<8x4xf32>
    %88 = vector.extract_strided_slice %9 {offsets = [8, 80], sizes = [8, 4], strides = [1, 1]} : vector<16x96xf32> to vector<8x4xf32>
    %89 = vector.extract_strided_slice %9 {offsets = [8, 84], sizes = [8, 4], strides = [1, 1]} : vector<16x96xf32> to vector<8x4xf32>
    %90 = vector.extract_strided_slice %9 {offsets = [8, 88], sizes = [8, 4], strides = [1, 1]} : vector<16x96xf32> to vector<8x4xf32>
    %91 = vector.extract_strided_slice %9 {offsets = [8, 92], sizes = [8, 4], strides = [1, 1]} : vector<16x96xf32> to vector<8x4xf32>
    %92 = vector.shape_cast %76 : vector<8x4xf32> to vector<1x8x4xf32>
    %93 = vector.shape_cast %77 : vector<8x4xf32> to vector<1x8x4xf32>
    %94 = vector.shape_cast %78 : vector<8x4xf32> to vector<1x8x4xf32>
    %95 = vector.shape_cast %79 : vector<8x4xf32> to vector<1x8x4xf32>
    %96 = vector.shape_cast %80 : vector<8x4xf32> to vector<1x8x4xf32>
    %97 = vector.shape_cast %81 : vector<8x4xf32> to vector<1x8x4xf32>
    %98 = vector.shape_cast %82 : vector<8x4xf32> to vector<1x8x4xf32>
    %99 = vector.shape_cast %83 : vector<8x4xf32> to vector<1x8x4xf32>
    %100 = vector.shape_cast %84 : vector<8x4xf32> to vector<1x8x4xf32>
    %101 = vector.shape_cast %85 : vector<8x4xf32> to vector<1x8x4xf32>
    %102 = vector.shape_cast %86 : vector<8x4xf32> to vector<1x8x4xf32>
    %103 = vector.shape_cast %87 : vector<8x4xf32> to vector<1x8x4xf32>
    %104 = vector.shape_cast %88 : vector<8x4xf32> to vector<1x8x4xf32>
    %105 = vector.shape_cast %89 : vector<8x4xf32> to vector<1x8x4xf32>
    %106 = vector.shape_cast %90 : vector<8x4xf32> to vector<1x8x4xf32>
    %107 = vector.shape_cast %91 : vector<8x4xf32> to vector<1x8x4xf32>
    %108 = tpu.concatenate %92, %93, %94, %95, %96, %97, %98, %99, %100, %101, %102, %103, %104, %105, %106, %107 in 0 : vector<1x8x4xf32>, vector<1x8x4xf32>, vector<1x8x4xf32>, vector<1x8x4xf32>, vector<1x8x4xf32>, vector<1x8x4xf32>, vector<1x8x4xf32>, vector<1x8x4xf32>, vector<1x8x4xf32>, vector<1x8x4xf32>, vector<1x8x4xf32>, vector<1x8x4xf32>, vector<1x8x4xf32>, vector<1x8x4xf32>, vector<1x8x4xf32>, vector<1x8x4xf32> -> vector<16x8x4xf32>
    "tpu.trace_start"() <{level = 10 : i32, message = "gqd,gkd->gqk"}> : () -> ()
    %cst_8 = arith.constant dense<0.000000e+00> : vector<16x8x8xf32>
    %109 = tpu.matmul %42, %75, %cst_8 {dimension_numbers = #tpu.dot_dimension_numbers<[2], [2], [1], [1], [0, 0, 0, 1, 1, 1], [0], [0]>} : vector<16x8x4xf32>, vector<16x8x4xf32>, vector<16x8x8xf32> -> vector<16x8x8xf32>
    "tpu.trace_stop"() : () -> ()
    %cst_9 = arith.constant 5.000000e-01 : f32
    %110 = vector.broadcast %cst_9 : f32 to vector<16x8x8xf32>
    %111 = arith.mulf %109, %110 : vector<16x8x8xf32>
    %cst_10 = arith.constant dense<0xFF800000> : vector<16x8xf32>
    %112 = vector.multi_reduction <maximumf>, %111, %cst_10 [2] : vector<16x8x8xf32> to vector<16x8xf32>
    %113 = vector.shape_cast %112 : vector<16x8xf32> to vector<16x8x1xf32>
    %114 = vector.broadcast %113 : vector<16x8x1xf32> to vector<16x8x8xf32>
    %115 = arith.subf %111, %114 : vector<16x8x8xf32>
    %116 = math.exp %115 : vector<16x8x8xf32>
    %cst_11 = arith.constant dense<0.000000e+00> : vector<16x8xf32>
    %117 = vector.multi_reduction <add>, %116, %cst_11 [2] : vector<16x8x8xf32> to vector<16x8xf32>
    %118 = vector.shape_cast %117 : vector<16x8xf32> to vector<16x8x1xf32>
    %119 = vector.broadcast %118 : vector<16x8x1xf32> to vector<16x8x8xf32>
    %120 = arith.divf %116, %119 : vector<16x8x8xf32>
    "tpu.trace_start"() <{level = 10 : i32, message = "gqk,gkd->gqd"}> : () -> ()
    %cst_12 = arith.constant dense<0.000000e+00> : vector<16x8x4xf32>
    %121 = tpu.matmul %120, %108, %cst_12 {dimension_numbers = #tpu.dot_dimension_numbers<[2], [1], [1], [2], [0, 0, 0, 1, 1, 2], [0], [0]>} : vector<16x8x8xf32>, vector<16x8x4xf32>, vector<16x8x4xf32> -> vector<16x8x4xf32>
    "tpu.trace_stop"() : () -> ()
    %122 = vector.extract_strided_slice %121 {offsets = [0, 0, 0], sizes = [1, 8, 4], strides = [1, 1, 1]} : vector<16x8x4xf32> to vector<1x8x4xf32>
    %123 = vector.shape_cast %122 : vector<1x8x4xf32> to vector<8x4xf32>
    %124 = vector.extract_strided_slice %121 {offsets = [1, 0, 0], sizes = [1, 8, 4], strides = [1, 1, 1]} : vector<16x8x4xf32> to vector<1x8x4xf32>
    %125 = vector.shape_cast %124 : vector<1x8x4xf32> to vector<8x4xf32>
    %126 = vector.extract_strided_slice %121 {offsets = [2, 0, 0], sizes = [1, 8, 4], strides = [1, 1, 1]} : vector<16x8x4xf32> to vector<1x8x4xf32>
    %127 = vector.shape_cast %126 : vector<1x8x4xf32> to vector<8x4xf32>
    %128 = vector.extract_strided_slice %121 {offsets = [3, 0, 0], sizes = [1, 8, 4], strides = [1, 1, 1]} : vector<16x8x4xf32> to vector<1x8x4xf32>
    %129 = vector.shape_cast %128 : vector<1x8x4xf32> to vector<8x4xf32>
    %130 = vector.extract_strided_slice %121 {offsets = [4, 0, 0], sizes = [1, 8, 4], strides = [1, 1, 1]} : vector<16x8x4xf32> to vector<1x8x4xf32>
    %131 = vector.shape_cast %130 : vector<1x8x4xf32> to vector<8x4xf32>
    %132 = vector.extract_strided_slice %121 {offsets = [5, 0, 0], sizes = [1, 8, 4], strides = [1, 1, 1]} : vector<16x8x4xf32> to vector<1x8x4xf32>
    %133 = vector.shape_cast %132 : vector<1x8x4xf32> to vector<8x4xf32>
    %134 = vector.extract_strided_slice %121 {offsets = [6, 0, 0], sizes = [1, 8, 4], strides = [1, 1, 1]} : vector<16x8x4xf32> to vector<1x8x4xf32>
    %135 = vector.shape_cast %134 : vector<1x8x4xf32> to vector<8x4xf32>
    %136 = vector.extract_strided_slice %121 {offsets = [7, 0, 0], sizes = [1, 8, 4], strides = [1, 1, 1]} : vector<16x8x4xf32> to vector<1x8x4xf32>
    %137 = vector.shape_cast %136 : vector<1x8x4xf32> to vector<8x4xf32>
    %138 = tpu.concatenate %123, %125, %127, %129, %131, %133, %135, %137 in 1 : vector<8x4xf32>, vector<8x4xf32>, vector<8x4xf32>, vector<8x4xf32>, vector<8x4xf32>, vector<8x4xf32>, vector<8x4xf32>, vector<8x4xf32> -> vector<8x32xf32>
    %139 = vector.extract_strided_slice %121 {offsets = [8, 0, 0], sizes = [1, 8, 4], strides = [1, 1, 1]} : vector<16x8x4xf32> to vector<1x8x4xf32>
    %140 = vector.shape_cast %139 : vector<1x8x4xf32> to vector<8x4xf32>
    %141 = vector.extract_strided_slice %121 {offsets = [9, 0, 0], sizes = [1, 8, 4], strides = [1, 1, 1]} : vector<16x8x4xf32> to vector<1x8x4xf32>
    %142 = vector.shape_cast %141 : vector<1x8x4xf32> to vector<8x4xf32>
    %143 = vector.extract_strided_slice %121 {offsets = [10, 0, 0], sizes = [1, 8, 4], strides = [1, 1, 1]} : vector<16x8x4xf32> to vector<1x8x4xf32>
    %144 = vector.shape_cast %143 : vector<1x8x4xf32> to vector<8x4xf32>
    %145 = vector.extract_strided_slice %121 {offsets = [11, 0, 0], sizes = [1, 8, 4], strides = [1, 1, 1]} : vector<16x8x4xf32> to vector<1x8x4xf32>
    %146 = vector.shape_cast %145 : vector<1x8x4xf32> to vector<8x4xf32>
    %147 = vector.extract_strided_slice %121 {offsets = [12, 0, 0], sizes = [1, 8, 4], strides = [1, 1, 1]} : vector<16x8x4xf32> to vector<1x8x4xf32>
    %148 = vector.shape_cast %147 : vector<1x8x4xf32> to vector<8x4xf32>
    %149 = vector.extract_strided_slice %121 {offsets = [13, 0, 0], sizes = [1, 8, 4], strides = [1, 1, 1]} : vector<16x8x4xf32> to vector<1x8x4xf32>
    %150 = vector.shape_cast %149 : vector<1x8x4xf32> to vector<8x4xf32>
    %151 = vector.extract_strided_slice %121 {offsets = [14, 0, 0], sizes = [1, 8, 4], strides = [1, 1, 1]} : vector<16x8x4xf32> to vector<1x8x4xf32>
    %152 = vector.shape_cast %151 : vector<1x8x4xf32> to vector<8x4xf32>
    %153 = vector.extract_strided_slice %121 {offsets = [15, 0, 0], sizes = [1, 8, 4], strides = [1, 1, 1]} : vector<16x8x4xf32> to vector<1x8x4xf32>
    %154 = vector.shape_cast %153 : vector<1x8x4xf32> to vector<8x4xf32>
    %155 = tpu.concatenate %140, %142, %144, %146, %148, %150, %152, %154 in 1 : vector<8x4xf32>, vector<8x4xf32>, vector<8x4xf32>, vector<8x4xf32>, vector<8x4xf32>, vector<8x4xf32>, vector<8x4xf32>, vector<8x4xf32> -> vector<8x32xf32>
    %156 = tpu.concatenate %138, %155 in 0 : vector<8x32xf32>, vector<8x32xf32> -> vector<16x32xf32>
    %cst_13 = arith.constant dense<0.000000e+00> : vector<16x32xf32>
    %157 = tpu.matmul %156, %2, %cst_13 {dimension_numbers = #tpu.dot_dimension_numbers<[1], [0], [0], [1], [0, 0, 1, 1], [], []>} : vector<16x32xf32>, vector<32x32xf32>, vector<16x32xf32> -> vector<16x32xf32>
    %158 = vector.broadcast %3 : vector<1x32xf32> to vector<16x32xf32>
    %159 = arith.addf %157, %158 : vector<16x32xf32>
    %c0_14 = arith.constant 0 : index
    %c0_15 = arith.constant 0 : index
    %160 = vector.load %arg4[%c0_14, %c0_15] : memref<16x32xf32, #tpu.memory_space<vmem>>, vector<16x32xf32>
    tpu.vector_store %arg4[%c0_14, %c0_15], %159 {strides = array<i32>} : memref<16x32xf32, #tpu.memory_space<vmem>>, vector<16x32xf32>,
    return
  }
}

</mosaic_0001>

<llo_original>
// kernel: attention_forward.1
$region0: #{attention_forward.1}
  #allocation0 [shape = 'u32[]', space=smem, size = 0x4, offset = 0x4, fixed_abs, tag = 'smem constant byte address 0x4 - core index']
  #allocation1 [shape = 'u32[144,128]{1,0:T(1,128)}', space=vmem, size = 0x12000, scoped, tag = 'internal scratch']
  %s0 = inlined_call_operand.hbm [shape: f32[8,2,32], index: 0, kind: input, shape index: {}]
  %s1 = inlined_call_operand.hbm [shape: f32[32,96], index: 1, kind: input, shape index: {}]
  %s2 = inlined_call_operand.hbm [shape: f32[32,32], index: 2, kind: input, shape index: {}]
  %s3 = inlined_call_operand.vmem [shape: f32[1,32], index: 3, kind: input, shape index: {}]
  %s4 = inlined_call_operand.hbm [shape: f32[16,32], index: 4, kind: output, shape index: {}]
  %s5 = sld [smem:[#allocation0]]
  $region38: #{attention_forward.1} parent=0
    _
  %s7 = ssub.s32 1, %s5
  %s8 = scalar_select 0, %s7, %s5
  $region1: #{attention_forward.1} parent=0
    #allocation2 [shape = 'u8[8192]{0}', space=vmem, size = 0x2000, scoped, tag = 'input window, operand 0, single buffered']
    #allocation3 [shape = 's32[1]{0}', space=sflag, size = 0x4, scoped, tag = 'scoped memory for attention_forward.1']
    #allocation4 [shape = 's32[1]{0}', space=sflag, size = 0x4, scoped, tag = 'scoped memory for attention_forward.1']
    #allocation5 [shape = 'u8[16384]{0}', space=vmem, size = 0x4000, scoped, tag = 'input window, operand 1, single buffered']
    #allocation6 [shape = 's32[1]{0}', space=sflag, size = 0x4, scoped, tag = 'scoped memory for attention_forward.1']
    #allocation7 [shape = 'u8[16384]{0}', space=vmem, size = 0x4000, scoped, tag = 'input window, operand 2, single buffered']
    #allocation8 [shape = 'u8[8192]{0}', space=vmem, size = 0x2000, scoped, tag = 'output window, operand 0, single buffered']
    %9 = vsyncpa [#allocation3], 0
    %10 = vsyncpa [#allocation6], 0
    %11 = vsyncpa [#allocation4], 0
    // Predicated region
    $region2: #{attention_forward.1} parent=1 // pred_check
      _
    $region3: #{attention_forward.1} parent=1 // pred_check_branch
      %13 = sbr.rel (0) target = $region5
    $region4: #{attention_forward.1} parent=1 // pred_region
      %s15 = ssub.s32 256, 256
      %16 = vsyncadd [#allocation3], %s15
      %s17 = sshll.u32 [#allocation2], 4
      %s18 = int_to_ptr.vmem [resolvable:$true] %s17
      %23 = dma.hbm_to_vmem [thread:$0]  %s0, 256, %s18, [#allocation3], 32, 32, 2
    $region5: #{attention_forward.1} parent=1 // pred_fallthru
      _
    // Predicated region
    $region6: #{attention_forward.1} parent=1 // pred_check
      _
    $region7: #{attention_forward.1} parent=1 // pred_check_branch
      %25 = sbr.rel (0) target = $region9
    $region8: #{attention_forward.1} parent=1 // pred_region
      %s27 = ssub.s32 512, 512
      %28 = vsyncadd [#allocation6], %s27
      %s29 = sshll.u32 [#allocation5], 4
      %s30 = int_to_ptr.vmem [resolvable:$true] %s29
      %35 = dma.hbm_to_vmem [thread:$0]  %s1, 512, %s30, [#allocation6], 128, 128, 8
    $region9: #{attention_forward.1} parent=1 // pred_fallthru
      _
    // Predicated region
    $region10: #{attention_forward.1} parent=1 // pred_check
      _
    $region11: #{attention_forward.1} parent=1 // pred_check_branch
      %37 = sbr.rel (0) target = $region13
    $region12: #{attention_forward.1} parent=1 // pred_region
      %s39 = ssub.s32 512, 512
      %40 = vsyncadd [#allocation6], %s39
      %s41 = sshll.u32 [#allocation7], 4
      %s42 = int_to_ptr.vmem [resolvable:$true] %s41
      %47 = dma.hbm_to_vmem [thread:$0]  %s2, 512, %s42, [#allocation6], 128, 128, 8
    $region13: #{attention_forward.1} parent=1 // pred_fallthru
      _
    // Predicated region
    $region14: #{attention_forward.1} parent=1 // pred_check
      _
    $region15: #{attention_forward.1} parent=1 // pred_check_branch
      %49 = sbr.rel (0) target = $region17
    $region16: #{attention_forward.1} parent=1 // pred_region
      _
    $region17: #{attention_forward.1} parent=1 // pred_fallthru
      _
    // Predicated region
    $region18: #{attention_forward.1} parent=1 // pred_check
      _
    $region19: #{attention_forward.1} parent=1 // pred_check_branch
      %51 = sbr.rel (0) target = $region21
    $region20: #{attention_forward.1} parent=1 // pred_region
      %52 = dma.done [#allocation3], 256
    $region21: #{attention_forward.1} parent=1 // pred_fallthru
      _
    // Predicated region
    $region22: #{attention_forward.1} parent=1 // pred_check
      _
    $region23: #{attention_forward.1} parent=1 // pred_check_branch
      %54 = sbr.rel (0) target = $region25
    $region24: #{attention_forward.1} parent=1 // pred_region
      %55 = dma.done [#allocation6], 512
    $region25: #{attention_forward.1} parent=1 // pred_fallthru
      _
    // Predicated region
    $region26: #{attention_forward.1} parent=1 // pred_check
      _
    $region27: #{attention_forward.1} parent=1 // pred_check_branch
      %57 = sbr.rel (0) target = $region29
    $region28: #{attention_forward.1} parent=1 // pred_region
      %58 = dma.done [#allocation6], 512
    $region29: #{attention_forward.1} parent=1 // pred_fallthru
      _
    %v59 = vld [vmem:[#allocation2] sm:$0x3]
    %v60 = vld [vmem:[#allocation2 + $0x2] sm:$0x3]
    %v61 = vld [vmem:[#allocation2 + $0x4] sm:$0x3]
    %v62 = vld [vmem:[#allocation2 + $0x6] sm:$0x3]
    %v63 = vld [vmem:[#allocation2 + $0x8] sm:$0x3]
    %v64 = vld [vmem:[#allocation2 + $0xa] sm:$0x3]
    %v65 = vld [vmem:[#allocation2 + $0xc] sm:$0x3]
    %v66 = vld [vmem:[#allocation2 + $0xe] sm:$0x3]
    %v67 = vld [vmem:[#allocation5] sm:$0xff]
    %v68 = vld [vmem:[#allocation5 + $0x8] sm:$0xff]
    %v69 = vld [vmem:[#allocation5 + $0x10] sm:$0xff]
    %v70 = vld [vmem:[#allocation5 + $0x18] sm:$0xff]
    %v71 = vld [vmem:[#allocation7] sm:$0xff]
    %v72 = vld [vmem:[#allocation7 + $0x8] sm:$0xff]
    %v73 = vld [vmem:[#allocation7 + $0x10] sm:$0xff]
    %v74 = vld [vmem:[#allocation7 + $0x18] sm:$0xff]
    %v75 = vld [vmem:[%s3] sm:$0x1]
    %v84 = vrot.slane %v60, 7
    %vm85 = vcmask 1041409
    %v86 = vsel %vm85, %v84, %v59
    %v87 = vrot.slane %v61, 6
    %vm88 = vcmask 1042434
    %v89 = vsel %vm88, %v87, %v86
    %v90 = vrot.slane %v62, 5
    %vm91 = vcmask 1043459
    %v92 = vsel %vm91, %v90, %v89
    %v93 = vrot.slane %v63, 4
    %vm94 = vcmask 1044484
    %v95 = vsel %vm94, %v93, %v92
    %v96 = vrot.slane %v64, 3
    %vm97 = vcmask 1045509
    %v98 = vsel %vm97, %v96, %v95
    %v99 = vrot.slane %v65, 2
    %vm100 = vcmask 1046534
    %v101 = vsel %vm100, %v99, %v98
    %v102 = vrot.slane %v66, 1
    %vm103 = vcmask 1047559
    %v104 = vsel %vm103, %v102, %v101
    %v105 = vrot.slane %v59, 1
    %v106 = vsel %vm85, %v60, %v105
    %v107 = vrot.slane %v61, 7
    %v108 = vsel %vm88, %v107, %v106
    %v109 = vrot.slane %v62, 6
    %v110 = vsel %vm91, %v109, %v108
    %v111 = vrot.slane %v63, 5
    %v112 = vsel %vm94, %v111, %v110
    %v113 = vrot.slane %v64, 4
    %v114 = vsel %vm97, %v113, %v112
    %v115 = vrot.slane %v65, 3
    %v116 = vsel %vm100, %v115, %v114
    %v117 = vrot.slane %v66, 2
    %v118 = vsel %vm103, %v117, %v116
    %vm119 = vcmask 261120
    %v120 = vsel %vm119, %v104, 0
    %v122 = vsel %vm119, %v118, 0
    %124 = vmatprep.subr.mxu0 0.0
    %125 = vmatpush1.msra.mxu0 %v67
    %126 = vmatprep.subr.mxu0 0.0
    %127 = vmatpush1.msra.mxu0 %v68
    %128 = vmatprep.subr.mxu0 0.0
    %129 = vmatpush1.msra.mxu0 %v69
    %130 = vmatprep.subr.mxu0 0.0
    %131 = vmatpush1.msra.mxu0 %v70
    %132 = vmatprep.subr.mxu0 0.0
    %133 = vmatpush1.msra.mxu0 0.0
    %134 = vmatprep.subr.mxu0 0.0
    %135 = vmatpush1.msra.mxu0 0.0
    %136 = vmatprep.subr.mxu0 0.0
    %137 = vmatpush1.msra.mxu0 0.0
    %138 = vmatprep.subr.mxu0 0.0
    %139 = vmatpush1.msra.mxu0 0.0
    %140 = vmatprep.subr.mxu0 0.0
    %141 = vmatpush1.msra.mxu0 0.0
    %142 = vmatprep.subr.mxu0 0.0
    %143 = vmatpush1.msra.mxu0 0.0
    %144 = vmatprep.subr.mxu0 0.0
    %145 = vmatpush1.msra.mxu0 0.0
    %146 = vmatprep.subr.mxu0 0.0
    %147 = vmatpush1.msra.mxu0 0.0
    %148 = vmatprep.subr.mxu0 0.0
    %149 = vmatpush1.msra.mxu0 0.0
    %150 = vmatprep.subr.mxu0 0.0
    %151 = vmatpush1.msra.mxu0 0.0
    %152 = vmatprep.subr.mxu0 0.0
    %153 = vmatpush1.msra.mxu0 0.0
    %154 = vmatprep.subr.mxu0 0.0
    %155 = vmatpush1.msra.mxu0 0.0
    %156 = vmatprep.subr.mxu0 0.0
    %157 = vmatpush1.msra.mxu0 0.0
    %158 = vmatprep.subr.mxu0 0.0
    %159 = vmatpush1.msra.mxu0 0.0
    %160 = vmatprep.subr.mxu0 0.0
    %161 = vmatpush1.msra.mxu0 0.0
    %162 = vmatprep.subr.mxu0 0.0
    %163 = vmatpush1.msra.mxu0 0.0
    %164 = vmatprep.subr.mxu0 0.0
    %165 = vmatpush1.msra.mxu0 0.0
    %166 = vmatprep.subr.mxu0 0.0
    %167 = vmatpush1.msra.mxu0 0.0
    %168 = vmatprep.subr.mxu0 0.0
    %169 = vmatpush1.msra.mxu0 0.0
    %170 = vmatprep.subr.mxu0 0.0
    %171 = vmatpush1.msra.mxu0 0.0
    %172 = vmatprep.subr.mxu0 0.0
    %173 = vmatpush1.msra.mxu0 0.0
    %174 = vmatprep.subr.mxu0 0.0
    %175 = vmatpush1.msra.mxu0 0.0
    %176 = vmatprep.subr.mxu0 0.0
    %177 = vmatpush1.msra.mxu0 0.0
    %178 = vmatprep.subr.mxu0 0.0
    %179 = vmatpush1.msra.mxu0 0.0
    %180 = vmatprep.subr.mxu0 0.0
    %181 = vmatpush1.msra.mxu0 0.0
    %182 = vmatprep.subr.mxu0 0.0
    %183 = vmatpush1.msra.mxu0 0.0
    %184 = vmatprep.subr.mxu0 0.0
    %185 = vmatpush1.msra.mxu0 0.0
    %186 = vmatprep.subr.mxu0 0.0
    %187 = vmatpush1.msra.mxu0 0.0
    %188 = vmatprep.mubr.f32.mxu0 0.0
    %189 = vmatmul.mubr.f32.gmra.mrb[0].mxu0 %v120
    %v190 = vpop.f32.mrb[0].mxu0
    %v191 = vadd.f32 0.0, %v190
    %v192 = vpop.f32.mrb[0].mxu0
    %193 = vmatprep.mubr.f32.mxu0 0.0
    %194 = vmatmul.mubr.f32.gmra.mrb[0].mxu0 %v122
    %v195 = vpop.f32.mrb[0].mxu0
    %v196 = vadd.f32 0.0, %v195
    %v197 = vpop.f32.mrb[0].mxu0
    %198 = vdwg.mxu0
    %200 = vrot.lane.b32.xlu0 %v191, 124
    %v201 = vpop.permute.xlu0 %200
    %202 = vrot.lane.b32.xlu0 %v191, 120
    %v203 = vpop.permute.xlu0 %202
    %204 = vrot.lane.b32.xlu0 %v191, 116
    %v205 = vpop.permute.xlu0 %204
    %206 = vrot.lane.b32.xlu0 %v191, 112
    %v207 = vpop.permute.xlu0 %206
    %208 = vrot.lane.b32.xlu0 %v191, 108
    %v209 = vpop.permute.xlu0 %208
    %210 = vrot.lane.b32.xlu0 %v191, 104
    %v211 = vpop.permute.xlu0 %210
    %212 = vrot.lane.b32.xlu0 %v191, 100
    %v213 = vpop.permute.xlu0 %212
    %215 = vrot.lane.b32.xlu0 %v196, 124
    %v216 = vpop.permute.xlu0 %215
    %217 = vrot.lane.b32.xlu0 %v196, 120
    %v218 = vpop.permute.xlu0 %217
    %219 = vrot.lane.b32.xlu0 %v196, 116
    %v220 = vpop.permute.xlu0 %219
    %221 = vrot.lane.b32.xlu0 %v196, 112
    %v222 = vpop.permute.xlu0 %221
    %223 = vrot.lane.b32.xlu0 %v196, 108
    %v224 = vpop.permute.xlu0 %223
    %225 = vrot.lane.b32.xlu0 %v196, 104
    %v226 = vpop.permute.xlu0 %225
    %227 = vrot.lane.b32.xlu0 %v196, 100
    %v228 = vpop.permute.xlu0 %227
    %229 = vrot.lane.b32.xlu0 %v191, 96
    %v230 = vpop.permute.xlu0 %229
    %vm231 = vcmask 31744
    %v232 = vsel %vm231, %v191, 0
    %v234 = vsel %vm231, %v230, 0
    %236 = vmatprep.subr.mxu0 0.0
    %237 = vmatpush1.xpose.msra.mxu0 %v234
    %238 = vmatprep.subr.mxu0 0.0
    %239 = vmatpush1.xpose.msra.mxu0 0.0
    %240 = vmatprep.subr.mxu0 0.0
    %241 = vmatpush1.xpose.msra.mxu0 0.0
    %242 = vmatprep.subr.mxu0 0.0
    %243 = vmatpush1.xpose.msra.mxu0 0.0
    %244 = vmatprep.subr.mxu0 0.0
    %245 = vmatpush1.xpose.msra.mxu0 0.0
    %246 = vmatprep.subr.mxu0 0.0
    %247 = vmatpush1.xpose.msra.mxu0 0.0
    %248 = vmatprep.subr.mxu0 0.0
    %249 = vmatpush1.xpose.msra.mxu0 0.0
    %250 = vmatprep.subr.mxu0 0.0
    %251 = vmatpush1.xpose.msra.mxu0 0.0
    %252 = vmatprep.subr.mxu0 0.0
    %253 = vmatpush1.xpose.msra.mxu0 0.0
    %254 = vmatprep.subr.mxu0 0.0
    %255 = vmatpush1.xpose.msra.mxu0 0.0
    %256 = vmatprep.subr.mxu0 0.0
    %257 = vmatpush1.xpose.msra.mxu0 0.0
    %258 = vmatprep.subr.mxu0 0.0
    %259 = vmatpush1.xpose.msra.mxu0 0.0
    %260 = vmatprep.subr.mxu0 0.0
    %261 = vmatpush1.xpose.msra.mxu0 0.0
    %262 = vmatprep.subr.mxu0 0.0
    %263 = vmatpush1.xpose.msra.mxu0 0.0
    %264 = vmatprep.subr.mxu0 0.0
    %265 = vmatpush1.xpose.msra.mxu0 0.0
    %266 = vmatprep.subr.mxu0 0.0
    %267 = vmatpush1.xpose.msra.mxu0 0.0
    %268 = vmatprep.subr.mxu0 0.0
    %269 = vmatpush1.xpose.msra.mxu0 0.0
    %270 = vmatprep.subr.mxu0 0.0
    %271 = vmatpush1.xpose.msra.mxu0 0.0
    %272 = vmatprep.subr.mxu0 0.0
    %273 = vmatpush1.xpose.msra.mxu0 0.0
    %274 = vmatprep.subr.mxu0 0.0
    %275 = vmatpush1.xpose.msra.mxu0 0.0
    %276 = vmatprep.subr.mxu0 0.0
    %277 = vmatpush1.xpose.msra.mxu0 0.0
    %278 = vmatprep.subr.mxu0 0.0
    %279 = vmatpush1.xpose.msra.mxu0 0.0
    %280 = vmatprep.subr.mxu0 0.0
    %281 = vmatpush1.xpose.msra.mxu0 0.0
    %282 = vmatprep.subr.mxu0 0.0
    %283 = vmatpush1.xpose.msra.mxu0 0.0
    %284 = vmatprep.subr.mxu0 0.0
    %285 = vmatpush1.xpose.msra.mxu0 0.0
    %286 = vmatprep.subr.mxu0 0.0
    %287 = vmatpush1.xpose.msra.mxu0 0.0
    %288 = vmatprep.subr.mxu0 0.0
    %289 = vmatpush1.xpose.msra.mxu0 0.0
    %290 = vmatprep.subr.mxu0 0.0
    %291 = vmatpush1.xpose.msra.mxu0 0.0
    %292 = vmatprep.subr.mxu0 0.0
    %293 = vmatpush1.xpose.msra.mxu0 0.0
    %294 = vmatprep.subr.mxu0 0.0
    %295 = vmatpush1.xpose.msra.mxu0 0.0
    %296 = vmatprep.subr.mxu0 0.0
    %297 = vmatpush1.xpose.msra.mxu0 0.0
    %298 = vmatprep.subr.mxu0 0.0
    %299 = vmatpush1.xpose.msra.mxu0 0.0
    %300 = vmatprep.mubr.f32.mxu0 0.0
    %301 = vmatmul.mubr.f32.gmra.mrb[0].mxu0 %v232
    %v302 = vpop.f32.mrb[0].mxu0
    %v303 = vadd.f32 0.0, %v302
    %v304 = vpop.f32.mrb[0].mxu0
    %305 = vdwg.mxu0
    %306 = vrot.lane.b32.xlu0 %v201, 96
    %v307 = vpop.permute.xlu0 %306
    %v308 = vsel %vm231, %v201, 0
    %v310 = vsel %vm231, %v307, 0
    %312 = vmatprep.subr.mxu0 0.0
    %313 = vmatpush1.xpose.msra.mxu0 %v310
    %314 = vmatprep.subr.mxu0 0.0
    %315 = vmatpush1.xpose.msra.mxu0 0.0
    %316 = vmatprep.subr.mxu0 0.0
    %317 = vmatpush1.xpose.msra.mxu0 0.0
    %318 = vmatprep.subr.mxu0 0.0
    %319 = vmatpush1.xpose.msra.mxu0 0.0
    %320 = vmatprep.subr.mxu0 0.0
    %321 = vmatpush1.xpose.msra.mxu0 0.0
    %322 = vmatprep.subr.mxu0 0.0
    %323 = vmatpush1.xpose.msra.mxu0 0.0
    %324 = vmatprep.subr.mxu0 0.0
    %325 = vmatpush1.xpose.msra.mxu0 0.0
    %326 = vmatprep.subr.mxu0 0.0
    %327 = vmatpush1.xpose.msra.mxu0 0.0
    %328 = vmatprep.subr.mxu0 0.0
    %329 = vmatpush1.xpose.msra.mxu0 0.0
    %330 = vmatprep.subr.mxu0 0.0
    %331 = vmatpush1.xpose.msra.mxu0 0.0
    %332 = vmatprep.subr.mxu0 0.0
    %333 = vmatpush1.xpose.msra.mxu0 0.0
    %334 = vmatprep.subr.mxu0 0.0
    %335 = vmatpush1.xpose.msra.mxu0 0.0
    %336 = vmatprep.subr.mxu0 0.0
    %337 = vmatpush1.xpose.msra.mxu0 0.0
    %338 = vmatprep.subr.mxu0 0.0
    %339 = vmatpush1.xpose.msra.mxu0 0.0
    %340 = vmatprep.subr.mxu0 0.0
    %341 = vmatpush1.xpose.msra.mxu0 0.0
    %342 = vmatprep.subr.mxu0 0.0
    %343 = vmatpush1.xpose.msra.mxu0 0.0
    %344 = vmatprep.subr.mxu0 0.0
    %345 = vmatpush1.xpose.msra.mxu0 0.0
    %346 = vmatprep.subr.mxu0 0.0
    %347 = vmatpush1.xpose.msra.mxu0 0.0
    %348 = vmatprep.subr.mxu0 0.0
    %349 = vmatpush1.xpose.msra.mxu0 0.0
    %350 = vmatprep.subr.mxu0 0.0
    %351 = vmatpush1.xpose.msra.mxu0 0.0
    %352 = vmatprep.subr.mxu0 0.0
    %353 = vmatpush1.xpose.msra.mxu0 0.0
    %354 = vmatprep.subr.mxu0 0.0
    %355 = vmatpush1.xpose.msra.mxu0 0.0
    %356 = vmatprep.subr.mxu0 0.0
    %357 = vmatpush1.xpose.msra.mxu0 0.0
    %358 = vmatprep.subr.mxu0 0.0
    %359 = vmatpush1.xpose.msra.mxu0 0.0
    %360 = vmatprep.subr.mxu0 0.0
    %361 = vmatpush1.xpose.msra.mxu0 0.0
    %362 = vmatprep.subr.mxu0 0.0
    %363 = vmatpush1.xpose.msra.mxu0 0.0
    %364 = vmatprep.subr.mxu0 0.0
    %365 = vmatpush1.xpose.msra.mxu0 0.0
    %366 = vmatprep.subr.mxu0 0.0
    %367 = vmatpush1.xpose.msra.mxu0 0.0
    %368 = vmatprep.subr.mxu0 0.0
    %369 = vmatpush1.xpose.msra.mxu0 0.0
    %370 = vmatprep.subr.mxu0 0.0
    %371 = vmatpush1.xpose.msra.mxu0 0.0
    %372 = vmatprep.subr.mxu0 0.0
    %373 = vmatpush1.xpose.msra.mxu0 0.0
    %374 = vmatprep.subr.mxu0 0.0
    %375 = vmatpush1.xpose.msra.mxu0 0.0
    %376 = vmatprep.mubr.f32.mxu0 0.0
    %377 = vmatmul.mubr.f32.gmra.mrb[0].mxu0 %v308
    %v378 = vpop.f32.mrb[0].mxu0
    %v379 = vadd.f32 0.0, %v378
    %v380 = vpop.f32.mrb[0].mxu0
    %381 = vdwg.mxu0
    %382 = vrot.lane.b32.xlu0 %v203, 96
    %v383 = vpop.permute.xlu0 %382
    %v384 = vsel %vm231, %v203, 0
    %v386 = vsel %vm231, %v383, 0
    %388 = vmatprep.subr.mxu0 0.0
    %389 = vmatpush1.xpose.msra.mxu0 %v386
    %390 = vmatprep.subr.mxu0 0.0
    %391 = vmatpush1.xpose.msra.mxu0 0.0
    %392 = vmatprep.subr.mxu0 0.0
    %393 = vmatpush1.xpose.msra.mxu0 0.0
    %394 = vmatprep.subr.mxu0 0.0
    %395 = vmatpush1.xpose.msra.mxu0 0.0
    %396 = vmatprep.subr.mxu0 0.0
    %397 = vmatpush1.xpose.msra.mxu0 0.0
    %398 = vmatprep.subr.mxu0 0.0
    %399 = vmatpush1.xpose.msra.mxu0 0.0
    %400 = vmatprep.subr.mxu0 0.0
    %401 = vmatpush1.xpose.msra.mxu0 0.0
    %402 = vmatprep.subr.mxu0 0.0
    %403 = vmatpush1.xpose.msra.mxu0 0.0
    %404 = vmatprep.subr.mxu0 0.0
    %405 = vmatpush1.xpose.msra.mxu0 0.0
    %406 = vmatprep.subr.mxu0 0.0
    %407 = vmatpush1.xpose.msra.mxu0 0.0
    %408 = vmatprep.subr.mxu0 0.0
    %409 = vmatpush1.xpose.msra.mxu0 0.0
    %410 = vmatprep.subr.mxu0 0.0
    %411 = vmatpush1.xpose.msra.mxu0 0.0
    %412 = vmatprep.subr.mxu0 0.0
    %413 = vmatpush1.xpose.msra.mxu0 0.0
    %414 = vmatprep.subr.mxu0 0.0
    %415 = vmatpush1.xpose.msra.mxu0 0.0
    %416 = vmatprep.subr.mxu0 0.0
    %417 = vmatpush1.xpose.msra.mxu0 0.0
    %418 = vmatprep.subr.mxu0 0.0
    %419 = vmatpush1.xpose.msra.mxu0 0.0
    %420 = vmatprep.subr.mxu0 0.0
    %421 = vmatpush1.xpose.msra.mxu0 0.0
    %422 = vmatprep.subr.mxu0 0.0
    %423 = vmatpush1.xpose.msra.mxu0 0.0
    %424 = vmatprep.subr.mxu0 0.0
    %425 = vmatpush1.xpose.msra.mxu0 0.0
    %426 = vmatprep.subr.mxu0 0.0
    %427 = vmatpush1.xpose.msra.mxu0 0.0
    %428 = vmatprep.subr.mxu0 0.0
    %429 = vmatpush1.xpose.msra.mxu0 0.0
    %430 = vmatprep.subr.mxu0 0.0
    %431 = vmatpush1.xpose.msra.mxu0 0.0
    %432 = vmatprep.subr.mxu0 0.0
    %433 = vmatpush1.xpose.msra.mxu0 0.0
    %434 = vmatprep.subr.mxu0 0.0
    %435 = vmatpush1.xpose.msra.mxu0 0.0
    %436 = vmatprep.subr.mxu0 0.0
    %437 = vmatpush1.xpose.msra.mxu0 0.0
    %438 = vmatprep.subr.mxu0 0.0
    %439 = vmatpush1.xpose.msra.mxu0 0.0
    %440 = vmatprep.subr.mxu0 0.0
    %441 = vmatpush1.xpose.msra.mxu0 0.0
    %442 = vmatprep.subr.mxu0 0.0
    %443 = vmatpush1.xpose.msra.mxu0 0.0
    %444 = vmatprep.subr.mxu0 0.0
    %445 = vmatpush1.xpose.msra.mxu0 0.0
    %446 = vmatprep.subr.mxu0 0.0
    %447 = vmatpush1.xpose.msra.mxu0 0.0
    %448 = vmatprep.subr.mxu0 0.0
    %449 = vmatpush1.xpose.msra.mxu0 0.0
    %450 = vmatprep.subr.mxu0 0.0
    %451 = vmatpush1.xpose.msra.mxu0 0.0
    %452 = vmatprep.mubr.f32.mxu0 0.0
    %453 = vmatmul.mubr.f32.gmra.mrb[0].mxu0 %v384
    %v454 = vpop.f32.mrb[0].mxu0
    %v455 = vadd.f32 0.0, %v454
    %v456 = vpop.f32.mrb[0].mxu0
    %457 = vdwg.mxu0
    %458 = vrot.lane.b32.xlu0 %v205, 96
    %v459 = vpop.permute.xlu0 %458
    %v460 = vsel %vm231, %v205, 0
    %v462 = vsel %vm231, %v459, 0
    %464 = vmatprep.subr.mxu0 0.0
    %465 = vmatpush1.xpose.msra.mxu0 %v462
    %466 = vmatprep.subr.mxu0 0.0
    %467 = vmatpush1.xpose.msra.mxu0 0.0
    %468 = vmatprep.subr.mxu0 0.0
    %469 = vmatpush1.xpose.msra.mxu0 0.0
    %470 = vmatprep.subr.mxu0 0.0
    %471 = vmatpush1.xpose.msra.mxu0 0.0
    %472 = vmatprep.subr.mxu0 0.0
    %473 = vmatpush1.xpose.msra.mxu0 0.0
    %474 = vmatprep.subr.mxu0 0.0
    %475 = vmatpush1.xpose.msra.mxu0 0.0
    %476 = vmatprep.subr.mxu0 0.0
    %477 = vmatpush1.xpose.msra.mxu0 0.0
    %478 = vmatprep.subr.mxu0 0.0
    %479 = vmatpush1.xpose.msra.mxu0 0.0
    %480 = vmatprep.subr.mxu0 0.0
    %481 = vmatpush1.xpose.msra.mxu0 0.0
    %482 = vmatprep.subr.mxu0 0.0
    %483 = vmatpush1.xpose.msra.mxu0 0.0
    %484 = vmatprep.subr.mxu0 0.0
    %485 = vmatpush1.xpose.msra.mxu0 0.0
    %486 = vmatprep.subr.mxu0 0.0
    %487 = vmatpush1.xpose.msra.mxu0 0.0
    %488 = vmatprep.subr.mxu0 0.0
    %489 = vmatpush1.xpose.msra.mxu0 0.0
    %490 = vmatprep.subr.mxu0 0.0
    %491 = vmatpush1.xpose.msra.mxu0 0.0
    %492 = vmatprep.subr.mxu0 0.0
    %493 = vmatpush1.xpose.msra.mxu0 0.0
    %494 = vmatprep.subr.mxu0 0.0
    %495 = vmatpush1.xpose.msra.mxu0 0.0
    %496 = vmatprep.subr.mxu0 0.0
    %497 = vmatpush1.xpose.msra.mxu0 0.0
    %498 = vmatprep.subr.mxu0 0.0
    %499 = vmatpush1.xpose.msra.mxu0 0.0
    %500 = vmatprep.subr.mxu0 0.0
    %501 = vmatpush1.xpose.msra.mxu0 0.0
    %502 = vmatprep.subr.mxu0 0.0
    %503 = vmatpush1.xpose.msra.mxu0 0.0
    %504 = vmatprep.subr.mxu0 0.0
    %505 = vmatpush1.xpose.msra.mxu0 0.0
    %506 = vmatprep.subr.mxu0 0.0
    %507 = vmatpush1.xpose.msra.mxu0 0.0
    %508 = vmatprep.subr.mxu0 0.0
    %509 = vmatpush1.xpose.msra.mxu0 0.0
    %510 = vmatprep.subr.mxu0 0.0
    %511 = vmatpush1.xpose.msra.mxu0 0.0
    %512 = vmatprep.subr.mxu0 0.0
    %513 = vmatpush1.xpose.msra.mxu0 0.0
    %514 = vmatprep.subr.mxu0 0.0
    %515 = vmatpush1.xpose.msra.mxu0 0.0
    %516 = vmatprep.subr.mxu0 0.0
    %517 = vmatpush1.xpose.msra.mxu0 0.0
    %518 = vmatprep.subr.mxu0 0.0
    %519 = vmatpush1.xpose.msra.mxu0 0.0
    %520 = vmatprep.subr.mxu0 0.0
    %521 = vmatpush1.xpose.msra.mxu0 0.0
    %522 = vmatprep.subr.mxu0 0.0
    %523 = vmatpush1.xpose.msra.mxu0 0.0
    %524 = vmatprep.subr.mxu0 0.0
    %525 = vmatpush1.xpose.msra.mxu0 0.0
    %526 = vmatprep.subr.mxu0 0.0
    %527 = vmatpush1.xpose.msra.mxu0 0.0
    %528 = vmatprep.mubr.f32.mxu0 0.0
    %529 = vmatmul.mubr.f32.gmra.mrb[0].mxu0 %v460
    %v530 = vpop.f32.mrb[0].mxu0
    %v531 = vadd.f32 0.0, %v530
    %v532 = vpop.f32.mrb[0].mxu0
    %533 = vdwg.mxu0
    %534 = vrot.lane.b32.xlu0 %v207, 96
    %v535 = vpop.permute.xlu0 %534
    %v536 = vsel %vm231, %v207, 0
    %v538 = vsel %vm231, %v535, 0
    %540 = vmatprep.subr.mxu0 0.0
    %541 = vmatpush1.xpose.msra.mxu0 %v538
    %542 = vmatprep.subr.mxu0 0.0
    %543 = vmatpush1.xpose.msra.mxu0 0.0
    %544 = vmatprep.subr.mxu0 0.0
    %545 = vmatpush1.xpose.msra.mxu0 0.0
    %546 = vmatprep.subr.mxu0 0.0
    %547 = vmatpush1.xpose.msra.mxu0 0.0
    %548 = vmatprep.subr.mxu0 0.0
    %549 = vmatpush1.xpose.msra.mxu0 0.0
    %550 = vmatprep.subr.mxu0 0.0
    %551 = vmatpush1.xpose.msra.mxu0 0.0
    %552 = vmatprep.subr.mxu0 0.0
    %553 = vmatpush1.xpose.msra.mxu0 0.0
    %554 = vmatprep.subr.mxu0 0.0
    %555 = vmatpush1.xpose.msra.mxu0 0.0
    %556 = vmatprep.subr.mxu0 0.0
    %557 = vmatpush1.xpose.msra.mxu0 0.0
    %558 = vmatprep.subr.mxu0 0.0
    %559 = vmatpush1.xpose.msra.mxu0 0.0
    %560 = vmatprep.subr.mxu0 0.0
    %561 = vmatpush1.xpose.msra.mxu0 0.0
    %562 = vmatprep.subr.mxu0 0.0
    %563 = vmatpush1.xpose.msra.mxu0 0.0
    %564 = vmatprep.subr.mxu0 0.0
    %565 = vmatpush1.xpose.msra.mxu0 0.0
    %566 = vmatprep.subr.mxu0 0.0
    %567 = vmatpush1.xpose.msra.mxu0 0.0
    %568 = vmatprep.subr.mxu0 0.0
    %569 = vmatpush1.xpose.msra.mxu0 0.0
    %570 = vmatprep.subr.mxu0 0.0
    %571 = vmatpush1.xpose.msra.mxu0 0.0
    %572 = vmatprep.subr.mxu0 0.0
    %573 = vmatpush1.xpose.msra.mxu0 0.0
    %574 = vmatprep.subr.mxu0 0.0
    %575 = vmatpush1.xpose.msra.mxu0 0.0
    %576 = vmatprep.subr.mxu0 0.0
    %577 = vmatpush1.xpose.msra.mxu0 0.0
    %578 = vmatprep.subr.mxu0 0.0
    %579 = vmatpush1.xpose.msra.mxu0 0.0
    %580 = vmatprep.subr.mxu0 0.0
    %581 = vmatpush1.xpose.msra.mxu0 0.0
    %582 = vmatprep.subr.mxu0 0.0
    %583 = vmatpush1.xpose.msra.mxu0 0.0
    %584 = vmatprep.subr.mxu0 0.0
    %585 = vmatpush1.xpose.msra.mxu0 0.0
    %586 = vmatprep.subr.mxu0 0.0
    %587 = vmatpush1.xpose.msra.mxu0 0.0
    %588 = vmatprep.subr.mxu0 0.0
    %589 = vmatpush1.xpose.msra.mxu0 0.0
    %590 = vmatprep.subr.mxu0 0.0
    %591 = vmatpush1.xpose.msra.mxu0 0.0
    %592 = vmatprep.subr.mxu0 0.0
    %593 = vmatpush1.xpose.msra.mxu0 0.0
    %594 = vmatprep.subr.mxu0 0.0
    %595 = vmatpush1.xpose.msra.mxu0 0.0
    %596 = vmatprep.subr.mxu0 0.0
    %597 = vmatpush1.xpose.msra.mxu0 0.0
    %598 = vmatprep.subr.mxu0 0.0
    %599 = vmatpush1.xpose.msra.mxu0 0.0
    %600 = vmatprep.subr.mxu0 0.0
    %601 = vmatpush1.xpose.msra.mxu0 0.0
    %602 = vmatprep.subr.mxu0 0.0
    %603 = vmatpush1.xpose.msra.mxu0 0.0
    %604 = vmatprep.mubr.f32.mxu0 0.0
    %605 = vmatmul.mubr.f32.gmra.mrb[0].mxu0 %v536
    %v606 = vpop.f32.mrb[0].mxu0
    %v607 = vadd.f32 0.0, %v606
    %v608 = vpop.f32.mrb[0].mxu0
    %609 = vdwg.mxu0
    %610 = vrot.lane.b32.xlu0 %v209, 96
    %v611 = vpop.permute.xlu0 %610
    %v612 = vsel %vm231, %v209, 0
    %v614 = vsel %vm231, %v611, 0
    %616 = vmatprep.subr.mxu0 0.0
    %617 = vmatpush1.xpose.msra.mxu0 %v614
    %618 = vmatprep.subr.mxu0 0.0
    %619 = vmatpush1.xpose.msra.mxu0 0.0
    %620 = vmatprep.subr.mxu0 0.0
    %621 = vmatpush1.xpose.msra.mxu0 0.0
    %622 = vmatprep.subr.mxu0 0.0
    %623 = vmatpush1.xpose.msra.mxu0 0.0
    %624 = vmatprep.subr.mxu0 0.0
    %625 = vmatpush1.xpose.msra.mxu0 0.0
    %626 = vmatprep.subr.mxu0 0.0
    %627 = vmatpush1.xpose.msra.mxu0 0.0
    %628 = vmatprep.subr.mxu0 0.0
    %629 = vmatpush1.xpose.msra.mxu0 0.0
    %630 = vmatprep.subr.mxu0 0.0
    %631 = vmatpush1.xpose.msra.mxu0 0.0
    %632 = vmatprep.subr.mxu0 0.0
    %633 = vmatpush1.xpose.msra.mxu0 0.0
    %634 = vmatprep.subr.mxu0 0.0
    %635 = vmatpush1.xpose.msra.mxu0 0.0
    %636 = vmatprep.subr.mxu0 0.0
    %637 = vmatpush1.xpose.msra.mxu0 0.0
    %638 = vmatprep.subr.mxu0 0.0
    %639 = vmatpush1.xpose.msra.mxu0 0.0
    %640 = vmatprep.subr.mxu0 0.0
    %641 = vmatpush1.xpose.msra.mxu0 0.0
    %642 = vmatprep.subr.mxu0 0.0
    %643 = vmatpush1.xpose.msra.mxu0 0.0
    %644 = vmatprep.subr.mxu0 0.0
    %645 = vmatpush1.xpose.msra.mxu0 0.0
    %646 = vmatprep.subr.mxu0 0.0
    %647 = vmatpush1.xpose.msra.mxu0 0.0
    %648 = vmatprep.subr.mxu0 0.0
    %649 = vmatpush1.xpose.msra.mxu0 0.0
    %650 = vmatprep.subr.mxu0 0.0
    %651 = vmatpush1.xpose.msra.mxu0 0.0
    %652 = vmatprep.subr.mxu0 0.0
    %653 = vmatpush1.xpose.msra.mxu0 0.0
    %654 = vmatprep.subr.mxu0 0.0
    %655 = vmatpush1.xpose.msra.mxu0 0.0
    %656 = vmatprep.subr.mxu0 0.0
    %657 = vmatpush1.xpose.msra.mxu0 0.0
    %658 = vmatprep.subr.mxu0 0.0
    %659 = vmatpush1.xpose.msra.mxu0 0.0
    %660 = vmatprep.subr.mxu0 0.0
    %661 = vmatpush1.xpose.msra.mxu0 0.0
    %662 = vmatprep.subr.mxu0 0.0
    %663 = vmatpush1.xpose.msra.mxu0 0.0
    %664 = vmatprep.subr.mxu0 0.0
    %665 = vmatpush1.xpose.msra.mxu0 0.0
    %666 = vmatprep.subr.mxu0 0.0
    %667 = vmatpush1.xpose.msra.mxu0 0.0
    %668 = vmatprep.subr.mxu0 0.0
    %669 = vmatpush1.xpose.msra.mxu0 0.0
    %670 = vmatprep.subr.mxu0 0.0
    %671 = vmatpush1.xpose.msra.mxu0 0.0
    %672 = vmatprep.subr.mxu0 0.0
    %673 = vmatpush1.xpose.msra.mxu0 0.0
    %674 = vmatprep.subr.mxu0 0.0
    %675 = vmatpush1.xpose.msra.mxu0 0.0
    %676 = vmatprep.subr.mxu0 0.0
    %677 = vmatpush1.xpose.msra.mxu0 0.0
    %678 = vmatprep.subr.mxu0 0.0
    %679 = vmatpush1.xpose.msra.mxu0 0.0
    %680 = vmatprep.mubr.f32.mxu0 0.0
    %681 = vmatmul.mubr.f32.gmra.mrb[0].mxu0 %v612
    %v682 = vpop.f32.mrb[0].mxu0
    %v683 = vadd.f32 0.0, %v682
    %v684 = vpop.f32.mrb[0].mxu0
    %685 = vdwg.mxu0
    %686 = vrot.lane.b32.xlu0 %v211, 96
    %v687 = vpop.permute.xlu0 %686
    %v688 = vsel %vm231, %v211, 0
    %v690 = vsel %vm231, %v687, 0
    %692 = vmatprep.subr.mxu0 0.0
    %693 = vmatpush1.xpose.msra.mxu0 %v690
    %694 = vmatprep.subr.mxu0 0.0
    %695 = vmatpush1.xpose.msra.mxu0 0.0
    %696 = vmatprep.subr.mxu0 0.0
    %697 = vmatpush1.xpose.msra.mxu0 0.0
    %698 = vmatprep.subr.mxu0 0.0
    %699 = vmatpush1.xpose.msra.mxu0 0.0
    %700 = vmatprep.subr.mxu0 0.0
    %701 = vmatpush1.xpose.msra.mxu0 0.0
    %702 = vmatprep.subr.mxu0 0.0
    %703 = vmatpush1.xpose.msra.mxu0 0.0
    %704 = vmatprep.subr.mxu0 0.0
    %705 = vmatpush1.xpose.msra.mxu0 0.0
    %706 = vmatprep.subr.mxu0 0.0
    %707 = vmatpush1.xpose.msra.mxu0 0.0
    %708 = vmatprep.subr.mxu0 0.0
    %709 = vmatpush1.xpose.msra.mxu0 0.0
    %710 = vmatprep.subr.mxu0 0.0
    %711 = vmatpush1.xpose.msra.mxu0 0.0
    %712 = vmatprep.subr.mxu0 0.0
    %713 = vmatpush1.xpose.msra.mxu0 0.0
    %714 = vmatprep.subr.mxu0 0.0
    %715 = vmatpush1.xpose.msra.mxu0 0.0
    %716 = vmatprep.subr.mxu0 0.0
    %717 = vmatpush1.xpose.msra.mxu0 0.0
    %718 = vmatprep.subr.mxu0 0.0
    %719 = vmatpush1.xpose.msra.mxu0 0.0
    %720 = vmatprep.subr.mxu0 0.0
    %721 = vmatpush1.xpose.msra.mxu0 0.0
    %722 = vmatprep.subr.mxu0 0.0
    %723 = vmatpush1.xpose.msra.mxu0 0.0
    %724 = vmatprep.subr.mxu0 0.0
    %725 = vmatpush1.xpose.msra.mxu0 0.0
    %726 = vmatprep.subr.mxu0 0.0
    %727 = vmatpush1.xpose.msra.mxu0 0.0
    %728 = vmatprep.subr.mxu0 0.0
    %729 = vmatpush1.xpose.msra.mxu0 0.0
    %730 = vmatprep.subr.mxu0 0.0
    %731 = vmatpush1.xpose.msra.mxu0 0.0
    %732 = vmatprep.subr.mxu0 0.0
    %733 = vmatpush1.xpose.msra.mxu0 0.0
    %734 = vmatprep.subr.mxu0 0.0
    %735 = vmatpush1.xpose.msra.mxu0 0.0
    %736 = vmatprep.subr.mxu0 0.0
    %737 = vmatpush1.xpose.msra.mxu0 0.0
    %738 = vmatprep.subr.mxu0 0.0
    %739 = vmatpush1.xpose.msra.mxu0 0.0
    %740 = vmatprep.subr.mxu0 0.0
    %741 = vmatpush1.xpose.msra.mxu0 0.0
    %742 = vmatprep.subr.mxu0 0.0
    %743 = vmatpush1.xpose.msra.mxu0 0.0
    %744 = vmatprep.subr.mxu0 0.0
    %745 = vmatpush1.xpose.msra.mxu0 0.0
    %746 = vmatprep.subr.mxu0 0.0
    %747 = vmatpush1.xpose.msra.mxu0 0.0
    %748 = vmatprep.subr.mxu0 0.0
    %749 = vmatpush1.xpose.msra.mxu0 0.0
    %750 = vmatprep.subr.mxu0 0.0
    %751 = vmatpush1.xpose.msra.mxu0 0.0
    %752 = vmatprep.subr.mxu0 0.0
    %753 = vmatpush1.xpose.msra.mxu0 0.0
    %754 = vmatprep.subr.mxu0 0.0
    %755 = vmatpush1.xpose.msra.mxu0 0.0
    %756 = vmatprep.mubr.f32.mxu0 0.0
    %757 = vmatmul.mubr.f32.gmra.mrb[0].mxu0 %v688
    %v758 = vpop.f32.mrb[0].mxu0
    %v759 = vadd.f32 0.0, %v758
    %v760 = vpop.f32.mrb[0].mxu0
    %761 = vdwg.mxu0
    %762 = vrot.lane.b32.xlu0 %v213, 96
    %v763 = vpop.permute.xlu0 %762
    %v764 = vsel %vm231, %v213, 0
    %v766 = vsel %vm231, %v763, 0
    %768 = vmatprep.subr.mxu0 0.0
    %769 = vmatpush1.xpose.msra.mxu0 %v766
    %770 = vmatprep.subr.mxu0 0.0
    %771 = vmatpush1.xpose.msra.mxu0 0.0
    %772 = vmatprep.subr.mxu0 0.0
    %773 = vmatpush1.xpose.msra.mxu0 0.0
    %774 = vmatprep.subr.mxu0 0.0
    %775 = vmatpush1.xpose.msra.mxu0 0.0
    %776 = vmatprep.subr.mxu0 0.0
    %777 = vmatpush1.xpose.msra.mxu0 0.0
    %778 = vmatprep.subr.mxu0 0.0
    %779 = vmatpush1.xpose.msra.mxu0 0.0
    %780 = vmatprep.subr.mxu0 0.0
    %781 = vmatpush1.xpose.msra.mxu0 0.0
    %782 = vmatprep.subr.mxu0 0.0
    %783 = vmatpush1.xpose.msra.mxu0 0.0
    %784 = vmatprep.subr.mxu0 0.0
    %785 = vmatpush1.xpose.msra.mxu0 0.0
    %786 = vmatprep.subr.mxu0 0.0
    %787 = vmatpush1.xpose.msra.mxu0 0.0
    %788 = vmatprep.subr.mxu0 0.0
    %789 = vmatpush1.xpose.msra.mxu0 0.0
    %790 = vmatprep.subr.mxu0 0.0
    %791 = vmatpush1.xpose.msra.mxu0 0.0
    %792 = vmatprep.subr.mxu0 0.0
    %793 = vmatpush1.xpose.msra.mxu0 0.0
    %794 = vmatprep.subr.mxu0 0.0
    %795 = vmatpush1.xpose.msra.mxu0 0.0
    %796 = vmatprep.subr.mxu0 0.0
    %797 = vmatpush1.xpose.msra.mxu0 0.0
    %798 = vmatprep.subr.mxu0 0.0
    %799 = vmatpush1.xpose.msra.mxu0 0.0
    %800 = vmatprep.subr.mxu0 0.0
    %801 = vmatpush1.xpose.msra.mxu0 0.0
    %802 = vmatprep.subr.mxu0 0.0
    %803 = vmatpush1.xpose.msra.mxu0 0.0
    %804 = vmatprep.subr.mxu0 0.0
    %805 = vmatpush1.xpose.msra.mxu0 0.0
    %806 = vmatprep.subr.mxu0 0.0
    %807 = vmatpush1.xpose.msra.mxu0 0.0
    %808 = vmatprep.subr.mxu0 0.0
    %809 = vmatpush1.xpose.msra.mxu0 0.0
    %810 = vmatprep.subr.mxu0 0.0
    %811 = vmatpush1.xpose.msra.mxu0 0.0
    %812 = vmatprep.subr.mxu0 0.0
    %813 = vmatpush1.xpose.msra.mxu0 0.0
    %814 = vmatprep.subr.mxu0 0.0
    %815 = vmatpush1.xpose.msra.mxu0 0.0
    %816 = vmatprep.subr.mxu0 0.0
    %817 = vmatpush1.xpose.msra.mxu0 0.0
    %818 = vmatprep.subr.mxu0 0.0
    %819 = vmatpush1.xpose.msra.mxu0 0.0
    %820 = vmatprep.subr.mxu0 0.0
    %821 = vmatpush1.xpose.msra.mxu0 0.0
    %822 = vmatprep.subr.mxu0 0.0
    %823 = vmatpush1.xpose.msra.mxu0 0.0
    %824 = vmatprep.subr.mxu0 0.0
    %825 = vmatpush1.xpose.msra.mxu0 0.0
    %826 = vmatprep.subr.mxu0 0.0
    %827 = vmatpush1.xpose.msra.mxu0 0.0
    %828 = vmatprep.subr.mxu0 0.0
    %829 = vmatpush1.xpose.msra.mxu0 0.0
    %830 = vmatprep.subr.mxu0 0.0
    %831 = vmatpush1.xpose.msra.mxu0 0.0
    %832 = vmatprep.mubr.f32.mxu0 0.0
    %833 = vmatmul.mubr.f32.gmra.mrb[0].mxu0 %v764
    %v834 = vpop.f32.mrb[0].mxu0
    %v835 = vadd.f32 0.0, %v834
    %v836 = vpop.f32.mrb[0].mxu0
    %837 = vdwg.mxu0
    %838 = vrot.lane.b32.xlu0 %v196, 96
    %v839 = vpop.permute.xlu0 %838
    %v840 = vsel %vm231, %v196, 0
    %v842 = vsel %vm231, %v839, 0
    %844 = vmatprep.subr.mxu0 0.0
    %845 = vmatpush1.xpose.msra.mxu0 %v842
    %846 = vmatprep.subr.mxu0 0.0
    %847 = vmatpush1.xpose.msra.mxu0 0.0
    %848 = vmatprep.subr.mxu0 0.0
    %849 = vmatpush1.xpose.msra.mxu0 0.0
    %850 = vmatprep.subr.mxu0 0.0
    %851 = vmatpush1.xpose.msra.mxu0 0.0
    %852 = vmatprep.subr.mxu0 0.0
    %853 = vmatpush1.xpose.msra.mxu0 0.0
    %854 = vmatprep.subr.mxu0 0.0
    %855 = vmatpush1.xpose.msra.mxu0 0.0
    %856 = vmatprep.subr.mxu0 0.0
    %857 = vmatpush1.xpose.msra.mxu0 0.0
    %858 = vmatprep.subr.mxu0 0.0
    %859 = vmatpush1.xpose.msra.mxu0 0.0
    %860 = vmatprep.subr.mxu0 0.0
    %861 = vmatpush1.xpose.msra.mxu0 0.0
    %862 = vmatprep.subr.mxu0 0.0
    %863 = vmatpush1.xpose.msra.mxu0 0.0
    %864 = vmatprep.subr.mxu0 0.0
    %865 = vmatpush1.xpose.msra.mxu0 0.0
    %866 = vmatprep.subr.mxu0 0.0
    %867 = vmatpush1.xpose.msra.mxu0 0.0
    %868 = vmatprep.subr.mxu0 0.0
    %869 = vmatpush1.xpose.msra.mxu0 0.0
    %870 = vmatprep.subr.mxu0 0.0
    %871 = vmatpush1.xpose.msra.mxu0 0.0
    %872 = vmatprep.subr.mxu0 0.0
    %873 = vmatpush1.xpose.msra.mxu0 0.0
    %874 = vmatprep.subr.mxu0 0.0
    %875 = vmatpush1.xpose.msra.mxu0 0.0
    %876 = vmatprep.subr.mxu0 0.0
    %877 = vmatpush1.xpose.msra.mxu0 0.0
    %878 = vmatprep.subr.mxu0 0.0
    %879 = vmatpush1.xpose.msra.mxu0 0.0
    %880 = vmatprep.subr.mxu0 0.0
    %881 = vmatpush1.xpose.msra.mxu0 0.0
    %882 = vmatprep.subr.mxu0 0.0
    %883 = vmatpush1.xpose.msra.mxu0 0.0
    %884 = vmatprep.subr.mxu0 0.0
    %885 = vmatpush1.xpose.msra.mxu0 0.0
    %886 = vmatprep.subr.mxu0 0.0
    %887 = vmatpush1.xpose.msra.mxu0 0.0
    %888 = vmatprep.subr.mxu0 0.0
    %889 = vmatpush1.xpose.msra.mxu0 0.0
    %890 = vmatprep.subr.mxu0 0.0
    %891 = vmatpush1.xpose.msra.mxu0 0.0
    %892 = vmatprep.subr.mxu0 0.0
    %893 = vmatpush1.xpose.msra.mxu0 0.0
    %894 = vmatprep.subr.mxu0 0.0
    %895 = vmatpush1.xpose.msra.mxu0 0.0
    %896 = vmatprep.subr.mxu0 0.0
    %897 = vmatpush1.xpose.msra.mxu0 0.0
    %898 = vmatprep.subr.mxu0 0.0
    %899 = vmatpush1.xpose.msra.mxu0 0.0
    %900 = vmatprep.subr.mxu0 0.0
    %901 = vmatpush1.xpose.msra.mxu0 0.0
    %902 = vmatprep.subr.mxu0 0.0
    %903 = vmatpush1.xpose.msra.mxu0 0.0
    %904 = vmatprep.subr.mxu0 0.0
    %905 = vmatpush1.xpose.msra.mxu0 0.0
    %906 = vmatprep.subr.mxu0 0.0
    %907 = vmatpush1.xpose.msra.mxu0 0.0
    %908 = vmatprep.mubr.f32.mxu0 0.0
    %909 = vmatmul.mubr.f32.gmra.mrb[0].mxu0 %v840
    %v910 = vpop.f32.mrb[0].mxu0
    %v911 = vadd.f32 0.0, %v910
    %v912 = vpop.f32.mrb[0].mxu0
    %913 = vdwg.mxu0
    %914 = vrot.lane.b32.xlu0 %v216, 96
    %v915 = vpop.permute.xlu0 %914
    %v916 = vsel %vm231, %v216, 0
    %v918 = vsel %vm231, %v915, 0
    %920 = vmatprep.subr.mxu0 0.0
    %921 = vmatpush1.xpose.msra.mxu0 %v918
    %922 = vmatprep.subr.mxu0 0.0
    %923 = vmatpush1.xpose.msra.mxu0 0.0
    %924 = vmatprep.subr.mxu0 0.0
    %925 = vmatpush1.xpose.msra.mxu0 0.0
    %926 = vmatprep.subr.mxu0 0.0
    %927 = vmatpush1.xpose.msra.mxu0 0.0
    %928 = vmatprep.subr.mxu0 0.0
    %929 = vmatpush1.xpose.msra.mxu0 0.0
    %930 = vmatprep.subr.mxu0 0.0
    %931 = vmatpush1.xpose.msra.mxu0 0.0
    %932 = vmatprep.subr.mxu0 0.0
    %933 = vmatpush1.xpose.msra.mxu0 0.0
    %934 = vmatprep.subr.mxu0 0.0
    %935 = vmatpush1.xpose.msra.mxu0 0.0
    %936 = vmatprep.subr.mxu0 0.0
    %937 = vmatpush1.xpose.msra.mxu0 0.0
    %938 = vmatprep.subr.mxu0 0.0
    %939 = vmatpush1.xpose.msra.mxu0 0.0
    %940 = vmatprep.subr.mxu0 0.0
    %941 = vmatpush1.xpose.msra.mxu0 0.0
    %942 = vmatprep.subr.mxu0 0.0
    %943 = vmatpush1.xpose.msra.mxu0 0.0
    %944 = vmatprep.subr.mxu0 0.0
    %945 = vmatpush1.xpose.msra.mxu0 0.0
    %946 = vmatprep.subr.mxu0 0.0
    %947 = vmatpush1.xpose.msra.mxu0 0.0
    %948 = vmatprep.subr.mxu0 0.0
    %949 = vmatpush1.xpose.msra.mxu0 0.0
    %950 = vmatprep.subr.mxu0 0.0
    %951 = vmatpush1.xpose.msra.mxu0 0.0
    %952 = vmatprep.subr.mxu0 0.0
    %953 = vmatpush1.xpose.msra.mxu0 0.0
    %954 = vmatprep.subr.mxu0 0.0
    %955 = vmatpush1.xpose.msra.mxu0 0.0
    %956 = vmatprep.subr.mxu0 0.0
    %957 = vmatpush1.xpose.msra.mxu0 0.0
    %958 = vmatprep.subr.mxu0 0.0
    %959 = vmatpush1.xpose.msra.mxu0 0.0
    %960 = vmatprep.subr.mxu0 0.0
    %961 = vmatpush1.xpose.msra.mxu0 0.0
    %962 = vmatprep.subr.mxu0 0.0
    %963 = vmatpush1.xpose.msra.mxu0 0.0
    %964 = vmatprep.subr.mxu0 0.0
    %965 = vmatpush1.xpose.msra.mxu0 0.0
    %966 = vmatprep.subr.mxu0 0.0
    %967 = vmatpush1.xpose.msra.mxu0 0.0
    %968 = vmatprep.subr.mxu0 0.0
    %969 = vmatpush1.xpose.msra.mxu0 0.0
    %970 = vmatprep.subr.mxu0 0.0
    %971 = vmatpush1.xpose.msra.mxu0 0.0
    %972 = vmatprep.subr.mxu0 0.0
    %973 = vmatpush1.xpose.msra.mxu0 0.0
    %974 = vmatprep.subr.mxu0 0.0
    %975 = vmatpush1.xpose.msra.mxu0 0.0
    %976 = vmatprep.subr.mxu0 0.0
    %977 = vmatpush1.xpose.msra.mxu0 0.0
    %978 = vmatprep.subr.mxu0 0.0
    %979 = vmatpush1.xpose.msra.mxu0 0.0
    %980 = vmatprep.subr.mxu0 0.0
    %981 = vmatpush1.xpose.msra.mxu0 0.0
    %982 = vmatprep.subr.mxu0 0.0
    %983 = vmatpush1.xpose.msra.mxu0 0.0
    %984 = vmatprep.mubr.f32.mxu0 0.0
    %985 = vmatmul.mubr.f32.gmra.mrb[0].mxu0 %v916
    %v986 = vpop.f32.mrb[0].mxu0
    %v987 = vadd.f32 0.0, %v986
    %v988 = vpop.f32.mrb[0].mxu0
    %989 = vdwg.mxu0
    %990 = vrot.lane.b32.xlu0 %v218, 96
    %v991 = vpop.permute.xlu0 %990
    %v992 = vsel %vm231, %v218, 0
    %v994 = vsel %vm231, %v991, 0
    %996 = vmatprep.subr.mxu0 0.0
    %997 = vmatpush1.xpose.msra.mxu0 %v994
    %998 = vmatprep.subr.mxu0 0.0
    %999 = vmatpush1.xpose.msra.mxu0 0.0
    %1000 = vmatprep.subr.mxu0 0.0
    %1001 = vmatpush1.xpose.msra.mxu0 0.0
    %1002 = vmatprep.subr.mxu0 0.0
    %1003 = vmatpush1.xpose.msra.mxu0 0.0
    %1004 = vmatprep.subr.mxu0 0.0
    %1005 = vmatpush1.xpose.msra.mxu0 0.0
    %1006 = vmatprep.subr.mxu0 0.0
    %1007 = vmatpush1.xpose.msra.mxu0 0.0
    %1008 = vmatprep.subr.mxu0 0.0
    %1009 = vmatpush1.xpose.msra.mxu0 0.0
    %1010 = vmatprep.subr.mxu0 0.0
    %1011 = vmatpush1.xpose.msra.mxu0 0.0
    %1012 = vmatprep.subr.mxu0 0.0
    %1013 = vmatpush1.xpose.msra.mxu0 0.0
    %1014 = vmatprep.subr.mxu0 0.0
    %1015 = vmatpush1.xpose.msra.mxu0 0.0
    %1016 = vmatprep.subr.mxu0 0.0
    %1017 = vmatpush1.xpose.msra.mxu0 0.0
    %1018 = vmatprep.subr.mxu0 0.0
    %1019 = vmatpush1.xpose.msra.mxu0 0.0
    %1020 = vmatprep.subr.mxu0 0.0
    %1021 = vmatpush1.xpose.msra.mxu0 0.0
    %1022 = vmatprep.subr.mxu0 0.0
    %1023 = vmatpush1.xpose.msra.mxu0 0.0
    %1024 = vmatprep.subr.mxu0 0.0
    %1025 = vmatpush1.xpose.msra.mxu0 0.0
    %1026 = vmatprep.subr.mxu0 0.0
    %1027 = vmatpush1.xpose.msra.mxu0 0.0
    %1028 = vmatprep.subr.mxu0 0.0
    %1029 = vmatpush1.xpose.msra.mxu0 0.0
    %1030 = vmatprep.subr.mxu0 0.0
    %1031 = vmatpush1.xpose.msra.mxu0 0.0
    %1032 = vmatprep.subr.mxu0 0.0
    %1033 = vmatpush1.xpose.msra.mxu0 0.0
    %1034 = vmatprep.subr.mxu0 0.0
    %1035 = vmatpush1.xpose.msra.mxu0 0.0
    %1036 = vmatprep.subr.mxu0 0.0
    %1037 = vmatpush1.xpose.msra.mxu0 0.0
    %1038 = vmatprep.subr.mxu0 0.0
    %1039 = vmatpush1.xpose.msra.mxu0 0.0
    %1040 = vmatprep.subr.mxu0 0.0
    %1041 = vmatpush1.xpose.msra.mxu0 0.0
    %1042 = vmatprep.subr.mxu0 0.0
    %1043 = vmatpush1.xpose.msra.mxu0 0.0
    %1044 = vmatprep.subr.mxu0 0.0
    %1045 = vmatpush1.xpose.msra.mxu0 0.0
    %1046 = vmatprep.subr.mxu0 0.0
    %1047 = vmatpush1.xpose.msra.mxu0 0.0
    %1048 = vmatprep.subr.mxu0 0.0
    %1049 = vmatpush1.xpose.msra.mxu0 0.0
    %1050 = vmatprep.subr.mxu0 0.0
    %1051 = vmatpush1.xpose.msra.mxu0 0.0
    %1052 = vmatprep.subr.mxu0 0.0
    %1053 = vmatpush1.xpose.msra.mxu0 0.0
    %1054 = vmatprep.subr.mxu0 0.0
    %1055 = vmatpush1.xpose.msra.mxu0 0.0
    %1056 = vmatprep.subr.mxu0 0.0
    %1057 = vmatpush1.xpose.msra.mxu0 0.0
    %1058 = vmatprep.subr.mxu0 0.0
    %1059 = vmatpush1.xpose.msra.mxu0 0.0
    %1060 = vmatprep.mubr.f32.mxu0 0.0
    %1061 = vmatmul.mubr.f32.gmra.mrb[0].mxu0 %v992
    %v1062 = vpop.f32.mrb[0].mxu0
    %v1063 = vadd.f32 0.0, %v1062
    %v1064 = vpop.f32.mrb[0].mxu0
    %1065 = vdwg.mxu0
    %1066 = vrot.lane.b32.xlu0 %v220, 96
    %v1067 = vpop.permute.xlu0 %1066
    %v1068 = vsel %vm231, %v220, 0
    %v1070 = vsel %vm231, %v1067, 0
    %1072 = vmatprep.subr.mxu0 0.0
    %1073 = vmatpush1.xpose.msra.mxu0 %v1070
    %1074 = vmatprep.subr.mxu0 0.0
    %1075 = vmatpush1.xpose.msra.mxu0 0.0
    %1076 = vmatprep.subr.mxu0 0.0
    %1077 = vmatpush1.xpose.msra.mxu0 0.0
    %1078 = vmatprep.subr.mxu0 0.0
    %1079 = vmatpush1.xpose.msra.mxu0 0.0
    %1080 = vmatprep.subr.mxu0 0.0
    %1081 = vmatpush1.xpose.msra.mxu0 0.0
    %1082 = vmatprep.subr.mxu0 0.0
    %1083 = vmatpush1.xpose.msra.mxu0 0.0
    %1084 = vmatprep.subr.mxu0 0.0
    %1085 = vmatpush1.xpose.msra.mxu0 0.0
    %1086 = vmatprep.subr.mxu0 0.0
    %1087 = vmatpush1.xpose.msra.mxu0 0.0
    %1088 = vmatprep.subr.mxu0 0.0
    %1089 = vmatpush1.xpose.msra.mxu0 0.0
    %1090 = vmatprep.subr.mxu0 0.0
    %1091 = vmatpush1.xpose.msra.mxu0 0.0
    %1092 = vmatprep.subr.mxu0 0.0
    %1093 = vmatpush1.xpose.msra.mxu0 0.0
    %1094 = vmatprep.subr.mxu0 0.0
    %1095 = vmatpush1.xpose.msra.mxu0 0.0
    %1096 = vmatprep.subr.mxu0 0.0
    %1097 = vmatpush1.xpose.msra.mxu0 0.0
    %1098 = vmatprep.subr.mxu0 0.0
    %1099 = vmatpush1.xpose.msra.mxu0 0.0
    %1100 = vmatprep.subr.mxu0 0.0
    %1101 = vmatpush1.xpose.msra.mxu0 0.0
    %1102 = vmatprep.subr.mxu0 0.0
    %1103 = vmatpush1.xpose.msra.mxu0 0.0
    %1104 = vmatprep.subr.mxu0 0.0
    %1105 = vmatpush1.xpose.msra.mxu0 0.0
    %1106 = vmatprep.subr.mxu0 0.0
    %1107 = vmatpush1.xpose.msra.mxu0 0.0
    %1108 = vmatprep.subr.mxu0 0.0
    %1109 = vmatpush1.xpose.msra.mxu0 0.0
    %1110 = vmatprep.subr.mxu0 0.0
    %1111 = vmatpush1.xpose.msra.mxu0 0.0
    %1112 = vmatprep.subr.mxu0 0.0
    %1113 = vmatpush1.xpose.msra.mxu0 0.0
    %1114 = vmatprep.subr.mxu0 0.0
    %1115 = vmatpush1.xpose.msra.mxu0 0.0
    %1116 = vmatprep.subr.mxu0 0.0
    %1117 = vmatpush1.xpose.msra.mxu0 0.0
    %1118 = vmatprep.subr.mxu0 0.0
    %1119 = vmatpush1.xpose.msra.mxu0 0.0
    %1120 = vmatprep.subr.mxu0 0.0
    %1121 = vmatpush1.xpose.msra.mxu0 0.0
    %1122 = vmatprep.subr.mxu0 0.0
    %1123 = vmatpush1.xpose.msra.mxu0 0.0
    %1124 = vmatprep.subr.mxu0 0.0
    %1125 = vmatpush1.xpose.msra.mxu0 0.0
    %1126 = vmatprep.subr.mxu0 0.0
    %1127 = vmatpush1.xpose.msra.mxu0 0.0
    %1128 = vmatprep.subr.mxu0 0.0
    %1129 = vmatpush1.xpose.msra.mxu0 0.0
    %1130 = vmatprep.subr.mxu0 0.0
    %1131 = vmatpush1.xpose.msra.mxu0 0.0
    %1132 = vmatprep.subr.mxu0 0.0
    %1133 = vmatpush1.xpose.msra.mxu0 0.0
    %1134 = vmatprep.subr.mxu0 0.0
    %1135 = vmatpush1.xpose.msra.mxu0 0.0
    %1136 = vmatprep.mubr.f32.mxu0 0.0
    %1137 = vmatmul.mubr.f32.gmra.mrb[0].mxu0 %v1068
    %v1138 = vpop.f32.mrb[0].mxu0
    %v1139 = vadd.f32 0.0, %v1138
    %v1140 = vpop.f32.mrb[0].mxu0
    %1141 = vdwg.mxu0
    %1142 = vrot.lane.b32.xlu0 %v222, 96
    %v1143 = vpop.permute.xlu0 %1142
    %v1144 = vsel %vm231, %v222, 0
    %v1146 = vsel %vm231, %v1143, 0
    %1148 = vmatprep.subr.mxu0 0.0
    %1149 = vmatpush1.xpose.msra.mxu0 %v1146
    %1150 = vmatprep.subr.mxu0 0.0
    %1151 = vmatpush1.xpose.msra.mxu0 0.0
    %1152 = vmatprep.subr.mxu0 0.0
    %1153 = vmatpush1.xpose.msra.mxu0 0.0
    %1154 = vmatprep.subr.mxu0 0.0
    %1155 = vmatpush1.xpose.msra.mxu0 0.0
    %1156 = vmatprep.subr.mxu0 0.0
    %1157 = vmatpush1.xpose.msra.mxu0 0.0
    %1158 = vmatprep.subr.mxu0 0.0
    %1159 = vmatpush1.xpose.msra.mxu0 0.0
    %1160 = vmatprep.subr.mxu0 0.0
    %1161 = vmatpush1.xpose.msra.mxu0 0.0
    %1162 = vmatprep.subr.mxu0 0.0
    %1163 = vmatpush1.xpose.msra.mxu0 0.0
    %1164 = vmatprep.subr.mxu0 0.0
    %1165 = vmatpush1.xpose.msra.mxu0 0.0
    %1166 = vmatprep.subr.mxu0 0.0
    %1167 = vmatpush1.xpose.msra.mxu0 0.0
    %1168 = vmatprep.subr.mxu0 0.0
    %1169 = vmatpush1.xpose.msra.mxu0 0.0
    %1170 = vmatprep.subr.mxu0 0.0
    %1171 = vmatpush1.xpose.msra.mxu0 0.0
    %1172 = vmatprep.subr.mxu0 0.0
    %1173 = vmatpush1.xpose.msra.mxu0 0.0
    %1174 = vmatprep.subr.mxu0 0.0
    %1175 = vmatpush1.xpose.msra.mxu0 0.0
    %1176 = vmatprep.subr.mxu0 0.0
    %1177 = vmatpush1.xpose.msra.mxu0 0.0
    %1178 = vmatprep.subr.mxu0 0.0
    %1179 = vmatpush1.xpose.msra.mxu0 0.0
    %1180 = vmatprep.subr.mxu0 0.0
    %1181 = vmatpush1.xpose.msra.mxu0 0.0
    %1182 = vmatprep.subr.mxu0 0.0
    %1183 = vmatpush1.xpose.msra.mxu0 0.0
    %1184 = vmatprep.subr.mxu0 0.0
    %1185 = vmatpush1.xpose.msra.mxu0 0.0
    %1186 = vmatprep.subr.mxu0 0.0
    %1187 = vmatpush1.xpose.msra.mxu0 0.0
    %1188 = vmatprep.subr.mxu0 0.0
    %1189 = vmatpush1.xpose.msra.mxu0 0.0
    %1190 = vmatprep.subr.mxu0 0.0
    %1191 = vmatpush1.xpose.msra.mxu0 0.0
    %1192 = vmatprep.subr.mxu0 0.0
    %1193 = vmatpush1.xpose.msra.mxu0 0.0
    %1194 = vmatprep.subr.mxu0 0.0
    %1195 = vmatpush1.xpose.msra.mxu0 0.0
    %1196 = vmatprep.subr.mxu0 0.0
    %1197 = vmatpush1.xpose.msra.mxu0 0.0
    %1198 = vmatprep.subr.mxu0 0.0
    %1199 = vmatpush1.xpose.msra.mxu0 0.0
    %1200 = vmatprep.subr.mxu0 0.0
    %1201 = vmatpush1.xpose.msra.mxu0 0.0
    %1202 = vmatprep.subr.mxu0 0.0
    %1203 = vmatpush1.xpose.msra.mxu0 0.0
    %1204 = vmatprep.subr.mxu0 0.0
    %1205 = vmatpush1.xpose.msra.mxu0 0.0
    %1206 = vmatprep.subr.mxu0 0.0
    %1207 = vmatpush1.xpose.msra.mxu0 0.0
    %1208 = vmatprep.subr.mxu0 0.0
    %1209 = vmatpush1.xpose.msra.mxu0 0.0
    %1210 = vmatprep.subr.mxu0 0.0
    %1211 = vmatpush1.xpose.msra.mxu0 0.0
    %1212 = vmatprep.mubr.f32.mxu0 0.0
    %1213 = vmatmul.mubr.f32.gmra.mrb[0].mxu0 %v1144
    %v1214 = vpop.f32.mrb[0].mxu0
    %v1215 = vadd.f32 0.0, %v1214
    %v1216 = vpop.f32.mrb[0].mxu0
    %1217 = vdwg.mxu0
    %1218 = vrot.lane.b32.xlu0 %v224, 96
    %v1219 = vpop.permute.xlu0 %1218
    %v1220 = vsel %vm231, %v224, 0
    %v1222 = vsel %vm231, %v1219, 0
    %1224 = vmatprep.subr.mxu0 0.0
    %1225 = vmatpush1.xpose.msra.mxu0 %v1222
    %1226 = vmatprep.subr.mxu0 0.0
    %1227 = vmatpush1.xpose.msra.mxu0 0.0
    %1228 = vmatprep.subr.mxu0 0.0
    %1229 = vmatpush1.xpose.msra.mxu0 0.0
    %1230 = vmatprep.subr.mxu0 0.0
    %1231 = vmatpush1.xpose.msra.mxu0 0.0
    %1232 = vmatprep.subr.mxu0 0.0
    %1233 = vmatpush1.xpose.msra.mxu0 0.0
    %1234 = vmatprep.subr.mxu0 0.0
    %1235 = vmatpush1.xpose.msra.mxu0 0.0
    %1236 = vmatprep.subr.mxu0 0.0
    %1237 = vmatpush1.xpose.msra.mxu0 0.0
    %1238 = vmatprep.subr.mxu0 0.0
    %1239 = vmatpush1.xpose.msra.mxu0 0.0
    %1240 = vmatprep.subr.mxu0 0.0
    %1241 = vmatpush1.xpose.msra.mxu0 0.0
    %1242 = vmatprep.subr.mxu0 0.0
    %1243 = vmatpush1.xpose.msra.mxu0 0.0
    %1244 = vmatprep.subr.mxu0 0.0
    %1245 = vmatpush1.xpose.msra.mxu0 0.0
    %1246 = vmatprep.subr.mxu0 0.0
    %1247 = vmatpush1.xpose.msra.mxu0 0.0
    %1248 = vmatprep.subr.mxu0 0.0
    %1249 = vmatpush1.xpose.msra.mxu0 0.0
    %1250 = vmatprep.subr.mxu0 0.0
    %1251 = vmatpush1.xpose.msra.mxu0 0.0
    %1252 = vmatprep.subr.mxu0 0.0
    %1253 = vmatpush1.xpose.msra.mxu0 0.0
    %1254 = vmatprep.subr.mxu0 0.0
    %1255 = vmatpush1.xpose.msra.mxu0 0.0
    %1256 = vmatprep.subr.mxu0 0.0
    %1257 = vmatpush1.xpose.msra.mxu0 0.0
    %1258 = vmatprep.subr.mxu0 0.0
    %1259 = vmatpush1.xpose.msra.mxu0 0.0
    %1260 = vmatprep.subr.mxu0 0.0
    %1261 = vmatpush1.xpose.msra.mxu0 0.0
    %1262 = vmatprep.subr.mxu0 0.0
    %1263 = vmatpush1.xpose.msra.mxu0 0.0
    %1264 = vmatprep.subr.mxu0 0.0
    %1265 = vmatpush1.xpose.msra.mxu0 0.0
    %1266 = vmatprep.subr.mxu0 0.0
    %1267 = vmatpush1.xpose.msra.mxu0 0.0
    %1268 = vmatprep.subr.mxu0 0.0
    %1269 = vmatpush1.xpose.msra.mxu0 0.0
    %1270 = vmatprep.subr.mxu0 0.0
    %1271 = vmatpush1.xpose.msra.mxu0 0.0
    %1272 = vmatprep.subr.mxu0 0.0
    %1273 = vmatpush1.xpose.msra.mxu0 0.0
    %1274 = vmatprep.subr.mxu0 0.0
    %1275 = vmatpush1.xpose.msra.mxu0 0.0
    %1276 = vmatprep.subr.mxu0 0.0
    %1277 = vmatpush1.xpose.msra.mxu0 0.0
    %1278 = vmatprep.subr.mxu0 0.0
    %1279 = vmatpush1.xpose.msra.mxu0 0.0
    %1280 = vmatprep.subr.mxu0 0.0
    %1281 = vmatpush1.xpose.msra.mxu0 0.0
    %1282 = vmatprep.subr.mxu0 0.0
    %1283 = vmatpush1.xpose.msra.mxu0 0.0
    %1284 = vmatprep.subr.mxu0 0.0
    %1285 = vmatpush1.xpose.msra.mxu0 0.0
    %1286 = vmatprep.subr.mxu0 0.0
    %1287 = vmatpush1.xpose.msra.mxu0 0.0
    %1288 = vmatprep.mubr.f32.mxu0 0.0
    %1289 = vmatmul.mubr.f32.gmra.mrb[0].mxu0 %v1220
    %v1290 = vpop.f32.mrb[0].mxu0
    %v1291 = vadd.f32 0.0, %v1290
    %v1292 = vpop.f32.mrb[0].mxu0
    %1293 = vdwg.mxu0
    %1294 = vrot.lane.b32.xlu0 %v226, 96
    %v1295 = vpop.permute.xlu0 %1294
    %v1296 = vsel %vm231, %v226, 0
    %v1298 = vsel %vm231, %v1295, 0
    %1300 = vmatprep.subr.mxu0 0.0
    %1301 = vmatpush1.xpose.msra.mxu0 %v1298
    %1302 = vmatprep.subr.mxu0 0.0
    %1303 = vmatpush1.xpose.msra.mxu0 0.0
    %1304 = vmatprep.subr.mxu0 0.0
    %1305 = vmatpush1.xpose.msra.mxu0 0.0
    %1306 = vmatprep.subr.mxu0 0.0
    %1307 = vmatpush1.xpose.msra.mxu0 0.0
    %1308 = vmatprep.subr.mxu0 0.0
    %1309 = vmatpush1.xpose.msra.mxu0 0.0
    %1310 = vmatprep.subr.mxu0 0.0
    %1311 = vmatpush1.xpose.msra.mxu0 0.0
    %1312 = vmatprep.subr.mxu0 0.0
    %1313 = vmatpush1.xpose.msra.mxu0 0.0
    %1314 = vmatprep.subr.mxu0 0.0
    %1315 = vmatpush1.xpose.msra.mxu0 0.0
    %1316 = vmatprep.subr.mxu0 0.0
    %1317 = vmatpush1.xpose.msra.mxu0 0.0
    %1318 = vmatprep.subr.mxu0 0.0
    %1319 = vmatpush1.xpose.msra.mxu0 0.0
    %1320 = vmatprep.subr.mxu0 0.0
    %1321 = vmatpush1.xpose.msra.mxu0 0.0
    %1322 = vmatprep.subr.mxu0 0.0
    %1323 = vmatpush1.xpose.msra.mxu0 0.0
    %1324 = vmatprep.subr.mxu0 0.0
    %1325 = vmatpush1.xpose.msra.mxu0 0.0
    %1326 = vmatprep.subr.mxu0 0.0
    %1327 = vmatpush1.xpose.msra.mxu0 0.0
    %1328 = vmatprep.subr.mxu0 0.0
    %1329 = vmatpush1.xpose.msra.mxu0 0.0
    %1330 = vmatprep.subr.mxu0 0.0
    %1331 = vmatpush1.xpose.msra.mxu0 0.0
    %1332 = vmatprep.subr.mxu0 0.0
    %1333 = vmatpush1.xpose.msra.mxu0 0.0
    %1334 = vmatprep.subr.mxu0 0.0
    %1335 = vmatpush1.xpose.msra.mxu0 0.0
    %1336 = vmatprep.subr.mxu0 0.0
    %1337 = vmatpush1.xpose.msra.mxu0 0.0
    %1338 = vmatprep.subr.mxu0 0.0
    %1339 = vmatpush1.xpose.msra.mxu0 0.0
    %1340 = vmatprep.subr.mxu0 0.0
    %1341 = vmatpush1.xpose.msra.mxu0 0.0
    %1342 = vmatprep.subr.mxu0 0.0
    %1343 = vmatpush1.xpose.msra.mxu0 0.0
    %1344 = vmatprep.subr.mxu0 0.0
    %1345 = vmatpush1.xpose.msra.mxu0 0.0
    %1346 = vmatprep.subr.mxu0 0.0
    %1347 = vmatpush1.xpose.msra.mxu0 0.0
    %1348 = vmatprep.subr.mxu0 0.0
    %1349 = vmatpush1.xpose.msra.mxu0 0.0
    %1350 = vmatprep.subr.mxu0 0.0
    %1351 = vmatpush1.xpose.msra.mxu0 0.0
    %1352 = vmatprep.subr.mxu0 0.0
    %1353 = vmatpush1.xpose.msra.mxu0 0.0
    %1354 = vmatprep.subr.mxu0 0.0
    %1355 = vmatpush1.xpose.msra.mxu0 0.0
    %1356 = vmatprep.subr.mxu0 0.0
    %1357 = vmatpush1.xpose.msra.mxu0 0.0
    %1358 = vmatprep.subr.mxu0 0.0
    %1359 = vmatpush1.xpose.msra.mxu0 0.0
    %1360 = vmatprep.subr.mxu0 0.0
    %1361 = vmatpush1.xpose.msra.mxu0 0.0
    %1362 = vmatprep.subr.mxu0 0.0
    %1363 = vmatpush1.xpose.msra.mxu0 0.0
    %1364 = vmatprep.mubr.f32.mxu0 0.0
    %1365 = vmatmul.mubr.f32.gmra.mrb[0].mxu0 %v1296
    %v1366 = vpop.f32.mrb[0].mxu0
    %v1367 = vadd.f32 0.0, %v1366
    %v1368 = vpop.f32.mrb[0].mxu0
    %1369 = vdwg.mxu0
    %1370 = vrot.lane.b32.xlu0 %v228, 96
    %v1371 = vpop.permute.xlu0 %1370
    %v1372 = vsel %vm231, %v228, 0
    %v1374 = vsel %vm231, %v1371, 0
    %1376 = vmatprep.subr.mxu0 0.0
    %1377 = vmatpush1.xpose.msra.mxu0 %v1374
    %1378 = vmatprep.subr.mxu0 0.0
    %1379 = vmatpush1.xpose.msra.mxu0 0.0
    %1380 = vmatprep.subr.mxu0 0.0
    %1381 = vmatpush1.xpose.msra.mxu0 0.0
    %1382 = vmatprep.subr.mxu0 0.0
    %1383 = vmatpush1.xpose.msra.mxu0 0.0
    %1384 = vmatprep.subr.mxu0 0.0
    %1385 = vmatpush1.xpose.msra.mxu0 0.0
    %1386 = vmatprep.subr.mxu0 0.0
    %1387 = vmatpush1.xpose.msra.mxu0 0.0
    %1388 = vmatprep.subr.mxu0 0.0
    %1389 = vmatpush1.xpose.msra.mxu0 0.0
    %1390 = vmatprep.subr.mxu0 0.0
    %1391 = vmatpush1.xpose.msra.mxu0 0.0
    %1392 = vmatprep.subr.mxu0 0.0
    %1393 = vmatpush1.xpose.msra.mxu0 0.0
    %1394 = vmatprep.subr.mxu0 0.0
    %1395 = vmatpush1.xpose.msra.mxu0 0.0
    %1396 = vmatprep.subr.mxu0 0.0
    %1397 = vmatpush1.xpose.msra.mxu0 0.0
    %1398 = vmatprep.subr.mxu0 0.0
    %1399 = vmatpush1.xpose.msra.mxu0 0.0
    %1400 = vmatprep.subr.mxu0 0.0
    %1401 = vmatpush1.xpose.msra.mxu0 0.0
    %1402 = vmatprep.subr.mxu0 0.0
    %1403 = vmatpush1.xpose.msra.mxu0 0.0
    %1404 = vmatprep.subr.mxu0 0.0
    %1405 = vmatpush1.xpose.msra.mxu0 0.0
    %1406 = vmatprep.subr.mxu0 0.0
    %1407 = vmatpush1.xpose.msra.mxu0 0.0
    %1408 = vmatprep.subr.mxu0 0.0
    %1409 = vmatpush1.xpose.msra.mxu0 0.0
    %1410 = vmatprep.subr.mxu0 0.0
    %1411 = vmatpush1.xpose.msra.mxu0 0.0
    %1412 = vmatprep.subr.mxu0 0.0
    %1413 = vmatpush1.xpose.msra.mxu0 0.0
    %1414 = vmatprep.subr.mxu0 0.0
    %1415 = vmatpush1.xpose.msra.mxu0 0.0
    %1416 = vmatprep.subr.mxu0 0.0
    %1417 = vmatpush1.xpose.msra.mxu0 0.0
    %1418 = vmatprep.subr.mxu0 0.0
    %1419 = vmatpush1.xpose.msra.mxu0 0.0
    %1420 = vmatprep.subr.mxu0 0.0
    %1421 = vmatpush1.xpose.msra.mxu0 0.0
    %1422 = vmatprep.subr.mxu0 0.0
    %1423 = vmatpush1.xpose.msra.mxu0 0.0
    %1424 = vmatprep.subr.mxu0 0.0
    %1425 = vmatpush1.xpose.msra.mxu0 0.0
    %1426 = vmatprep.subr.mxu0 0.0
    %1427 = vmatpush1.xpose.msra.mxu0 0.0
    %1428 = vmatprep.subr.mxu0 0.0
    %1429 = vmatpush1.xpose.msra.mxu0 0.0
    %1430 = vmatprep.subr.mxu0 0.0
    %1431 = vmatpush1.xpose.msra.mxu0 0.0
    %1432 = vmatprep.subr.mxu0 0.0
    %1433 = vmatpush1.xpose.msra.mxu0 0.0
    %1434 = vmatprep.subr.mxu0 0.0
    %1435 = vmatpush1.xpose.msra.mxu0 0.0
    %1436 = vmatprep.subr.mxu0 0.0
    %1437 = vmatpush1.xpose.msra.mxu0 0.0
    %1438 = vmatprep.subr.mxu0 0.0
    %1439 = vmatpush1.xpose.msra.mxu0 0.0
    %1440 = vmatprep.mubr.f32.mxu0 0.0
    %1441 = vmatmul.mubr.f32.gmra.mrb[0].mxu0 %v1372
    %v1442 = vpop.f32.mrb[0].mxu0
    %v1443 = vadd.f32 0.0, %v1442
    %v1444 = vpop.f32.mrb[0].mxu0
    %1445 = vdwg.mxu0
    %v1446 = vmul.f32 %v303, 0.5
    %v1447 = vmul.f32 %v379, 0.5
    %v1448 = vmul.f32 %v455, 0.5
    %v1449 = vmul.f32 %v531, 0.5
    %v1450 = vmul.f32 %v607, 0.5
    %v1451 = vmul.f32 %v683, 0.5
    %v1452 = vmul.f32 %v759, 0.5
    %v1453 = vmul.f32 %v835, 0.5
    %v1454 = vmul.f32 %v911, 0.5
    %v1455 = vmul.f32 %v987, 0.5
    %v1456 = vmul.f32 %v1063, 0.5
    %v1457 = vmul.f32 %v1139, 0.5
    %v1458 = vmul.f32 %v1215, 0.5
    %v1459 = vmul.f32 %v1291, 0.5
    %v1460 = vmul.f32 %v1367, 0.5
    %v1461 = vmul.f32 %v1443, 0.5
    %vm1462 = vcmask 64512
    %v1463 = vsel %vm1462, %v1446, -inf
    %1464 = vmax.xlane.f32.xlu0 %v1463
    %v1465 = vpop.xlane.xlu0 %1464
    %v1466 = vsel %vm1462, %v1447, -inf
    %1467 = vmax.xlane.f32.xlu0 %v1466
    %v1468 = vpop.xlane.xlu0 %1467
    %v1469 = vsel %vm1462, %v1448, -inf
    %1470 = vmax.xlane.f32.xlu0 %v1469
    %v1471 = vpop.xlane.xlu0 %1470
    %v1472 = vsel %vm1462, %v1449, -inf
    %1473 = vmax.xlane.f32.xlu0 %v1472
    %v1474 = vpop.xlane.xlu0 %1473
    %v1475 = vsel %vm1462, %v1450, -inf
    %1476 = vmax.xlane.f32.xlu0 %v1475
    %v1477 = vpop.xlane.xlu0 %1476
    %v1478 = vsel %vm1462, %v1451, -inf
    %1479 = vmax.xlane.f32.xlu0 %v1478
    %v1480 = vpop.xlane.xlu0 %1479
    %v1481 = vsel %vm1462, %v1452, -inf
    %1482 = vmax.xlane.f32.xlu0 %v1481
    %v1483 = vpop.xlane.xlu0 %1482
    %v1484 = vsel %vm1462, %v1453, -inf
    %1485 = vmax.xlane.f32.xlu0 %v1484
    %v1486 = vpop.xlane.xlu0 %1485
    %v1487 = vsel %vm1462, %v1454, -inf
    %1488 = vmax.xlane.f32.xlu0 %v1487
    %v1489 = vpop.xlane.xlu0 %1488
    %v1490 = vsel %vm1462, %v1455, -inf
    %1491 = vmax.xlane.f32.xlu0 %v1490
    %v1492 = vpop.xlane.xlu0 %1491
    %v1493 = vsel %vm1462, %v1456, -inf
    %1494 = vmax.xlane.f32.xlu0 %v1493
    %v1495 = vpop.xlane.xlu0 %1494
    %v1496 = vsel %vm1462, %v1457, -inf
    %1497 = vmax.xlane.f32.xlu0 %v1496
    %v1498 = vpop.xlane.xlu0 %1497
    %v1499 = vsel %vm1462, %v1458, -inf
    %1500 = vmax.xlane.f32.xlu0 %v1499
    %v1501 = vpop.xlane.xlu0 %1500
    %v1502 = vsel %vm1462, %v1459, -inf
    %1503 = vmax.xlane.f32.xlu0 %v1502
    %v1504 = vpop.xlane.xlu0 %1503
    %v1505 = vsel %vm1462, %v1460, -inf
    %1506 = vmax.xlane.f32.xlu0 %v1505
    %v1507 = vpop.xlane.xlu0 %1506
    %v1508 = vsel %vm1462, %v1461, -inf
    %1509 = vmax.xlane.f32.xlu0 %v1508
    %v1510 = vpop.xlane.xlu0 %1509
    %v1511 = vsub.f32 %v1446, %v1465
    %v1512 = vsub.f32 %v1447, %v1468
    %v1513 = vsub.f32 %v1448, %v1471
    %v1514 = vsub.f32 %v1449, %v1474
    %v1515 = vsub.f32 %v1450, %v1477
    %v1516 = vsub.f32 %v1451, %v1480
    %v1517 = vsub.f32 %v1452, %v1483
    %v1518 = vsub.f32 %v1453, %v1486
    %v1519 = vsub.f32 %v1454, %v1489
    %v1520 = vsub.f32 %v1455, %v1492
    %v1521 = vsub.f32 %v1456, %v1495
    %v1522 = vsub.f32 %v1457, %v1498
    %v1523 = vsub.f32 %v1458, %v1501
    %v1524 = vsub.f32 %v1459, %v1504
    %v1525 = vsub.f32 %v1460, %v1507
    %v1526 = vsub.f32 %v1461, %v1510
    %v1527 = vmul.f32 %v1511, 1.442695
    %v1528 = vpow.pop %v1527
    %v1529 = vmul.f32 %v1512, 1.442695
    %v1530 = vpow.pop %v1529
    %v1531 = vmul.f32 %v1513, 1.442695
    %v1532 = vpow.pop %v1531
    %v1533 = vmul.f32 %v1514, 1.442695
    %v1534 = vpow.pop %v1533
    %v1535 = vmul.f32 %v1515, 1.442695
    %v1536 = vpow.pop %v1535
    %v1537 = vmul.f32 %v1516, 1.442695
    %v1538 = vpow.pop %v1537
    %v1539 = vmul.f32 %v1517, 1.442695
    %v1540 = vpow.pop %v1539
    %v1541 = vmul.f32 %v1518, 1.442695
    %v1542 = vpow.pop %v1541
    %v1543 = vmul.f32 %v1519, 1.442695
    %v1544 = vpow.pop %v1543
    %v1545 = vmul.f32 %v1520, 1.442695
    %v1546 = vpow.pop %v1545
    %v1547 = vmul.f32 %v1521, 1.442695
    %v1548 = vpow.pop %v1547
    %v1549 = vmul.f32 %v1522, 1.442695
    %v1550 = vpow.pop %v1549
    %v1551 = vmul.f32 %v1523, 1.442695
    %v1552 = vpow.pop %v1551
    %v1553 = vmul.f32 %v1524, 1.442695
    %v1554 = vpow.pop %v1553
    %v1555 = vmul.f32 %v1525, 1.442695
    %v1556 = vpow.pop %v1555
    %v1557 = vmul.f32 %v1526, 1.442695
    %v1558 = vpow.pop %v1557
    %v1559 = vsel %vm1462, %v1528, 0.0
    %1560 = vadd.xlane.f32.xlu0 %v1559
    %v1561 = vpop.xlane.xlu0 %1560
    %v1562 = vsel %vm1462, %v1530, 0.0
    %1563 = vadd.xlane.f32.xlu0 %v1562
    %v1564 = vpop.xlane.xlu0 %1563
    %v1565 = vsel %vm1462, %v1532, 0.0
    %1566 = vadd.xlane.f32.xlu0 %v1565
    %v1567 = vpop.xlane.xlu0 %1566
    %v1568 = vsel %vm1462, %v1534, 0.0
    %1569 = vadd.xlane.f32.xlu0 %v1568
    %v1570 = vpop.xlane.xlu0 %1569
    %v1571 = vsel %vm1462, %v1536, 0.0
    %1572 = vadd.xlane.f32.xlu0 %v1571
    %v1573 = vpop.xlane.xlu0 %1572
    %v1574 = vsel %vm1462, %v1538, 0.0
    %1575 = vadd.xlane.f32.xlu0 %v1574
    %v1576 = vpop.xlane.xlu0 %1575
    %v1577 = vsel %vm1462, %v1540, 0.0
    %1578 = vadd.xlane.f32.xlu0 %v1577
    %v1579 = vpop.xlane.xlu0 %1578
    %v1580 = vsel %vm1462, %v1542, 0.0
    %1581 = vadd.xlane.f32.xlu0 %v1580
    %v1582 = vpop.xlane.xlu0 %1581
    %v1583 = vsel %vm1462, %v1544, 0.0
    %1584 = vadd.xlane.f32.xlu0 %v1583
    %v1585 = vpop.xlane.xlu0 %1584
    %v1586 = vsel %vm1462, %v1546, 0.0
    %1587 = vadd.xlane.f32.xlu0 %v1586
    %v1588 = vpop.xlane.xlu0 %1587
    %v1589 = vsel %vm1462, %v1548, 0.0
    %1590 = vadd.xlane.f32.xlu0 %v1589
    %v1591 = vpop.xlane.xlu0 %1590
    %v1592 = vsel %vm1462, %v1550, 0.0
    %1593 = vadd.xlane.f32.xlu0 %v1592
    %v1594 = vpop.xlane.xlu0 %1593
    %v1595 = vsel %vm1462, %v1552, 0.0
    %1596 = vadd.xlane.f32.xlu0 %v1595
    %v1597 = vpop.xlane.xlu0 %1596
    %v1598 = vsel %vm1462, %v1554, 0.0
    %1599 = vadd.xlane.f32.xlu0 %v1598
    %v1600 = vpop.xlane.xlu0 %1599
    %v1601 = vsel %vm1462, %v1556, 0.0
    %1602 = vadd.xlane.f32.xlu0 %v1601
    %v1603 = vpop.xlane.xlu0 %1602
    %v1604 = vsel %vm1462, %v1558, 0.0
    %1605 = vadd.xlane.f32.xlu0 %v1604
    %v1606 = vpop.xlane.xlu0 %1605
    %v1607 = vrcp.pop %v1561
    %v1608 = vmul.f32 %v1528, %v1607
    %v1609 = vrcp.pop %v1564
    %v1610 = vmul.f32 %v1530, %v1609
    %v1611 = vrcp.pop %v1567
    %v1612 = vmul.f32 %v1532, %v1611
    %v1613 = vrcp.pop %v1570
    %v1614 = vmul.f32 %v1534, %v1613
    %v1615 = vrcp.pop %v1573
    %v1616 = vmul.f32 %v1536, %v1615
    %v1617 = vrcp.pop %v1576
    %v1618 = vmul.f32 %v1538, %v1617
    %v1619 = vrcp.pop %v1579
    %v1620 = vmul.f32 %v1540, %v1619
    %v1621 = vrcp.pop %v1582
    %v1622 = vmul.f32 %v1542, %v1621
    %v1623 = vrcp.pop %v1585
    %v1624 = vmul.f32 %v1544, %v1623
    %v1625 = vrcp.pop %v1588
    %v1626 = vmul.f32 %v1546, %v1625
    %v1627 = vrcp.pop %v1591
    %v1628 = vmul.f32 %v1548, %v1627
    %v1629 = vrcp.pop %v1594
    %v1630 = vmul.f32 %v1550, %v1629
    %v1631 = vrcp.pop %v1597
    %v1632 = vmul.f32 %v1552, %v1631
    %v1633 = vrcp.pop %v1600
    %v1634 = vmul.f32 %v1554, %v1633
    %v1635 = vrcp.pop %v1603
    %v1636 = vmul.f32 %v1556, %v1635
    %v1637 = vrcp.pop %v1606
    %v1638 = vmul.f32 %v1558, %v1637
    %1639 = vrot.lane.b32.xlu0 %v191, 64
    %v1640 = vpop.permute.xlu0 %1639
    %v1643 = vsel %vm1462, %v1608, 0
    %1645 = vmatprep.subr.mxu0 0.0
    %1646 = vmatpush1.msra.mxu0 %v1640
    %1647 = vmatprep.subr.mxu0 0.0
    %1648 = vmatpush1.msra.mxu0 0.0
    %1649 = vmatprep.subr.mxu0 0.0
    %1650 = vmatpush1.msra.mxu0 0.0
    %1651 = vmatprep.subr.mxu0 0.0
    %1652 = vmatpush1.msra.mxu0 0.0
    %1653 = vmatprep.subr.mxu0 0.0
    %1654 = vmatpush1.msra.mxu0 0.0
    %1655 = vmatprep.subr.mxu0 0.0
    %1656 = vmatpush1.msra.mxu0 0.0
    %1657 = vmatprep.subr.mxu0 0.0
    %1658 = vmatpush1.msra.mxu0 0.0
    %1659 = vmatprep.subr.mxu0 0.0
    %1660 = vmatpush1.msra.mxu0 0.0
    %1661 = vmatprep.subr.mxu0 0.0
    %1662 = vmatpush1.msra.mxu0 0.0
    %1663 = vmatprep.subr.mxu0 0.0
    %1664 = vmatpush1.msra.mxu0 0.0
    %1665 = vmatprep.subr.mxu0 0.0
    %1666 = vmatpush1.msra.mxu0 0.0
    %1667 = vmatprep.subr.mxu0 0.0
    %1668 = vmatpush1.msra.mxu0 0.0
    %1669 = vmatprep.subr.mxu0 0.0
    %1670 = vmatpush1.msra.mxu0 0.0
    %1671 = vmatprep.subr.mxu0 0.0
    %1672 = vmatpush1.msra.mxu0 0.0
    %1673 = vmatprep.subr.mxu0 0.0
    %1674 = vmatpush1.msra.mxu0 0.0
    %1675 = vmatprep.subr.mxu0 0.0
    %1676 = vmatpush1.msra.mxu0 0.0
    %1677 = vmatprep.subr.mxu0 0.0
    %1678 = vmatpush1.msra.mxu0 0.0
    %1679 = vmatprep.subr.mxu0 0.0
    %1680 = vmatpush1.msra.mxu0 0.0
    %1681 = vmatprep.subr.mxu0 0.0
    %1682 = vmatpush1.msra.mxu0 0.0
    %1683 = vmatprep.subr.mxu0 0.0
    %1684 = vmatpush1.msra.mxu0 0.0
    %1685 = vmatprep.subr.mxu0 0.0
    %1686 = vmatpush1.msra.mxu0 0.0
    %1687 = vmatprep.subr.mxu0 0.0
    %1688 = vmatpush1.msra.mxu0 0.0
    %1689 = vmatprep.subr.mxu0 0.0
    %1690 = vmatpush1.msra.mxu0 0.0
    %1691 = vmatprep.subr.mxu0 0.0
    %1692 = vmatpush1.msra.mxu0 0.0
    %1693 = vmatprep.subr.mxu0 0.0
    %1694 = vmatpush1.msra.mxu0 0.0
    %1695 = vmatprep.subr.mxu0 0.0
    %1696 = vmatpush1.msra.mxu0 0.0
    %1697 = vmatprep.subr.mxu0 0.0
    %1698 = vmatpush1.msra.mxu0 0.0
    %1699 = vmatprep.subr.mxu0 0.0
    %1700 = vmatpush1.msra.mxu0 0.0
    %1701 = vmatprep.subr.mxu0 0.0
    %1702 = vmatpush1.msra.mxu0 0.0
    %1703 = vmatprep.subr.mxu0 0.0
    %1704 = vmatpush1.msra.mxu0 0.0
    %1705 = vmatprep.subr.mxu0 0.0
    %1706 = vmatpush1.msra.mxu0 0.0
    %1707 = vmatprep.subr.mxu0 0.0
    %1708 = vmatpush1.msra.mxu0 0.0
    %1709 = vmatprep.mubr.f32.mxu0 0.0
    %1710 = vmatmul.mubr.f32.gmra.mrb[0].mxu0 %v1643
    %v1711 = vpop.f32.mrb[0].mxu0
    %v1712 = vadd.f32 0.0, %v1711
    %v1713 = vpop.f32.mrb[0].mxu0
    %1714 = vdwg.mxu0
    %1715 = vrot.lane.b32.xlu0 %v201, 64
    %v1716 = vpop.permute.xlu0 %1715
    %v1719 = vsel %vm1462, %v1610, 0
    %1721 = vmatprep.subr.mxu0 0.0
    %1722 = vmatpush1.msra.mxu0 %v1716
    %1723 = vmatprep.subr.mxu0 0.0
    %1724 = vmatpush1.msra.mxu0 0.0
    %1725 = vmatprep.subr.mxu0 0.0
    %1726 = vmatpush1.msra.mxu0 0.0
    %1727 = vmatprep.subr.mxu0 0.0
    %1728 = vmatpush1.msra.mxu0 0.0
    %1729 = vmatprep.subr.mxu0 0.0
    %1730 = vmatpush1.msra.mxu0 0.0
    %1731 = vmatprep.subr.mxu0 0.0
    %1732 = vmatpush1.msra.mxu0 0.0
    %1733 = vmatprep.subr.mxu0 0.0
    %1734 = vmatpush1.msra.mxu0 0.0
    %1735 = vmatprep.subr.mxu0 0.0
    %1736 = vmatpush1.msra.mxu0 0.0
    %1737 = vmatprep.subr.mxu0 0.0
    %1738 = vmatpush1.msra.mxu0 0.0
    %1739 = vmatprep.subr.mxu0 0.0
    %1740 = vmatpush1.msra.mxu0 0.0
    %1741 = vmatprep.subr.mxu0 0.0
    %1742 = vmatpush1.msra.mxu0 0.0
    %1743 = vmatprep.subr.mxu0 0.0
    %1744 = vmatpush1.msra.mxu0 0.0
    %1745 = vmatprep.subr.mxu0 0.0
    %1746 = vmatpush1.msra.mxu0 0.0
    %1747 = vmatprep.subr.mxu0 0.0
    %1748 = vmatpush1.msra.mxu0 0.0
    %1749 = vmatprep.subr.mxu0 0.0
    %1750 = vmatpush1.msra.mxu0 0.0
    %1751 = vmatprep.subr.mxu0 0.0
    %1752 = vmatpush1.msra.mxu0 0.0
    %1753 = vmatprep.subr.mxu0 0.0
    %1754 = vmatpush1.msra.mxu0 0.0
    %1755 = vmatprep.subr.mxu0 0.0
    %1756 = vmatpush1.msra.mxu0 0.0
    %1757 = vmatprep.subr.mxu0 0.0
    %1758 = vmatpush1.msra.mxu0 0.0
    %1759 = vmatprep.subr.mxu0 0.0
    %1760 = vmatpush1.msra.mxu0 0.0
    %1761 = vmatprep.subr.mxu0 0.0
    %1762 = vmatpush1.msra.mxu0 0.0
    %1763 = vmatprep.subr.mxu0 0.0
    %1764 = vmatpush1.msra.mxu0 0.0
    %1765 = vmatprep.subr.mxu0 0.0
    %1766 = vmatpush1.msra.mxu0 0.0
    %1767 = vmatprep.subr.mxu0 0.0
    %1768 = vmatpush1.msra.mxu0 0.0
    %1769 = vmatprep.subr.mxu0 0.0
    %1770 = vmatpush1.msra.mxu0 0.0
    %1771 = vmatprep.subr.mxu0 0.0
    %1772 = vmatpush1.msra.mxu0 0.0
    %1773 = vmatprep.subr.mxu0 0.0
    %1774 = vmatpush1.msra.mxu0 0.0
    %1775 = vmatprep.subr.mxu0 0.0
    %1776 = vmatpush1.msra.mxu0 0.0
    %1777 = vmatprep.subr.mxu0 0.0
    %1778 = vmatpush1.msra.mxu0 0.0
    %1779 = vmatprep.subr.mxu0 0.0
    %1780 = vmatpush1.msra.mxu0 0.0
    %1781 = vmatprep.subr.mxu0 0.0
    %1782 = vmatpush1.msra.mxu0 0.0
    %1783 = vmatprep.subr.mxu0 0.0
    %1784 = vmatpush1.msra.mxu0 0.0
    %1785 = vmatprep.mubr.f32.mxu0 0.0
    %1786 = vmatmul.mubr.f32.gmra.mrb[0].mxu0 %v1719
    %v1787 = vpop.f32.mrb[0].mxu0
    %v1788 = vadd.f32 0.0, %v1787
    %v1789 = vpop.f32.mrb[0].mxu0
    %1790 = vdwg.mxu0
    %1791 = vrot.lane.b32.xlu0 %v203, 64
    %v1792 = vpop.permute.xlu0 %1791
    %v1795 = vsel %vm1462, %v1612, 0
    %1797 = vmatprep.subr.mxu0 0.0
    %1798 = vmatpush1.msra.mxu0 %v1792
    %1799 = vmatprep.subr.mxu0 0.0
    %1800 = vmatpush1.msra.mxu0 0.0
    %1801 = vmatprep.subr.mxu0 0.0
    %1802 = vmatpush1.msra.mxu0 0.0
    %1803 = vmatprep.subr.mxu0 0.0
    %1804 = vmatpush1.msra.mxu0 0.0
    %1805 = vmatprep.subr.mxu0 0.0
    %1806 = vmatpush1.msra.mxu0 0.0
    %1807 = vmatprep.subr.mxu0 0.0
    %1808 = vmatpush1.msra.mxu0 0.0
    %1809 = vmatprep.subr.mxu0 0.0
    %1810 = vmatpush1.msra.mxu0 0.0
    %1811 = vmatprep.subr.mxu0 0.0
    %1812 = vmatpush1.msra.mxu0 0.0
    %1813 = vmatprep.subr.mxu0 0.0
    %1814 = vmatpush1.msra.mxu0 0.0
    %1815 = vmatprep.subr.mxu0 0.0
    %1816 = vmatpush1.msra.mxu0 0.0
    %1817 = vmatprep.subr.mxu0 0.0
    %1818 = vmatpush1.msra.mxu0 0.0
    %1819 = vmatprep.subr.mxu0 0.0
    %1820 = vmatpush1.msra.mxu0 0.0
    %1821 = vmatprep.subr.mxu0 0.0
    %1822 = vmatpush1.msra.mxu0 0.0
    %1823 = vmatprep.subr.mxu0 0.0
    %1824 = vmatpush1.msra.mxu0 0.0
    %1825 = vmatprep.subr.mxu0 0.0
    %1826 = vmatpush1.msra.mxu0 0.0
    %1827 = vmatprep.subr.mxu0 0.0
    %1828 = vmatpush1.msra.mxu0 0.0
    %1829 = vmatprep.subr.mxu0 0.0
    %1830 = vmatpush1.msra.mxu0 0.0
    %1831 = vmatprep.subr.mxu0 0.0
    %1832 = vmatpush1.msra.mxu0 0.0
    %1833 = vmatprep.subr.mxu0 0.0
    %1834 = vmatpush1.msra.mxu0 0.0
    %1835 = vmatprep.subr.mxu0 0.0
    %1836 = vmatpush1.msra.mxu0 0.0
    %1837 = vmatprep.subr.mxu0 0.0
    %1838 = vmatpush1.msra.mxu0 0.0
    %1839 = vmatprep.subr.mxu0 0.0
    %1840 = vmatpush1.msra.mxu0 0.0
    %1841 = vmatprep.subr.mxu0 0.0
    %1842 = vmatpush1.msra.mxu0 0.0
    %1843 = vmatprep.subr.mxu0 0.0
    %1844 = vmatpush1.msra.mxu0 0.0
    %1845 = vmatprep.subr.mxu0 0.0
    %1846 = vmatpush1.msra.mxu0 0.0
    %1847 = vmatprep.subr.mxu0 0.0
    %1848 = vmatpush1.msra.mxu0 0.0
    %1849 = vmatprep.subr.mxu0 0.0
    %1850 = vmatpush1.msra.mxu0 0.0
    %1851 = vmatprep.subr.mxu0 0.0
    %1852 = vmatpush1.msra.mxu0 0.0
    %1853 = vmatprep.subr.mxu0 0.0
    %1854 = vmatpush1.msra.mxu0 0.0
    %1855 = vmatprep.subr.mxu0 0.0
    %1856 = vmatpush1.msra.mxu0 0.0
    %1857 = vmatprep.subr.mxu0 0.0
    %1858 = vmatpush1.msra.mxu0 0.0
    %1859 = vmatprep.subr.mxu0 0.0
    %1860 = vmatpush1.msra.mxu0 0.0
    %1861 = vmatprep.mubr.f32.mxu0 0.0
    %1862 = vmatmul.mubr.f32.gmra.mrb[0].mxu0 %v1795
    %v1863 = vpop.f32.mrb[0].mxu0
    %v1864 = vadd.f32 0.0, %v1863
    %v1865 = vpop.f32.mrb[0].mxu0
    %1866 = vdwg.mxu0
    %1867 = vrot.lane.b32.xlu0 %v205, 64
    %v1868 = vpop.permute.xlu0 %1867
    %v1871 = vsel %vm1462, %v1614, 0
    %1873 = vmatprep.subr.mxu0 0.0
    %1874 = vmatpush1.msra.mxu0 %v1868
    %1875 = vmatprep.subr.mxu0 0.0
    %1876 = vmatpush1.msra.mxu0 0.0
    %1877 = vmatprep.subr.mxu0 0.0
    %1878 = vmatpush1.msra.mxu0 0.0
    %1879 = vmatprep.subr.mxu0 0.0
    %1880 = vmatpush1.msra.mxu0 0.0
    %1881 = vmatprep.subr.mxu0 0.0
    %1882 = vmatpush1.msra.mxu0 0.0
    %1883 = vmatprep.subr.mxu0 0.0
    %1884 = vmatpush1.msra.mxu0 0.0
    %1885 = vmatprep.subr.mxu0 0.0
    %1886 = vmatpush1.msra.mxu0 0.0
    %1887 = vmatprep.subr.mxu0 0.0
    %1888 = vmatpush1.msra.mxu0 0.0
    %1889 = vmatprep.subr.mxu0 0.0
    %1890 = vmatpush1.msra.mxu0 0.0
    %1891 = vmatprep.subr.mxu0 0.0
    %1892 = vmatpush1.msra.mxu0 0.0
    %1893 = vmatprep.subr.mxu0 0.0
    %1894 = vmatpush1.msra.mxu0 0.0
    %1895 = vmatprep.subr.mxu0 0.0
    %1896 = vmatpush1.msra.mxu0 0.0
    %1897 = vmatprep.subr.mxu0 0.0
    %1898 = vmatpush1.msra.mxu0 0.0
    %1899 = vmatprep.subr.mxu0 0.0
    %1900 = vmatpush1.msra.mxu0 0.0
    %1901 = vmatprep.subr.mxu0 0.0
    %1902 = vmatpush1.msra.mxu0 0.0
    %1903 = vmatprep.subr.mxu0 0.0
    %1904 = vmatpush1.msra.mxu0 0.0
    %1905 = vmatprep.subr.mxu0 0.0
    %1906 = vmatpush1.msra.mxu0 0.0
    %1907 = vmatprep.subr.mxu0 0.0
    %1908 = vmatpush1.msra.mxu0 0.0
    %1909 = vmatprep.subr.mxu0 0.0
    %1910 = vmatpush1.msra.mxu0 0.0
    %1911 = vmatprep.subr.mxu0 0.0
    %1912 = vmatpush1.msra.mxu0 0.0
    %1913 = vmatprep.subr.mxu0 0.0
    %1914 = vmatpush1.msra.mxu0 0.0
    %1915 = vmatprep.subr.mxu0 0.0
    %1916 = vmatpush1.msra.mxu0 0.0
    %1917 = vmatprep.subr.mxu0 0.0
    %1918 = vmatpush1.msra.mxu0 0.0
    %1919 = vmatprep.subr.mxu0 0.0
    %1920 = vmatpush1.msra.mxu0 0.0
    %1921 = vmatprep.subr.mxu0 0.0
    %1922 = vmatpush1.msra.mxu0 0.0
    %1923 = vmatprep.subr.mxu0 0.0
    %1924 = vmatpush1.msra.mxu0 0.0
    %1925 = vmatprep.subr.mxu0 0.0
    %1926 = vmatpush1.msra.mxu0 0.0
    %1927 = vmatprep.subr.mxu0 0.0
    %1928 = vmatpush1.msra.mxu0 0.0
    %1929 = vmatprep.subr.mxu0 0.0
    %1930 = vmatpush1.msra.mxu0 0.0
    %1931 = vmatprep.subr.mxu0 0.0
    %1932 = vmatpush1.msra.mxu0 0.0
    %1933 = vmatprep.subr.mxu0 0.0
    %1934 = vmatpush1.msra.mxu0 0.0
    %1935 = vmatprep.subr.mxu0 0.0
    %1936 = vmatpush1.msra.mxu0 0.0
    %1937 = vmatprep.mubr.f32.mxu0 0.0
    %1938 = vmatmul.mubr.f32.gmra.mrb[0].mxu0 %v1871
    %v1939 = vpop.f32.mrb[0].mxu0
    %v1940 = vadd.f32 0.0, %v1939
    %v1941 = vpop.f32.mrb[0].mxu0
    %1942 = vdwg.mxu0
    %1943 = vrot.lane.b32.xlu0 %v207, 64
    %v1944 = vpop.permute.xlu0 %1943
    %v1947 = vsel %vm1462, %v1616, 0
    %1949 = vmatprep.subr.mxu0 0.0
    %1950 = vmatpush1.msra.mxu0 %v1944
    %1951 = vmatprep.subr.mxu0 0.0
    %1952 = vmatpush1.msra.mxu0 0.0
    %1953 = vmatprep.subr.mxu0 0.0
    %1954 = vmatpush1.msra.mxu0 0.0
    %1955 = vmatprep.subr.mxu0 0.0
    %1956 = vmatpush1.msra.mxu0 0.0
    %1957 = vmatprep.subr.mxu0 0.0
    %1958 = vmatpush1.msra.mxu0 0.0
    %1959 = vmatprep.subr.mxu0 0.0
    %1960 = vmatpush1.msra.mxu0 0.0
    %1961 = vmatprep.subr.mxu0 0.0
    %1962 = vmatpush1.msra.mxu0 0.0
    %1963 = vmatprep.subr.mxu0 0.0
    %1964 = vmatpush1.msra.mxu0 0.0
    %1965 = vmatprep.subr.mxu0 0.0
    %1966 = vmatpush1.msra.mxu0 0.0
    %1967 = vmatprep.subr.mxu0 0.0
    %1968 = vmatpush1.msra.mxu0 0.0
    %1969 = vmatprep.subr.mxu0 0.0
    %1970 = vmatpush1.msra.mxu0 0.0
    %1971 = vmatprep.subr.mxu0 0.0
    %1972 = vmatpush1.msra.mxu0 0.0
    %1973 = vmatprep.subr.mxu0 0.0
    %1974 = vmatpush1.msra.mxu0 0.0
    %1975 = vmatprep.subr.mxu0 0.0
    %1976 = vmatpush1.msra.mxu0 0.0
    %1977 = vmatprep.subr.mxu0 0.0
    %1978 = vmatpush1.msra.mxu0 0.0
    %1979 = vmatprep.subr.mxu0 0.0
    %1980 = vmatpush1.msra.mxu0 0.0
    %1981 = vmatprep.subr.mxu0 0.0
    %1982 = vmatpush1.msra.mxu0 0.0
    %1983 = vmatprep.subr.mxu0 0.0
    %1984 = vmatpush1.msra.mxu0 0.0
    %1985 = vmatprep.subr.mxu0 0.0
    %1986 = vmatpush1.msra.mxu0 0.0
    %1987 = vmatprep.subr.mxu0 0.0
    %1988 = vmatpush1.msra.mxu0 0.0
    %1989 = vmatprep.subr.mxu0 0.0
    %1990 = vmatpush1.msra.mxu0 0.0
    %1991 = vmatprep.subr.mxu0 0.0
    %1992 = vmatpush1.msra.mxu0 0.0
    %1993 = vmatprep.subr.mxu0 0.0
    %1994 = vmatpush1.msra.mxu0 0.0
    %1995 = vmatprep.subr.mxu0 0.0
    %1996 = vmatpush1.msra.mxu0 0.0
    %1997 = vmatprep.subr.mxu0 0.0
    %1998 = vmatpush1.msra.mxu0 0.0
    %1999 = vmatprep.subr.mxu0 0.0
    %2000 = vmatpush1.msra.mxu0 0.0
    %2001 = vmatprep.subr.mxu0 0.0
    %2002 = vmatpush1.msra.mxu0 0.0
    %2003 = vmatprep.subr.mxu0 0.0
    %2004 = vmatpush1.msra.mxu0 0.0
    %2005 = vmatprep.subr.mxu0 0.0
    %2006 = vmatpush1.msra.mxu0 0.0
    %2007 = vmatprep.subr.mxu0 0.0
    %2008 = vmatpush1.msra.mxu0 0.0
    %2009 = vmatprep.subr.mxu0 0.0
    %2010 = vmatpush1.msra.mxu0 0.0
    %2011 = vmatprep.subr.mxu0 0.0
    %2012 = vmatpush1.msra.mxu0 0.0
    %2013 = vmatprep.mubr.f32.mxu0 0.0
    %2014 = vmatmul.mubr.f32.gmra.mrb[0].mxu0 %v1947
    %v2015 = vpop.f32.mrb[0].mxu0
    %v2016 = vadd.f32 0.0, %v2015
    %v2017 = vpop.f32.mrb[0].mxu0
    %2018 = vdwg.mxu0
    %2019 = vrot.lane.b32.xlu0 %v209, 64
    %v2020 = vpop.permute.xlu0 %2019
    %v2023 = vsel %vm1462, %v1618, 0
    %2025 = vmatprep.subr.mxu0 0.0
    %2026 = vmatpush1.msra.mxu0 %v2020
    %2027 = vmatprep.subr.mxu0 0.0
    %2028 = vmatpush1.msra.mxu0 0.0
    %2029 = vmatprep.subr.mxu0 0.0
    %2030 = vmatpush1.msra.mxu0 0.0
    %2031 = vmatprep.subr.mxu0 0.0
    %2032 = vmatpush1.msra.mxu0 0.0
    %2033 = vmatprep.subr.mxu0 0.0
    %2034 = vmatpush1.msra.mxu0 0.0
    %2035 = vmatprep.subr.mxu0 0.0
    %2036 = vmatpush1.msra.mxu0 0.0
    %2037 = vmatprep.subr.mxu0 0.0
    %2038 = vmatpush1.msra.mxu0 0.0
    %2039 = vmatprep.subr.mxu0 0.0
    %2040 = vmatpush1.msra.mxu0 0.0
    %2041 = vmatprep.subr.mxu0 0.0
    %2042 = vmatpush1.msra.mxu0 0.0
    %2043 = vmatprep.subr.mxu0 0.0
    %2044 = vmatpush1.msra.mxu0 0.0
    %2045 = vmatprep.subr.mxu0 0.0
    %2046 = vmatpush1.msra.mxu0 0.0
    %2047 = vmatprep.subr.mxu0 0.0
    %2048 = vmatpush1.msra.mxu0 0.0
    %2049 = vmatprep.subr.mxu0 0.0
    %2050 = vmatpush1.msra.mxu0 0.0
    %2051 = vmatprep.subr.mxu0 0.0
    %2052 = vmatpush1.msra.mxu0 0.0
    %2053 = vmatprep.subr.mxu0 0.0
    %2054 = vmatpush1.msra.mxu0 0.0
    %2055 = vmatprep.subr.mxu0 0.0
    %2056 = vmatpush1.msra.mxu0 0.0
    %2057 = vmatprep.subr.mxu0 0.0
    %2058 = vmatpush1.msra.mxu0 0.0
    %2059 = vmatprep.subr.mxu0 0.0
    %2060 = vmatpush1.msra.mxu0 0.0
    %2061 = vmatprep.subr.mxu0 0.0
    %2062 = vmatpush1.msra.mxu0 0.0
    %2063 = vmatprep.subr.mxu0 0.0
    %2064 = vmatpush1.msra.mxu0 0.0
    %2065 = vmatprep.subr.mxu0 0.0
    %2066 = vmatpush1.msra.mxu0 0.0
    %2067 = vmatprep.subr.mxu0 0.0
    %2068 = vmatpush1.msra.mxu0 0.0
    %2069 = vmatprep.subr.mxu0 0.0
    %2070 = vmatpush1.msra.mxu0 0.0
    %2071 = vmatprep.subr.mxu0 0.0
    %2072 = vmatpush1.msra.mxu0 0.0
    %2073 = vmatprep.subr.mxu0 0.0
    %2074 = vmatpush1.msra.mxu0 0.0
    %2075 = vmatprep.subr.mxu0 0.0
    %2076 = vmatpush1.msra.mxu0 0.0
    %2077 = vmatprep.subr.mxu0 0.0
    %2078 = vmatpush1.msra.mxu0 0.0
    %2079 = vmatprep.subr.mxu0 0.0
    %2080 = vmatpush1.msra.mxu0 0.0
    %2081 = vmatprep.subr.mxu0 0.0
    %2082 = vmatpush1.msra.mxu0 0.0
    %2083 = vmatprep.subr.mxu0 0.0
    %2084 = vmatpush1.msra.mxu0 0.0
    %2085 = vmatprep.subr.mxu0 0.0
    %2086 = vmatpush1.msra.mxu0 0.0
    %2087 = vmatprep.subr.mxu0 0.0
    %2088 = vmatpush1.msra.mxu0 0.0
    %2089 = vmatprep.mubr.f32.mxu0 0.0
    %2090 = vmatmul.mubr.f32.gmra.mrb[0].mxu0 %v2023
    %v2091 = vpop.f32.mrb[0].mxu0
    %v2092 = vadd.f32 0.0, %v2091
    %v2093 = vpop.f32.mrb[0].mxu0
    %2094 = vdwg.mxu0
    %2095 = vrot.lane.b32.xlu0 %v211, 64
    %v2096 = vpop.permute.xlu0 %2095
    %v2099 = vsel %vm1462, %v1620, 0
    %2101 = vmatprep.subr.mxu0 0.0
    %2102 = vmatpush1.msra.mxu0 %v2096
    %2103 = vmatprep.subr.mxu0 0.0
    %2104 = vmatpush1.msra.mxu0 0.0
    %2105 = vmatprep.subr.mxu0 0.0
    %2106 = vmatpush1.msra.mxu0 0.0
    %2107 = vmatprep.subr.mxu0 0.0
    %2108 = vmatpush1.msra.mxu0 0.0
    %2109 = vmatprep.subr.mxu0 0.0
    %2110 = vmatpush1.msra.mxu0 0.0
    %2111 = vmatprep.subr.mxu0 0.0
    %2112 = vmatpush1.msra.mxu0 0.0
    %2113 = vmatprep.subr.mxu0 0.0
    %2114 = vmatpush1.msra.mxu0 0.0
    %2115 = vmatprep.subr.mxu0 0.0
    %2116 = vmatpush1.msra.mxu0 0.0
    %2117 = vmatprep.subr.mxu0 0.0
    %2118 = vmatpush1.msra.mxu0 0.0
    %2119 = vmatprep.subr.mxu0 0.0
    %2120 = vmatpush1.msra.mxu0 0.0
    %2121 = vmatprep.subr.mxu0 0.0
    %2122 = vmatpush1.msra.mxu0 0.0
    %2123 = vmatprep.subr.mxu0 0.0
    %2124 = vmatpush1.msra.mxu0 0.0
    %2125 = vmatprep.subr.mxu0 0.0
    %2126 = vmatpush1.msra.mxu0 0.0
    %2127 = vmatprep.subr.mxu0 0.0
    %2128 = vmatpush1.msra.mxu0 0.0
    %2129 = vmatprep.subr.mxu0 0.0
    %2130 = vmatpush1.msra.mxu0 0.0
    %2131 = vmatprep.subr.mxu0 0.0
    %2132 = vmatpush1.msra.mxu0 0.0
    %2133 = vmatprep.subr.mxu0 0.0
    %2134 = vmatpush1.msra.mxu0 0.0
    %2135 = vmatprep.subr.mxu0 0.0
    %2136 = vmatpush1.msra.mxu0 0.0
    %2137 = vmatprep.subr.mxu0 0.0
    %2138 = vmatpush1.msra.mxu0 0.0
    %2139 = vmatprep.subr.mxu0 0.0
    %2140 = vmatpush1.msra.mxu0 0.0
    %2141 = vmatprep.subr.mxu0 0.0
    %2142 = vmatpush1.msra.mxu0 0.0
    %2143 = vmatprep.subr.mxu0 0.0
    %2144 = vmatpush1.msra.mxu0 0.0
    %2145 = vmatprep.subr.mxu0 0.0
    %2146 = vmatpush1.msra.mxu0 0.0
    %2147 = vmatprep.subr.mxu0 0.0
    %2148 = vmatpush1.msra.mxu0 0.0
    %2149 = vmatprep.subr.mxu0 0.0
    %2150 = vmatpush1.msra.mxu0 0.0
    %2151 = vmatprep.subr.mxu0 0.0
    %2152 = vmatpush1.msra.mxu0 0.0
    %2153 = vmatprep.subr.mxu0 0.0
    %2154 = vmatpush1.msra.mxu0 0.0
    %2155 = vmatprep.subr.mxu0 0.0
    %2156 = vmatpush1.msra.mxu0 0.0
    %2157 = vmatprep.subr.mxu0 0.0
    %2158 = vmatpush1.msra.mxu0 0.0
    %2159 = vmatprep.subr.mxu0 0.0
    %2160 = vmatpush1.msra.mxu0 0.0
    %2161 = vmatprep.subr.mxu0 0.0
    %2162 = vmatpush1.msra.mxu0 0.0
    %2163 = vmatprep.subr.mxu0 0.0
    %2164 = vmatpush1.msra.mxu0 0.0
    %2165 = vmatprep.mubr.f32.mxu0 0.0
    %2166 = vmatmul.mubr.f32.gmra.mrb[0].mxu0 %v2099
    %v2167 = vpop.f32.mrb[0].mxu0
    %v2168 = vadd.f32 0.0, %v2167
    %v2169 = vpop.f32.mrb[0].mxu0
    %2170 = vdwg.mxu0
    %2171 = vrot.lane.b32.xlu0 %v213, 64
    %v2172 = vpop.permute.xlu0 %2171
    %v2175 = vsel %vm1462, %v1622, 0
    %2177 = vmatprep.subr.mxu0 0.0
    %2178 = vmatpush1.msra.mxu0 %v2172
    %2179 = vmatprep.subr.mxu0 0.0
    %2180 = vmatpush1.msra.mxu0 0.0
    %2181 = vmatprep.subr.mxu0 0.0
    %2182 = vmatpush1.msra.mxu0 0.0
    %2183 = vmatprep.subr.mxu0 0.0
    %2184 = vmatpush1.msra.mxu0 0.0
    %2185 = vmatprep.subr.mxu0 0.0
    %2186 = vmatpush1.msra.mxu0 0.0
    %2187 = vmatprep.subr.mxu0 0.0
    %2188 = vmatpush1.msra.mxu0 0.0
    %2189 = vmatprep.subr.mxu0 0.0
    %2190 = vmatpush1.msra.mxu0 0.0
    %2191 = vmatprep.subr.mxu0 0.0
    %2192 = vmatpush1.msra.mxu0 0.0
    %2193 = vmatprep.subr.mxu0 0.0
    %2194 = vmatpush1.msra.mxu0 0.0
    %2195 = vmatprep.subr.mxu0 0.0
    %2196 = vmatpush1.msra.mxu0 0.0
    %2197 = vmatprep.subr.mxu0 0.0
    %2198 = vmatpush1.msra.mxu0 0.0
    %2199 = vmatprep.subr.mxu0 0.0
    %2200 = vmatpush1.msra.mxu0 0.0
    %2201 = vmatprep.subr.mxu0 0.0
    %2202 = vmatpush1.msra.mxu0 0.0
    %2203 = vmatprep.subr.mxu0 0.0
    %2204 = vmatpush1.msra.mxu0 0.0
    %2205 = vmatprep.subr.mxu0 0.0
    %2206 = vmatpush1.msra.mxu0 0.0
    %2207 = vmatprep.subr.mxu0 0.0
    %2208 = vmatpush1.msra.mxu0 0.0
    %2209 = vmatprep.subr.mxu0 0.0
    %2210 = vmatpush1.msra.mxu0 0.0
    %2211 = vmatprep.subr.mxu0 0.0
    %2212 = vmatpush1.msra.mxu0 0.0
    %2213 = vmatprep.subr.mxu0 0.0
    %2214 = vmatpush1.msra.mxu0 0.0
    %2215 = vmatprep.subr.mxu0 0.0
    %2216 = vmatpush1.msra.mxu0 0.0
    %2217 = vmatprep.subr.mxu0 0.0
    %2218 = vmatpush1.msra.mxu0 0.0
    %2219 = vmatprep.subr.mxu0 0.0
    %2220 = vmatpush1.msra.mxu0 0.0
    %2221 = vmatprep.subr.mxu0 0.0
    %2222 = vmatpush1.msra.mxu0 0.0
    %2223 = vmatprep.subr.mxu0 0.0
    %2224 = vmatpush1.msra.mxu0 0.0
    %2225 = vmatprep.subr.mxu0 0.0
    %2226 = vmatpush1.msra.mxu0 0.0
    %2227 = vmatprep.subr.mxu0 0.0
    %2228 = vmatpush1.msra.mxu0 0.0
    %2229 = vmatprep.subr.mxu0 0.0
    %2230 = vmatpush1.msra.mxu0 0.0
    %2231 = vmatprep.subr.mxu0 0.0
    %2232 = vmatpush1.msra.mxu0 0.0
    %2233 = vmatprep.subr.mxu0 0.0
    %2234 = vmatpush1.msra.mxu0 0.0
    %2235 = vmatprep.subr.mxu0 0.0
    %2236 = vmatpush1.msra.mxu0 0.0
    %2237 = vmatprep.subr.mxu0 0.0
    %2238 = vmatpush1.msra.mxu0 0.0
    %2239 = vmatprep.subr.mxu0 0.0
    %2240 = vmatpush1.msra.mxu0 0.0
    %2241 = vmatprep.mubr.f32.mxu0 0.0
    %2242 = vmatmul.mubr.f32.gmra.mrb[0].mxu0 %v2175
    %v2243 = vpop.f32.mrb[0].mxu0
    %v2244 = vadd.f32 0.0, %v2243
    %v2245 = vpop.f32.mrb[0].mxu0
    %2246 = vdwg.mxu0
    %2247 = vrot.lane.b32.xlu0 %v196, 64
    %v2248 = vpop.permute.xlu0 %2247
    %v2251 = vsel %vm1462, %v1624, 0
    %2253 = vmatprep.subr.mxu0 0.0
    %2254 = vmatpush1.msra.mxu0 %v2248
    %2255 = vmatprep.subr.mxu0 0.0
    %2256 = vmatpush1.msra.mxu0 0.0
    %2257 = vmatprep.subr.mxu0 0.0
    %2258 = vmatpush1.msra.mxu0 0.0
    %2259 = vmatprep.subr.mxu0 0.0
    %2260 = vmatpush1.msra.mxu0 0.0
    %2261 = vmatprep.subr.mxu0 0.0
    %2262 = vmatpush1.msra.mxu0 0.0
    %2263 = vmatprep.subr.mxu0 0.0
    %2264 = vmatpush1.msra.mxu0 0.0
    %2265 = vmatprep.subr.mxu0 0.0
    %2266 = vmatpush1.msra.mxu0 0.0
    %2267 = vmatprep.subr.mxu0 0.0
    %2268 = vmatpush1.msra.mxu0 0.0
    %2269 = vmatprep.subr.mxu0 0.0
    %2270 = vmatpush1.msra.mxu0 0.0
    %2271 = vmatprep.subr.mxu0 0.0
    %2272 = vmatpush1.msra.mxu0 0.0
    %2273 = vmatprep.subr.mxu0 0.0
    %2274 = vmatpush1.msra.mxu0 0.0
    %2275 = vmatprep.subr.mxu0 0.0
    %2276 = vmatpush1.msra.mxu0 0.0
    %2277 = vmatprep.subr.mxu0 0.0
    %2278 = vmatpush1.msra.mxu0 0.0
    %2279 = vmatprep.subr.mxu0 0.0
    %2280 = vmatpush1.msra.mxu0 0.0
    %2281 = vmatprep.subr.mxu0 0.0
    %2282 = vmatpush1.msra.mxu0 0.0
    %2283 = vmatprep.subr.mxu0 0.0
    %2284 = vmatpush1.msra.mxu0 0.0
    %2285 = vmatprep.subr.mxu0 0.0
    %2286 = vmatpush1.msra.mxu0 0.0
    %2287 = vmatprep.subr.mxu0 0.0
    %2288 = vmatpush1.msra.mxu0 0.0
    %2289 = vmatprep.subr.mxu0 0.0
    %2290 = vmatpush1.msra.mxu0 0.0
    %2291 = vmatprep.subr.mxu0 0.0
    %2292 = vmatpush1.msra.mxu0 0.0
    %2293 = vmatprep.subr.mxu0 0.0
    %2294 = vmatpush1.msra.mxu0 0.0
    %2295 = vmatprep.subr.mxu0 0.0
    %2296 = vmatpush1.msra.mxu0 0.0
    %2297 = vmatprep.subr.mxu0 0.0
    %2298 = vmatpush1.msra.mxu0 0.0
    %2299 = vmatprep.subr.mxu0 0.0
    %2300 = vmatpush1.msra.mxu0 0.0
    %2301 = vmatprep.subr.mxu0 0.0
    %2302 = vmatpush1.msra.mxu0 0.0
    %2303 = vmatprep.subr.mxu0 0.0
    %2304 = vmatpush1.msra.mxu0 0.0
    %2305 = vmatprep.subr.mxu0 0.0
    %2306 = vmatpush1.msra.mxu0 0.0
    %2307 = vmatprep.subr.mxu0 0.0
    %2308 = vmatpush1.msra.mxu0 0.0
    %2309 = vmatprep.subr.mxu0 0.0
    %2310 = vmatpush1.msra.mxu0 0.0
    %2311 = vmatprep.subr.mxu0 0.0
    %2312 = vmatpush1.msra.mxu0 0.0
    %2313 = vmatprep.subr.mxu0 0.0
    %2314 = vmatpush1.msra.mxu0 0.0
    %2315 = vmatprep.subr.mxu0 0.0
    %2316 = vmatpush1.msra.mxu0 0.0
    %2317 = vmatprep.mubr.f32.mxu0 0.0
    %2318 = vmatmul.mubr.f32.gmra.mrb[0].mxu0 %v2251
    %v2319 = vpop.f32.mrb[0].mxu0
    %v2320 = vadd.f32 0.0, %v2319
    %v2321 = vpop.f32.mrb[0].mxu0
    %2322 = vdwg.mxu0
    %2323 = vrot.lane.b32.xlu0 %v216, 64
    %v2324 = vpop.permute.xlu0 %2323
    %v2327 = vsel %vm1462, %v1626, 0
    %2329 = vmatprep.subr.mxu0 0.0
    %2330 = vmatpush1.msra.mxu0 %v2324
    %2331 = vmatprep.subr.mxu0 0.0
    %2332 = vmatpush1.msra.mxu0 0.0
    %2333 = vmatprep.subr.mxu0 0.0
    %2334 = vmatpush1.msra.mxu0 0.0
    %2335 = vmatprep.subr.mxu0 0.0
    %2336 = vmatpush1.msra.mxu0 0.0
    %2337 = vmatprep.subr.mxu0 0.0
    %2338 = vmatpush1.msra.mxu0 0.0
    %2339 = vmatprep.subr.mxu0 0.0
    %2340 = vmatpush1.msra.mxu0 0.0
    %2341 = vmatprep.subr.mxu0 0.0
    %2342 = vmatpush1.msra.mxu0 0.0
    %2343 = vmatprep.subr.mxu0 0.0
    %2344 = vmatpush1.msra.mxu0 0.0
    %2345 = vmatprep.subr.mxu0 0.0
    %2346 = vmatpush1.msra.mxu0 0.0
    %2347 = vmatprep.subr.mxu0 0.0
    %2348 = vmatpush1.msra.mxu0 0.0
    %2349 = vmatprep.subr.mxu0 0.0
    %2350 = vmatpush1.msra.mxu0 0.0
    %2351 = vmatprep.subr.mxu0 0.0
    %2352 = vmatpush1.msra.mxu0 0.0
    %2353 = vmatprep.subr.mxu0 0.0
    %2354 = vmatpush1.msra.mxu0 0.0
    %2355 = vmatprep.subr.mxu0 0.0
    %2356 = vmatpush1.msra.mxu0 0.0
    %2357 = vmatprep.subr.mxu0 0.0
    %2358 = vmatpush1.msra.mxu0 0.0
    %2359 = vmatprep.subr.mxu0 0.0
    %2360 = vmatpush1.msra.mxu0 0.0
    %2361 = vmatprep.subr.mxu0 0.0
    %2362 = vmatpush1.msra.mxu0 0.0
    %2363 = vmatprep.subr.mxu0 0.0
    %2364 = vmatpush1.msra.mxu0 0.0
    %2365 = vmatprep.subr.mxu0 0.0
    %2366 = vmatpush1.msra.mxu0 0.0
    %2367 = vmatprep.subr.mxu0 0.0
    %2368 = vmatpush1.msra.mxu0 0.0
    %2369 = vmatprep.subr.mxu0 0.0
    %2370 = vmatpush1.msra.mxu0 0.0
    %2371 = vmatprep.subr.mxu0 0.0
    %2372 = vmatpush1.msra.mxu0 0.0
    %2373 = vmatprep.subr.mxu0 0.0
    %2374 = vmatpush1.msra.mxu0 0.0
    %2375 = vmatprep.subr.mxu0 0.0
    %2376 = vmatpush1.msra.mxu0 0.0
    %2377 = vmatprep.subr.mxu0 0.0
    %2378 = vmatpush1.msra.mxu0 0.0
    %2379 = vmatprep.subr.mxu0 0.0
    %2380 = vmatpush1.msra.mxu0 0.0
    %2381 = vmatprep.subr.mxu0 0.0
    %2382 = vmatpush1.msra.mxu0 0.0
    %2383 = vmatprep.subr.mxu0 0.0
    %2384 = vmatpush1.msra.mxu0 0.0
    %2385 = vmatprep.subr.mxu0 0.0
    %2386 = vmatpush1.msra.mxu0 0.0
    %2387 = vmatprep.subr.mxu0 0.0
    %2388 = vmatpush1.msra.mxu0 0.0
    %2389 = vmatprep.subr.mxu0 0.0
    %2390 = vmatpush1.msra.mxu0 0.0
    %2391 = vmatprep.subr.mxu0 0.0
    %2392 = vmatpush1.msra.mxu0 0.0
    %2393 = vmatprep.mubr.f32.mxu0 0.0
    %2394 = vmatmul.mubr.f32.gmra.mrb[0].mxu0 %v2327
    %v2395 = vpop.f32.mrb[0].mxu0
    %v2396 = vadd.f32 0.0, %v2395
    %v2397 = vpop.f32.mrb[0].mxu0
    %2398 = vdwg.mxu0
    %2399 = vrot.lane.b32.xlu0 %v218, 64
    %v2400 = vpop.permute.xlu0 %2399
    %v2403 = vsel %vm1462, %v1628, 0
    %2405 = vmatprep.subr.mxu0 0.0
    %2406 = vmatpush1.msra.mxu0 %v2400
    %2407 = vmatprep.subr.mxu0 0.0
    %2408 = vmatpush1.msra.mxu0 0.0
    %2409 = vmatprep.subr.mxu0 0.0
    %2410 = vmatpush1.msra.mxu0 0.0
    %2411 = vmatprep.subr.mxu0 0.0
    %2412 = vmatpush1.msra.mxu0 0.0
    %2413 = vmatprep.subr.mxu0 0.0
    %2414 = vmatpush1.msra.mxu0 0.0
    %2415 = vmatprep.subr.mxu0 0.0
    %2416 = vmatpush1.msra.mxu0 0.0
    %2417 = vmatprep.subr.mxu0 0.0
    %2418 = vmatpush1.msra.mxu0 0.0
    %2419 = vmatprep.subr.mxu0 0.0
    %2420 = vmatpush1.msra.mxu0 0.0
    %2421 = vmatprep.subr.mxu0 0.0
    %2422 = vmatpush1.msra.mxu0 0.0
    %2423 = vmatprep.subr.mxu0 0.0
    %2424 = vmatpush1.msra.mxu0 0.0
    %2425 = vmatprep.subr.mxu0 0.0
    %2426 = vmatpush1.msra.mxu0 0.0
    %2427 = vmatprep.subr.mxu0 0.0
    %2428 = vmatpush1.msra.mxu0 0.0
    %2429 = vmatprep.subr.mxu0 0.0
    %2430 = vmatpush1.msra.mxu0 0.0
    %2431 = vmatprep.subr.mxu0 0.0
    %2432 = vmatpush1.msra.mxu0 0.0
    %2433 = vmatprep.subr.mxu0 0.0
    %2434 = vmatpush1.msra.mxu0 0.0
    %2435 = vmatprep.subr.mxu0 0.0
    %2436 = vmatpush1.msra.mxu0 0.0
    %2437 = vmatprep.subr.mxu0 0.0
    %2438 = vmatpush1.msra.mxu0 0.0
    %2439 = vmatprep.subr.mxu0 0.0
    %2440 = vmatpush1.msra.mxu0 0.0
    %2441 = vmatprep.subr.mxu0 0.0
    %2442 = vmatpush1.msra.mxu0 0.0
    %2443 = vmatprep.subr.mxu0 0.0
    %2444 = vmatpush1.msra.mxu0 0.0
    %2445 = vmatprep.subr.mxu0 0.0
    %2446 = vmatpush1.msra.mxu0 0.0
    %2447 = vmatprep.subr.mxu0 0.0
    %2448 = vmatpush1.msra.mxu0 0.0
    %2449 = vmatprep.subr.mxu0 0.0
    %2450 = vmatpush1.msra.mxu0 0.0
    %2451 = vmatprep.subr.mxu0 0.0
    %2452 = vmatpush1.msra.mxu0 0.0
    %2453 = vmatprep.subr.mxu0 0.0
    %2454 = vmatpush1.msra.mxu0 0.0
    %2455 = vmatprep.subr.mxu0 0.0
    %2456 = vmatpush1.msra.mxu0 0.0
    %2457 = vmatprep.subr.mxu0 0.0
    %2458 = vmatpush1.msra.mxu0 0.0
    %2459 = vmatprep.subr.mxu0 0.0
    %2460 = vmatpush1.msra.mxu0 0.0
    %2461 = vmatprep.subr.mxu0 0.0
    %2462 = vmatpush1.msra.mxu0 0.0
    %2463 = vmatprep.subr.mxu0 0.0
    %2464 = vmatpush1.msra.mxu0 0.0
    %2465 = vmatprep.subr.mxu0 0.0
    %2466 = vmatpush1.msra.mxu0 0.0
    %2467 = vmatprep.subr.mxu0 0.0
    %2468 = vmatpush1.msra.mxu0 0.0
    %2469 = vmatprep.mubr.f32.mxu0 0.0
    %2470 = vmatmul.mubr.f32.gmra.mrb[0].mxu0 %v2403
    %v2471 = vpop.f32.mrb[0].mxu0
    %v2472 = vadd.f32 0.0, %v2471
    %v2473 = vpop.f32.mrb[0].mxu0
    %2474 = vdwg.mxu0
    %2475 = vrot.lane.b32.xlu0 %v220, 64
    %v2476 = vpop.permute.xlu0 %2475
    %v2479 = vsel %vm1462, %v1630, 0
    %2481 = vmatprep.subr.mxu0 0.0
    %2482 = vmatpush1.msra.mxu0 %v2476
    %2483 = vmatprep.subr.mxu0 0.0
    %2484 = vmatpush1.msra.mxu0 0.0
    %2485 = vmatprep.subr.mxu0 0.0
    %2486 = vmatpush1.msra.mxu0 0.0
    %2487 = vmatprep.subr.mxu0 0.0
    %2488 = vmatpush1.msra.mxu0 0.0
    %2489 = vmatprep.subr.mxu0 0.0
    %2490 = vmatpush1.msra.mxu0 0.0
    %2491 = vmatprep.subr.mxu0 0.0
    %2492 = vmatpush1.msra.mxu0 0.0
    %2493 = vmatprep.subr.mxu0 0.0
    %2494 = vmatpush1.msra.mxu0 0.0
    %2495 = vmatprep.subr.mxu0 0.0
    %2496 = vmatpush1.msra.mxu0 0.0
    %2497 = vmatprep.subr.mxu0 0.0
    %2498 = vmatpush1.msra.mxu0 0.0
    %2499 = vmatprep.subr.mxu0 0.0
    %2500 = vmatpush1.msra.mxu0 0.0
    %2501 = vmatprep.subr.mxu0 0.0
    %2502 = vmatpush1.msra.mxu0 0.0
    %2503 = vmatprep.subr.mxu0 0.0
    %2504 = vmatpush1.msra.mxu0 0.0
    %2505 = vmatprep.subr.mxu0 0.0
    %2506 = vmatpush1.msra.mxu0 0.0
    %2507 = vmatprep.subr.mxu0 0.0
    %2508 = vmatpush1.msra.mxu0 0.0
    %2509 = vmatprep.subr.mxu0 0.0
    %2510 = vmatpush1.msra.mxu0 0.0
    %2511 = vmatprep.subr.mxu0 0.0
    %2512 = vmatpush1.msra.mxu0 0.0
    %2513 = vmatprep.subr.mxu0 0.0
    %2514 = vmatpush1.msra.mxu0 0.0
    %2515 = vmatprep.subr.mxu0 0.0
    %2516 = vmatpush1.msra.mxu0 0.0
    %2517 = vmatprep.subr.mxu0 0.0
    %2518 = vmatpush1.msra.mxu0 0.0
    %2519 = vmatprep.subr.mxu0 0.0
    %2520 = vmatpush1.msra.mxu0 0.0
    %2521 = vmatprep.subr.mxu0 0.0
    %2522 = vmatpush1.msra.mxu0 0.0
    %2523 = vmatprep.subr.mxu0 0.0
    %2524 = vmatpush1.msra.mxu0 0.0
    %2525 = vmatprep.subr.mxu0 0.0
    %2526 = vmatpush1.msra.mxu0 0.0
    %2527 = vmatprep.subr.mxu0 0.0
    %2528 = vmatpush1.msra.mxu0 0.0
    %2529 = vmatprep.subr.mxu0 0.0
    %2530 = vmatpush1.msra.mxu0 0.0
    %2531 = vmatprep.subr.mxu0 0.0
    %2532 = vmatpush1.msra.mxu0 0.0
    %2533 = vmatprep.subr.mxu0 0.0
    %2534 = vmatpush1.msra.mxu0 0.0
    %2535 = vmatprep.subr.mxu0 0.0
    %2536 = vmatpush1.msra.mxu0 0.0
    %2537 = vmatprep.subr.mxu0 0.0
    %2538 = vmatpush1.msra.mxu0 0.0
    %2539 = vmatprep.subr.mxu0 0.0
    %2540 = vmatpush1.msra.mxu0 0.0
    %2541 = vmatprep.subr.mxu0 0.0
    %2542 = vmatpush1.msra.mxu0 0.0
    %2543 = vmatprep.subr.mxu0 0.0
    %2544 = vmatpush1.msra.mxu0 0.0
    %2545 = vmatprep.mubr.f32.mxu0 0.0
    %2546 = vmatmul.mubr.f32.gmra.mrb[0].mxu0 %v2479
    %v2547 = vpop.f32.mrb[0].mxu0
    %v2548 = vadd.f32 0.0, %v2547
    %v2549 = vpop.f32.mrb[0].mxu0
    %2550 = vdwg.mxu0
    %2551 = vrot.lane.b32.xlu0 %v222, 64
    %v2552 = vpop.permute.xlu0 %2551
    %v2555 = vsel %vm1462, %v1632, 0
    %2557 = vmatprep.subr.mxu0 0.0
    %2558 = vmatpush1.msra.mxu0 %v2552
    %2559 = vmatprep.subr.mxu0 0.0
    %2560 = vmatpush1.msra.mxu0 0.0
    %2561 = vmatprep.subr.mxu0 0.0
    %2562 = vmatpush1.msra.mxu0 0.0
    %2563 = vmatprep.subr.mxu0 0.0
    %2564 = vmatpush1.msra.mxu0 0.0
    %2565 = vmatprep.subr.mxu0 0.0
    %2566 = vmatpush1.msra.mxu0 0.0
    %2567 = vmatprep.subr.mxu0 0.0
    %2568 = vmatpush1.msra.mxu0 0.0
    %2569 = vmatprep.subr.mxu0 0.0
    %2570 = vmatpush1.msra.mxu0 0.0
    %2571 = vmatprep.subr.mxu0 0.0
    %2572 = vmatpush1.msra.mxu0 0.0
    %2573 = vmatprep.subr.mxu0 0.0
    %2574 = vmatpush1.msra.mxu0 0.0
    %2575 = vmatprep.subr.mxu0 0.0
    %2576 = vmatpush1.msra.mxu0 0.0
    %2577 = vmatprep.subr.mxu0 0.0
    %2578 = vmatpush1.msra.mxu0 0.0
    %2579 = vmatprep.subr.mxu0 0.0
    %2580 = vmatpush1.msra.mxu0 0.0
    %2581 = vmatprep.subr.mxu0 0.0
    %2582 = vmatpush1.msra.mxu0 0.0
    %2583 = vmatprep.subr.mxu0 0.0
    %2584 = vmatpush1.msra.mxu0 0.0
    %2585 = vmatprep.subr.mxu0 0.0
    %2586 = vmatpush1.msra.mxu0 0.0
    %2587 = vmatprep.subr.mxu0 0.0
    %2588 = vmatpush1.msra.mxu0 0.0
    %2589 = vmatprep.subr.mxu0 0.0
    %2590 = vmatpush1.msra.mxu0 0.0
    %2591 = vmatprep.subr.mxu0 0.0
    %2592 = vmatpush1.msra.mxu0 0.0
    %2593 = vmatprep.subr.mxu0 0.0
    %2594 = vmatpush1.msra.mxu0 0.0
    %2595 = vmatprep.subr.mxu0 0.0
    %2596 = vmatpush1.msra.mxu0 0.0
    %2597 = vmatprep.subr.mxu0 0.0
    %2598 = vmatpush1.msra.mxu0 0.0
    %2599 = vmatprep.subr.mxu0 0.0
    %2600 = vmatpush1.msra.mxu0 0.0
    %2601 = vmatprep.subr.mxu0 0.0
    %2602 = vmatpush1.msra.mxu0 0.0
    %2603 = vmatprep.subr.mxu0 0.0
    %2604 = vmatpush1.msra.mxu0 0.0
    %2605 = vmatprep.subr.mxu0 0.0
    %2606 = vmatpush1.msra.mxu0 0.0
    %2607 = vmatprep.subr.mxu0 0.0
    %2608 = vmatpush1.msra.mxu0 0.0
    %2609 = vmatprep.subr.mxu0 0.0
    %2610 = vmatpush1.msra.mxu0 0.0
    %2611 = vmatprep.subr.mxu0 0.0
    %2612 = vmatpush1.msra.mxu0 0.0
    %2613 = vmatprep.subr.mxu0 0.0
    %2614 = vmatpush1.msra.mxu0 0.0
    %2615 = vmatprep.subr.mxu0 0.0
    %2616 = vmatpush1.msra.mxu0 0.0
    %2617 = vmatprep.subr.mxu0 0.0
    %2618 = vmatpush1.msra.mxu0 0.0
    %2619 = vmatprep.subr.mxu0 0.0
    %2620 = vmatpush1.msra.mxu0 0.0
    %2621 = vmatprep.mubr.f32.mxu0 0.0
    %2622 = vmatmul.mubr.f32.gmra.mrb[0].mxu0 %v2555
    %v2623 = vpop.f32.mrb[0].mxu0
    %v2624 = vadd.f32 0.0, %v2623
    %v2625 = vpop.f32.mrb[0].mxu0
    %2626 = vdwg.mxu0
    %2627 = vrot.lane.b32.xlu0 %v224, 64
    %v2628 = vpop.permute.xlu0 %2627
    %v2631 = vsel %vm1462, %v1634, 0
    %2633 = vmatprep.subr.mxu0 0.0
    %2634 = vmatpush1.msra.mxu0 %v2628
    %2635 = vmatprep.subr.mxu0 0.0
    %2636 = vmatpush1.msra.mxu0 0.0
    %2637 = vmatprep.subr.mxu0 0.0
    %2638 = vmatpush1.msra.mxu0 0.0
    %2639 = vmatprep.subr.mxu0 0.0
    %2640 = vmatpush1.msra.mxu0 0.0
    %2641 = vmatprep.subr.mxu0 0.0
    %2642 = vmatpush1.msra.mxu0 0.0
    %2643 = vmatprep.subr.mxu0 0.0
    %2644 = vmatpush1.msra.mxu0 0.0
    %2645 = vmatprep.subr.mxu0 0.0
    %2646 = vmatpush1.msra.mxu0 0.0
    %2647 = vmatprep.subr.mxu0 0.0
    %2648 = vmatpush1.msra.mxu0 0.0
    %2649 = vmatprep.subr.mxu0 0.0
    %2650 = vmatpush1.msra.mxu0 0.0
    %2651 = vmatprep.subr.mxu0 0.0
    %2652 = vmatpush1.msra.mxu0 0.0
    %2653 = vmatprep.subr.mxu0 0.0
    %2654 = vmatpush1.msra.mxu0 0.0
    %2655 = vmatprep.subr.mxu0 0.0
    %2656 = vmatpush1.msra.mxu0 0.0
    %2657 = vmatprep.subr.mxu0 0.0
    %2658 = vmatpush1.msra.mxu0 0.0
    %2659 = vmatprep.subr.mxu0 0.0
    %2660 = vmatpush1.msra.mxu0 0.0
    %2661 = vmatprep.subr.mxu0 0.0
    %2662 = vmatpush1.msra.mxu0 0.0
    %2663 = vmatprep.subr.mxu0 0.0
    %2664 = vmatpush1.msra.mxu0 0.0
    %2665 = vmatprep.subr.mxu0 0.0
    %2666 = vmatpush1.msra.mxu0 0.0
    %2667 = vmatprep.subr.mxu0 0.0
    %2668 = vmatpush1.msra.mxu0 0.0
    %2669 = vmatprep.subr.mxu0 0.0
    %2670 = vmatpush1.msra.mxu0 0.0
    %2671 = vmatprep.subr.mxu0 0.0
    %2672 = vmatpush1.msra.mxu0 0.0
    %2673 = vmatprep.subr.mxu0 0.0
    %2674 = vmatpush1.msra.mxu0 0.0
    %2675 = vmatprep.subr.mxu0 0.0
    %2676 = vmatpush1.msra.mxu0 0.0
    %2677 = vmatprep.subr.mxu0 0.0
    %2678 = vmatpush1.msra.mxu0 0.0
    %2679 = vmatprep.subr.mxu0 0.0
    %2680 = vmatpush1.msra.mxu0 0.0
    %2681 = vmatprep.subr.mxu0 0.0
    %2682 = vmatpush1.msra.mxu0 0.0
    %2683 = vmatprep.subr.mxu0 0.0
    %2684 = vmatpush1.msra.mxu0 0.0
    %2685 = vmatprep.subr.mxu0 0.0
    %2686 = vmatpush1.msra.mxu0 0.0
    %2687 = vmatprep.subr.mxu0 0.0
    %2688 = vmatpush1.msra.mxu0 0.0
    %2689 = vmatprep.subr.mxu0 0.0
    %2690 = vmatpush1.msra.mxu0 0.0
    %2691 = vmatprep.subr.mxu0 0.0
    %2692 = vmatpush1.msra.mxu0 0.0
    %2693 = vmatprep.subr.mxu0 0.0
    %2694 = vmatpush1.msra.mxu0 0.0
    %2695 = vmatprep.subr.mxu0 0.0
    %2696 = vmatpush1.msra.mxu0 0.0
    %2697 = vmatprep.mubr.f32.mxu0 0.0
    %2698 = vmatmul.mubr.f32.gmra.mrb[0].mxu0 %v2631
    %v2699 = vpop.f32.mrb[0].mxu0
    %v2700 = vadd.f32 0.0, %v2699
    %v2701 = vpop.f32.mrb[0].mxu0
    %2702 = vdwg.mxu0
    %2703 = vrot.lane.b32.xlu0 %v226, 64
    %v2704 = vpop.permute.xlu0 %2703
    %v2707 = vsel %vm1462, %v1636, 0
    %2709 = vmatprep.subr.mxu0 0.0
    %2710 = vmatpush1.msra.mxu0 %v2704
    %2711 = vmatprep.subr.mxu0 0.0
    %2712 = vmatpush1.msra.mxu0 0.0
    %2713 = vmatprep.subr.mxu0 0.0
    %2714 = vmatpush1.msra.mxu0 0.0
    %2715 = vmatprep.subr.mxu0 0.0
    %2716 = vmatpush1.msra.mxu0 0.0
    %2717 = vmatprep.subr.mxu0 0.0
    %2718 = vmatpush1.msra.mxu0 0.0
    %2719 = vmatprep.subr.mxu0 0.0
    %2720 = vmatpush1.msra.mxu0 0.0
    %2721 = vmatprep.subr.mxu0 0.0
    %2722 = vmatpush1.msra.mxu0 0.0
    %2723 = vmatprep.subr.mxu0 0.0
    %2724 = vmatpush1.msra.mxu0 0.0
    %2725 = vmatprep.subr.mxu0 0.0
    %2726 = vmatpush1.msra.mxu0 0.0
    %2727 = vmatprep.subr.mxu0 0.0
    %2728 = vmatpush1.msra.mxu0 0.0
    %2729 = vmatprep.subr.mxu0 0.0
    %2730 = vmatpush1.msra.mxu0 0.0
    %2731 = vmatprep.subr.mxu0 0.0
    %2732 = vmatpush1.msra.mxu0 0.0
    %2733 = vmatprep.subr.mxu0 0.0
    %2734 = vmatpush1.msra.mxu0 0.0
    %2735 = vmatprep.subr.mxu0 0.0
    %2736 = vmatpush1.msra.mxu0 0.0
    %2737 = vmatprep.subr.mxu0 0.0
    %2738 = vmatpush1.msra.mxu0 0.0
    %2739 = vmatprep.subr.mxu0 0.0
    %2740 = vmatpush1.msra.mxu0 0.0
    %2741 = vmatprep.subr.mxu0 0.0
    %2742 = vmatpush1.msra.mxu0 0.0
    %2743 = vmatprep.subr.mxu0 0.0
    %2744 = vmatpush1.msra.mxu0 0.0
    %2745 = vmatprep.subr.mxu0 0.0
    %2746 = vmatpush1.msra.mxu0 0.0
    %2747 = vmatprep.subr.mxu0 0.0
    %2748 = vmatpush1.msra.mxu0 0.0
    %2749 = vmatprep.subr.mxu0 0.0
    %2750 = vmatpush1.msra.mxu0 0.0
    %2751 = vmatprep.subr.mxu0 0.0
    %2752 = vmatpush1.msra.mxu0 0.0
    %2753 = vmatprep.subr.mxu0 0.0
    %2754 = vmatpush1.msra.mxu0 0.0
    %2755 = vmatprep.subr.mxu0 0.0
    %2756 = vmatpush1.msra.mxu0 0.0
    %2757 = vmatprep.subr.mxu0 0.0
    %2758 = vmatpush1.msra.mxu0 0.0
    %2759 = vmatprep.subr.mxu0 0.0
    %2760 = vmatpush1.msra.mxu0 0.0
    %2761 = vmatprep.subr.mxu0 0.0
    %2762 = vmatpush1.msra.mxu0 0.0
    %2763 = vmatprep.subr.mxu0 0.0
    %2764 = vmatpush1.msra.mxu0 0.0
    %2765 = vmatprep.subr.mxu0 0.0
    %2766 = vmatpush1.msra.mxu0 0.0
    %2767 = vmatprep.subr.mxu0 0.0
    %2768 = vmatpush1.msra.mxu0 0.0
    %2769 = vmatprep.subr.mxu0 0.0
    %2770 = vmatpush1.msra.mxu0 0.0
    %2771 = vmatprep.subr.mxu0 0.0
    %2772 = vmatpush1.msra.mxu0 0.0
    %2773 = vmatprep.mubr.f32.mxu0 0.0
    %2774 = vmatmul.mubr.f32.gmra.mrb[0].mxu0 %v2707
    %v2775 = vpop.f32.mrb[0].mxu0
    %v2776 = vadd.f32 0.0, %v2775
    %v2777 = vpop.f32.mrb[0].mxu0
    %2778 = vdwg.mxu0
    %2779 = vrot.lane.b32.xlu0 %v228, 64
    %v2780 = vpop.permute.xlu0 %2779
    %v2783 = vsel %vm1462, %v1638, 0
    %2785 = vmatprep.subr.mxu0 0.0
    %2786 = vmatpush1.msra.mxu0 %v2780
    %2787 = vmatprep.subr.mxu0 0.0
    %2788 = vmatpush1.msra.mxu0 0.0
    %2789 = vmatprep.subr.mxu0 0.0
    %2790 = vmatpush1.msra.mxu0 0.0
    %2791 = vmatprep.subr.mxu0 0.0
    %2792 = vmatpush1.msra.mxu0 0.0
    %2793 = vmatprep.subr.mxu0 0.0
    %2794 = vmatpush1.msra.mxu0 0.0
    %2795 = vmatprep.subr.mxu0 0.0
    %2796 = vmatpush1.msra.mxu0 0.0
    %2797 = vmatprep.subr.mxu0 0.0
    %2798 = vmatpush1.msra.mxu0 0.0
    %2799 = vmatprep.subr.mxu0 0.0
    %2800 = vmatpush1.msra.mxu0 0.0
    %2801 = vmatprep.subr.mxu0 0.0
    %2802 = vmatpush1.msra.mxu0 0.0
    %2803 = vmatprep.subr.mxu0 0.0
    %2804 = vmatpush1.msra.mxu0 0.0
    %2805 = vmatprep.subr.mxu0 0.0
    %2806 = vmatpush1.msra.mxu0 0.0
    %2807 = vmatprep.subr.mxu0 0.0
    %2808 = vmatpush1.msra.mxu0 0.0
    %2809 = vmatprep.subr.mxu0 0.0
    %2810 = vmatpush1.msra.mxu0 0.0
    %2811 = vmatprep.subr.mxu0 0.0
    %2812 = vmatpush1.msra.mxu0 0.0
    %2813 = vmatprep.subr.mxu0 0.0
    %2814 = vmatpush1.msra.mxu0 0.0
    %2815 = vmatprep.subr.mxu0 0.0
    %2816 = vmatpush1.msra.mxu0 0.0
    %2817 = vmatprep.subr.mxu0 0.0
    %2818 = vmatpush1.msra.mxu0 0.0
    %2819 = vmatprep.subr.mxu0 0.0
    %2820 = vmatpush1.msra.mxu0 0.0
    %2821 = vmatprep.subr.mxu0 0.0
    %2822 = vmatpush1.msra.mxu0 0.0
    %2823 = vmatprep.subr.mxu0 0.0
    %2824 = vmatpush1.msra.mxu0 0.0
    %2825 = vmatprep.subr.mxu0 0.0
    %2826 = vmatpush1.msra.mxu0 0.0
    %2827 = vmatprep.subr.mxu0 0.0
    %2828 = vmatpush1.msra.mxu0 0.0
    %2829 = vmatprep.subr.mxu0 0.0
    %2830 = vmatpush1.msra.mxu0 0.0
    %2831 = vmatprep.subr.mxu0 0.0
    %2832 = vmatpush1.msra.mxu0 0.0
    %2833 = vmatprep.subr.mxu0 0.0
    %2834 = vmatpush1.msra.mxu0 0.0
    %2835 = vmatprep.subr.mxu0 0.0
    %2836 = vmatpush1.msra.mxu0 0.0
    %2837 = vmatprep.subr.mxu0 0.0
    %2838 = vmatpush1.msra.mxu0 0.0
    %2839 = vmatprep.subr.mxu0 0.0
    %2840 = vmatpush1.msra.mxu0 0.0
    %2841 = vmatprep.subr.mxu0 0.0
    %2842 = vmatpush1.msra.mxu0 0.0
    %2843 = vmatprep.subr.mxu0 0.0
    %2844 = vmatpush1.msra.mxu0 0.0
    %2845 = vmatprep.subr.mxu0 0.0
    %2846 = vmatpush1.msra.mxu0 0.0
    %2847 = vmatprep.subr.mxu0 0.0
    %2848 = vmatpush1.msra.mxu0 0.0
    %2849 = vmatprep.mubr.f32.mxu0 0.0
    %2850 = vmatmul.mubr.f32.gmra.mrb[0].mxu0 %v2783
    %v2851 = vpop.f32.mrb[0].mxu0
    %v2852 = vadd.f32 0.0, %v2851
    %v2853 = vpop.f32.mrb[0].mxu0
    %2854 = vdwg.mxu0
    %2856 = vrot.lane.b32.xlu0 %v1788, 4
    %v2857 = vpop.permute.xlu0 %2856
    %2860 = vrot.lane.b32.xlu0 %v1864, 8
    %v2861 = vpop.permute.xlu0 %2860
    %2864 = vrot.lane.b32.xlu0 %v1940, 12
    %v2865 = vpop.permute.xlu0 %2864
    %2868 = vrot.lane.b32.xlu0 %v2016, 16
    %v2869 = vpop.permute.xlu0 %2868
    %2872 = vrot.lane.b32.xlu0 %v2092, 20
    %v2873 = vpop.permute.xlu0 %2872
    %2876 = vrot.lane.b32.xlu0 %v2168, 24
    %v2877 = vpop.permute.xlu0 %2876
    %2880 = vrot.lane.b32.xlu0 %v2244, 28
    %v2881 = vpop.permute.xlu0 %2880
    %v2883 = vsel %vm231, %v1712, %v2857
    %v2884 = vsel %vm1462, %v2883, %v2861
    %vm2885 = vcmask 97280
    %v2886 = vsel %vm2885, %v2884, %v2865
    %vm2887 = vcmask 130048
    %v2888 = vsel %vm2887, %v2886, %v2869
    %vm2889 = vcmask 162816
    %v2890 = vsel %vm2889, %v2888, %v2873
    %vm2891 = vcmask 195584
    %v2892 = vsel %vm2891, %v2890, %v2877
    %vm2893 = vcmask 228352
    %v2894 = vsel %vm2893, %v2892, %v2881
    %2896 = vrot.lane.b32.xlu0 %v2396, 4
    %v2897 = vpop.permute.xlu0 %2896
    %2900 = vrot.lane.b32.xlu0 %v2472, 8
    %v2901 = vpop.permute.xlu0 %2900
    %2904 = vrot.lane.b32.xlu0 %v2548, 12
    %v2905 = vpop.permute.xlu0 %2904
    %2908 = vrot.lane.b32.xlu0 %v2624, 16
    %v2909 = vpop.permute.xlu0 %2908
    %2912 = vrot.lane.b32.xlu0 %v2700, 20
    %v2913 = vpop.permute.xlu0 %2912
    %2916 = vrot.lane.b32.xlu0 %v2776, 24
    %v2917 = vpop.permute.xlu0 %2916
    %2920 = vrot.lane.b32.xlu0 %v2852, 28
    %v2921 = vpop.permute.xlu0 %2920
    %v2923 = vsel %vm231, %v2320, %v2897
    %v2924 = vsel %vm1462, %v2923, %v2901
    %v2925 = vsel %vm2885, %v2924, %v2905
    %v2926 = vsel %vm2887, %v2925, %v2909
    %v2927 = vsel %vm2889, %v2926, %v2913
    %v2928 = vsel %vm2891, %v2927, %v2917
    %v2929 = vsel %vm2893, %v2928, %v2921
    %v2931 = vlaneseq
    %v2932 = vshrl.u32 %v2931, 7
    %v2933 = vsub.s32 0, %v2932
    %v2934 = vrot.slane %v75, %v2933
    %v2937 = vsel %vm119, %v2894, 0
    %v2940 = vsel %vm119, %v2929, 0
    %2942 = vmatprep.subr.mxu0 0.0
    %2943 = vmatpush1.msra.mxu0 %v71
    %2944 = vmatprep.subr.mxu0 0.0
    %2945 = vmatpush1.msra.mxu0 %v72
    %2946 = vmatprep.subr.mxu0 0.0
    %2947 = vmatpush1.msra.mxu0 %v73
    %2948 = vmatprep.subr.mxu0 0.0
    %2949 = vmatpush1.msra.mxu0 %v74
    %2950 = vmatprep.subr.mxu0 0.0
    %2951 = vmatpush1.msra.mxu0 0.0
    %2952 = vmatprep.subr.mxu0 0.0
    %2953 = vmatpush1.msra.mxu0 0.0
    %2954 = vmatprep.subr.mxu0 0.0
    %2955 = vmatpush1.msra.mxu0 0.0
    %2956 = vmatprep.subr.mxu0 0.0
    %2957 = vmatpush1.msra.mxu0 0.0
    %2958 = vmatprep.subr.mxu0 0.0
    %2959 = vmatpush1.msra.mxu0 0.0
    %2960 = vmatprep.subr.mxu0 0.0
    %2961 = vmatpush1.msra.mxu0 0.0
    %2962 = vmatprep.subr.mxu0 0.0
    %2963 = vmatpush1.msra.mxu0 0.0
    %2964 = vmatprep.subr.mxu0 0.0
    %2965 = vmatpush1.msra.mxu0 0.0
    %2966 = vmatprep.subr.mxu0 0.0
    %2967 = vmatpush1.msra.mxu0 0.0
    %2968 = vmatprep.subr.mxu0 0.0
    %2969 = vmatpush1.msra.mxu0 0.0
    %2970 = vmatprep.subr.mxu0 0.0
    %2971 = vmatpush1.msra.mxu0 0.0
    %2972 = vmatprep.subr.mxu0 0.0
    %2973 = vmatpush1.msra.mxu0 0.0
    %2974 = vmatprep.subr.mxu0 0.0
    %2975 = vmatpush1.msra.mxu0 0.0
    %2976 = vmatprep.subr.mxu0 0.0
    %2977 = vmatpush1.msra.mxu0 0.0
    %2978 = vmatprep.subr.mxu0 0.0
    %2979 = vmatpush1.msra.mxu0 0.0
    %2980 = vmatprep.subr.mxu0 0.0
    %2981 = vmatpush1.msra.mxu0 0.0
    %2982 = vmatprep.subr.mxu0 0.0
    %2983 = vmatpush1.msra.mxu0 0.0
    %2984 = vmatprep.subr.mxu0 0.0
    %2985 = vmatpush1.msra.mxu0 0.0
    %2986 = vmatprep.subr.mxu0 0.0
    %2987 = vmatpush1.msra.mxu0 0.0
    %2988 = vmatprep.subr.mxu0 0.0
    %2989 = vmatpush1.msra.mxu0 0.0
    %2990 = vmatprep.subr.mxu0 0.0
    %2991 = vmatpush1.msra.mxu0 0.0
    %2992 = vmatprep.subr.mxu0 0.0
    %2993 = vmatpush1.msra.mxu0 0.0
    %2994 = vmatprep.subr.mxu0 0.0
    %2995 = vmatpush1.msra.mxu0 0.0
    %2996 = vmatprep.subr.mxu0 0.0
    %2997 = vmatpush1.msra.mxu0 0.0
    %2998 = vmatprep.subr.mxu0 0.0
    %2999 = vmatpush1.msra.mxu0 0.0
    %3000 = vmatprep.subr.mxu0 0.0
    %3001 = vmatpush1.msra.mxu0 0.0
    %3002 = vmatprep.subr.mxu0 0.0
    %3003 = vmatpush1.msra.mxu0 0.0
    %3004 = vmatprep.subr.mxu0 0.0
    %3005 = vmatpush1.msra.mxu0 0.0
    %3006 = vmatprep.mubr.f32.mxu0 0.0
    %3007 = vmatmul.mubr.f32.gmra.mrb[0].mxu0 %v2937
    %v3008 = vpop.f32.mrb[0].mxu0
    %v3009 = vadd.f32 %v2934, %v3008
    %v3010 = vpop.f32.mrb[0].mxu0
    %3011 = vmatprep.mubr.f32.mxu0 0.0
    %3012 = vmatmul.mubr.f32.gmra.mrb[0].mxu0 %v2940
    %v3013 = vpop.f32.mrb[0].mxu0
    %v3014 = vadd.f32 %v2934, %v3013
    %v3015 = vpop.f32.mrb[0].mxu0
    %3016 = vdwg.mxu0
    %3017 = vst.msk [vmem:[#allocation8] sm:$0xff] %vm119, %v3009
    %3018 = vst.msk [vmem:[#allocation8 + $0x8] sm:$0xff] %vm119, %v3014
    // Predicated region
    $region30: #{attention_forward.1} parent=1 // pred_check
      _
    $region31: #{attention_forward.1} parent=1 // pred_check_branch
      %3020 = sbr.rel (0) target = $region33
    $region32: #{attention_forward.1} parent=1 // pred_region
      %s3022 = ssub.s32 256, 256
      %3023 = vsyncadd [#allocation4], %s3022
      %s3024 = sshll.u32 [#allocation8], 4
      %s3025 = int_to_ptr.vmem [resolvable:$true] %s3024
      %3030 = dma.vmem_to_hbm [thread:$0]  %s3025, 256, %s4, [#allocation4], 128, 128, 8
    $region33: #{attention_forward.1} parent=1 // pred_fallthru
      _
    // Predicated region
    $region34: #{attention_forward.1} parent=1 // pred_check
      _
    $region35: #{attention_forward.1} parent=1 // pred_check_branch
      %3032 = sbr.rel (0) target = $region37
    $region36: #{attention_forward.1} parent=1 // pred_region
      %3033 = dma.done [#allocation4], 256
    $region37: #{attention_forward.1} parent=1 // pred_fallthru
      _
    %3034 = vsyncpa [#allocation3], 1
    %3035 = vsyncpa [#allocation6], 1
    %3036 = vsyncpa [#allocation4], 1

</llo_original>
